<compile_context>
chip_gen: v7x
topology: tpu7x:2x2x1
jax: 0.10.0
libtpu: 0.0.40
codegen_flags: <defaults>
</compile_context>

<pallas_src>
import jax
import jax.numpy as jnp
from jax import lax
from jax.experimental import pallas as pl
from jax.experimental.pallas import tpu as pltpu


def _round_up(x, m):
    return ((x + m - 1) // m) * m


def _ngram_mlp_kernel(ids_ref, w1e_ref, b1_ref, w2_ref, b2_ref, o_ref):
    # ids:  (TM, C)      int32 token ids for this batch tile
    # w1e:  (C*Vk, H)    bf16  fused (embedding @ linear1) weights, VMEM-resident
    # b1:   (1, H)       f32
    # w2:   (H, Vp)      bf16  vocab lane-padded to a multiple of 128
    # b2:   (1, Vp)      f32   padded columns hold -1e30
    # o:    (TM, Vp)     log-probabilities (padded cols sliced off outside)
    tm, c = ids_ref.shape
    cvk, _ = w1e_ref.shape
    vk = cvk // c

    ids = ids_ref[...]                                           # (TM, C) int32
    col = lax.broadcasted_iota(jnp.int32, (tm, cvk), 1)          # fused-K lane index

    # One-hot over the fused K axis: onehot[b, j*Vk + ids[b, j]] = 1.
    # Boolean-OR of the C compares (disjoint lane ranges), cast to bf16 once:
    # no zeros init, no C full-width f32 adds/casts.
    hit = col == ids[:, 0:1]
    for j in range(1, c):                                        # C is small & static
        hit = jnp.logical_or(hit, col == (ids[:, j:j + 1] + j * vk))
    onehot = hit.astype(jnp.bfloat16)                            # exact: values 0/1

    # embedding gather + flatten + linear1 as one bf16 MXU matmul (f32 accumulate)
    h1 = jnp.dot(onehot, w1e_ref[...], preferred_element_type=jnp.float32)
    h1 = h1 + b1_ref[...]
    r = jnp.maximum(h1, 0.0)

    # linear2 (bf16 MXU, f32 accumulate) over the lane-padded vocab
    logits = jnp.dot(r.astype(jnp.bfloat16), w2_ref[...],
                     preferred_element_type=jnp.float32)
    logits = logits + b2_ref[...]                                # padded lanes ~ -1e30

    # numerically stable log_softmax along the vocab axis (f32 throughout)
    m = jnp.max(logits, axis=1, keepdims=True)
    shifted = logits - m
    lse = jnp.log(jnp.sum(jnp.exp(shifted), axis=1, keepdims=True))
    o_ref[...] = (shifted - lse).astype(o_ref.dtype)


def prepare_ngram_weights(emb_table, w1, b1, w2, b2):
    """One-time weight prep (hoisted out of the per-forward path).

    emb_table: (V, E) f32
    w1: (C*E, H), b1: (H,), w2: (H, V), b2: (V,)
    Returns a dict of padded/fused arrays consumed by ngram_forward_prepared.
    """
    V, E = emb_table.shape
    F, H = w1.shape
    assert F % E == 0, "w1 first dim must be a multiple of embedding_dim"
    C = F // E
    assert w2.shape == (H, V) and b2.shape == (V,) and b1.shape == (H,)

    Vk = _round_up(V, 16)      # bf16 sublane multiple -- K-axis padding only
    Vp = _round_up(V, 128)     # lane-dense output / W2 N-axis padding

    emb_k = jnp.zeros((Vk, E), jnp.float32).at[:V].set(emb_table.astype(jnp.float32))

    # Fold embedding lookup + flatten + linear1:
    #   W1_eff[c*Vk + v, :] = emb[v, :] @ W1[c*E:(c+1)*E, :]
    w1f = w1.astype(jnp.float32)
    w1_eff = jnp.concatenate(
        [emb_k @ w1f[c * E:(c + 1) * E, :] for c in range(C)], axis=0
    ).astype(jnp.bfloat16)                                       # (C*Vk, H)

    w2_p = jnp.zeros((H, Vp), jnp.bfloat16).at[:, :V].set(w2.astype(jnp.bfloat16))
    b2_p = jnp.full((1, Vp), -1e30, jnp.float32).at[0, :V].set(b2.astype(jnp.float32))
    b1_2d = b1.astype(jnp.float32).reshape(1, H)

    return dict(w1_eff=w1_eff, b1=b1_2d, w2=w2_p, b2=b2_p,
                vocab=V, context_tokens=C)


def ngram_forward_prepared(inputs, params, *, tm=256, out_dtype=jnp.float32):
    """Forward pass with pre-prepared weights.

    inputs: (B, 2*context_size) int32 token ids
    tm:     batch tile; 256 fills the v6e/v7x MXU M dim, use 128 on v5e.
    returns (B, vocab) log-probabilities in out_dtype.
    """
    w1_eff, b1_2d, w2_p, b2_p = (params["w1_eff"], params["b1"],
                                 params["w2"], params["b2"])
    V = params["vocab"]
    C = params["context_tokens"]
    B, C_in = inputs.shape
    assert C_in == C, "inputs second dim must equal 2*context_size"
    CVk, H = w1_eff.shape
    _, Vp = w2_p.shape

    Bp = _round_up(B, tm)
    nb = Bp // tm

    # Clamp out-of-range ids (reference gather would otherwise be UB); pad batch.
    ids = jnp.clip(inputs.astype(jnp.int32), 0, V - 1)
    ids_p = jnp.zeros((Bp, C), jnp.int32).at[:B].set(ids)

    out_bytes = jnp.dtype(out_dtype).itemsize

    # Advisory cost + explicit VMEM budget (weights single-buffered,
    # ids/out double-buffered by the pipeline, plus in-kernel intermediates).
    flops = 2 * Bp * CVk * H + 2 * Bp * H * Vp
    transcendentals = Bp * Vp
    bytes_accessed = (Bp * C * 4 + CVk * H * 2 + H * Vp * 2
                      + H * 4 + Vp * 4 + Bp * Vp * out_bytes)
    vmem_bytes = (CVk * H * 2 + H * Vp * 2 + H * 4 + Vp * 4          # weights (x1)
                  + 2 * tm * C * 4 + 2 * tm * Vp * out_bytes         # ids/out (x2)
                  + tm * CVk * 2 + 4 * tm * H * 4 + 4 * tm * Vp * 4)  # intermediates
    vmem_limit = int(min(max(2 * vmem_bytes, 16 * 1024 * 1024), 48 * 1024 * 1024))

    single = pl.Buffered(1)    # grid-invariant weights: no double buffering

    out = pl.pallas_call(
        _ngram_mlp_kernel,
        out_shape=jax.ShapeDtypeStruct((Bp, Vp), out_dtype),
        grid=(nb,),
        in_specs=[
            pl.BlockSpec((tm, C), lambda i: (i, 0)),                       # token ids
            pl.BlockSpec((CVk, H), lambda i: (0, 0), pipeline_mode=single),  # fused emb@W1
            pl.BlockSpec((1, H), lambda i: (0, 0), pipeline_mode=single),    # b1
            pl.BlockSpec((H, Vp), lambda i: (0, 0), pipeline_mode=single),   # W2
            pl.BlockSpec((1, Vp), lambda i: (0, 0), pipeline_mode=single),   # b2
        ],
        out_specs=pl.BlockSpec((tm, Vp), lambda i: (i, 0)),
        compiler_params=pltpu.CompilerParams(
            dimension_semantics=("parallel",),     # batch tiles -> both TCs on v7x
            vmem_limit_bytes=vmem_limit,
        ),
        cost_estimate=pl.CostEstimate(
            flops=flops,
            transcendentals=transcendentals,
            bytes_accessed=bytes_accessed,
        ),
    )(ids_p, w1_eff, b1_2d, w2_p, b2_p)

    return out[:B, :V]


def ngram_forward(inputs, emb_table, w1, b1, w2, b2, *, tm=256):
    """Convenience wrapper: prepare weights + run (prefer caching prepare)."""
    params = prepare_ngram_weights(emb_table, w1, b1, w2, b2)
    return ngram_forward_prepared(inputs, params, tm=tm)


def _reference_forward(inputs, emb_table, w1, b1, w2, b2):
    embeds = emb_table[inputs].reshape(inputs.shape[0], -1)
    h = embeds @ w1 + b1
    r = jnp.maximum(h, 0.0)
    logits = r @ w2 + b2
    return jax.nn.log_softmax(logits, axis=1)


if __name__ == "__main__":
    # Small, module-consistent shapes (batch exercises padding; single 256-row tile).
    vocab_size = 64
    embedding_dim = 16
    context_size = 4            # inputs carry 2*context_size tokens per example
    batch = 200
    hidden = 128                # fixed by the module
    in_features = context_size * 2 * embedding_dim  # 128

    key = jax.random.PRNGKey(0)
    k_emb, k_w1, k_b1, k_w2, k_b2, k_in = jax.random.split(key, 6)

    emb_table = jax.random.normal(k_emb, (vocab_size, embedding_dim), jnp.float32)
    w1 = jax.random.normal(k_w1, (in_features, hidden), jnp.float32) * 0.05
    b1 = jax.random.normal(k_b1, (hidden,), jnp.float32) * 0.01
    w2 = jax.random.normal(k_w2, (hidden, vocab_size), jnp.float32) * 0.05
    b2 = jax.random.normal(k_b2, (vocab_size,), jnp.float32) * 0.01

    inputs = jax.random.randint(
        k_in, (batch, 2 * context_size), 0, vocab_size, dtype=jnp.int32
    )

    # Prepare once (per weight set), then run the fused kernel.
    params = prepare_ngram_weights(emb_table, w1, b1, w2, b2)
    out = ngram_forward_prepared(inputs, params)
    out = jax.block_until_ready(out)

    ref = _reference_forward(inputs, emb_table, w1, b1, w2, b2)
    assert out.shape == (batch, vocab_size)
    max_err = float(jnp.max(jnp.abs(out - ref)))
    # bf16 weights/activations on the MXU -> loosen tolerance vs. the f32 reference.
    assert jnp.allclose(out, ref, atol=3e-2, rtol=3e-2), max_err
    # log_softmax rows should sum to ~1 in prob space (padded vocab lanes contribute 0).
    assert jnp.allclose(jnp.sum(jnp.exp(out), axis=1), 1.0, atol=1e-3)

    print("KERNEL_OK")
</pallas_src>

<mosaic_0001>
module attributes {stable_mosaic.version = 11 : i64} {
  func.func @_ngram_mlp_kernel(%arg0: i32, %arg1: memref<256x8xi32, #tpu.memory_space<vmem>>, %arg2: memref<512x128xbf16, #tpu.memory_space<vmem>>, %arg3: memref<1x128xf32, #tpu.memory_space<vmem>>, %arg4: memref<128x128xbf16, #tpu.memory_space<vmem>>, %arg5: memref<1x128xf32, #tpu.memory_space<vmem>>, %arg6: memref<256x128xf32, #tpu.memory_space<vmem>>) attributes {dimension_semantics = [#tpu.dimension_semantics<parallel>], iteration_bounds = array<i64: 1>, scalar_prefetch = 0 : i64, scratch_operands = 0 : i64, tpu.core_type = #tpu.core_type<tc>, window_params = [{transform_indices = @transform_0, window_bounds = array<i64: 256, 8>}, {pipeline_mode = #tpu.pipeline_mode<synchronous>, transform_indices = @transform_1, window_bounds = array<i64: 512, 128>}, {pipeline_mode = #tpu.pipeline_mode<synchronous>, transform_indices = @transform_2, window_bounds = array<i64: 1, 128>}, {pipeline_mode = #tpu.pipeline_mode<synchronous>, transform_indices = @transform_3, window_bounds = array<i64: 128, 128>}, {pipeline_mode = #tpu.pipeline_mode<synchronous>, transform_indices = @transform_4, window_bounds = array<i64: 1, 128>}, {transform_indices = @transform_5, window_bounds = array<i64: 256, 128>}]} {
    %c0 = arith.constant 0 : index
    %c0_0 = arith.constant 0 : index
    %0 = vector.load %arg1[%c0, %c0_0] : memref<256x8xi32, #tpu.memory_space<vmem>>, vector<256x8xi32>
    %1 = tpu.iota {dimensions = array<i32: 1>} : vector<256x512xi32>
    %2 = vector.extract_strided_slice %0 {offsets = [0, 0], sizes = [256, 1], strides = [1, 1]} : vector<256x8xi32> to vector<256x1xi32>
    %3 = vector.broadcast %2 : vector<256x1xi32> to vector<256x512xi32>
    %4 = arith.cmpi eq, %1, %3 : vector<256x512xi32>
    %5 = vector.extract_strided_slice %0 {offsets = [0, 1], sizes = [256, 1], strides = [1, 1]} : vector<256x8xi32> to vector<256x1xi32>
    %c64_i32 = arith.constant 64 : i32
    %6 = vector.broadcast %c64_i32 : i32 to vector<256x1xi32>
    %7 = arith.addi %5, %6 : vector<256x1xi32>
    %8 = vector.broadcast %7 : vector<256x1xi32> to vector<256x512xi32>
    %9 = arith.cmpi eq, %1, %8 : vector<256x512xi32>
    %10 = arith.ori %4, %9 : vector<256x512xi1>
    %11 = vector.extract_strided_slice %0 {offsets = [0, 2], sizes = [256, 1], strides = [1, 1]} : vector<256x8xi32> to vector<256x1xi32>
    %c128_i32 = arith.constant 128 : i32
    %12 = vector.broadcast %c128_i32 : i32 to vector<256x1xi32>
    %13 = arith.addi %11, %12 : vector<256x1xi32>
    %14 = vector.broadcast %13 : vector<256x1xi32> to vector<256x512xi32>
    %15 = arith.cmpi eq, %1, %14 : vector<256x512xi32>
    %16 = arith.ori %10, %15 : vector<256x512xi1>
    %17 = vector.extract_strided_slice %0 {offsets = [0, 3], sizes = [256, 1], strides = [1, 1]} : vector<256x8xi32> to vector<256x1xi32>
    %c192_i32 = arith.constant 192 : i32
    %18 = vector.broadcast %c192_i32 : i32 to vector<256x1xi32>
    %19 = arith.addi %17, %18 : vector<256x1xi32>
    %20 = vector.broadcast %19 : vector<256x1xi32> to vector<256x512xi32>
    %21 = arith.cmpi eq, %1, %20 : vector<256x512xi32>
    %22 = arith.ori %16, %21 : vector<256x512xi1>
    %23 = vector.extract_strided_slice %0 {offsets = [0, 4], sizes = [256, 1], strides = [1, 1]} : vector<256x8xi32> to vector<256x1xi32>
    %c256_i32 = arith.constant 256 : i32
    %24 = vector.broadcast %c256_i32 : i32 to vector<256x1xi32>
    %25 = arith.addi %23, %24 : vector<256x1xi32>
    %26 = vector.broadcast %25 : vector<256x1xi32> to vector<256x512xi32>
    %27 = arith.cmpi eq, %1, %26 : vector<256x512xi32>
    %28 = arith.ori %22, %27 : vector<256x512xi1>
    %29 = vector.extract_strided_slice %0 {offsets = [0, 5], sizes = [256, 1], strides = [1, 1]} : vector<256x8xi32> to vector<256x1xi32>
    %c320_i32 = arith.constant 320 : i32
    %30 = vector.broadcast %c320_i32 : i32 to vector<256x1xi32>
    %31 = arith.addi %29, %30 : vector<256x1xi32>
    %32 = vector.broadcast %31 : vector<256x1xi32> to vector<256x512xi32>
    %33 = arith.cmpi eq, %1, %32 : vector<256x512xi32>
    %34 = arith.ori %28, %33 : vector<256x512xi1>
    %35 = vector.extract_strided_slice %0 {offsets = [0, 6], sizes = [256, 1], strides = [1, 1]} : vector<256x8xi32> to vector<256x1xi32>
    %c384_i32 = arith.constant 384 : i32
    %36 = vector.broadcast %c384_i32 : i32 to vector<256x1xi32>
    %37 = arith.addi %35, %36 : vector<256x1xi32>
    %38 = vector.broadcast %37 : vector<256x1xi32> to vector<256x512xi32>
    %39 = arith.cmpi eq, %1, %38 : vector<256x512xi32>
    %40 = arith.ori %34, %39 : vector<256x512xi1>
    %41 = vector.extract_strided_slice %0 {offsets = [0, 7], sizes = [256, 1], strides = [1, 1]} : vector<256x8xi32> to vector<256x1xi32>
    %c448_i32 = arith.constant 448 : i32
    %42 = vector.broadcast %c448_i32 : i32 to vector<256x1xi32>
    %43 = arith.addi %41, %42 : vector<256x1xi32>
    %44 = vector.broadcast %43 : vector<256x1xi32> to vector<256x512xi32>
    %45 = arith.cmpi eq, %1, %44 : vector<256x512xi32>
    %46 = arith.ori %40, %45 : vector<256x512xi1>
    %47 = arith.extui %46 : vector<256x512xi1> to vector<256x512xi32>
    %48 = arith.sitofp %47 : vector<256x512xi32> to vector<256x512xf32>
    %49 = arith.truncf %48 : vector<256x512xf32> to vector<256x512xbf16>
    %c0_1 = arith.constant 0 : index
    %c0_2 = arith.constant 0 : index
    %50 = vector.load %arg2[%c0_1, %c0_2] : memref<512x128xbf16, #tpu.memory_space<vmem>>, vector<512x128xbf16>
    %cst = arith.constant dense<0.000000e+00> : vector<256x128xf32>
    %51 = tpu.matmul %49, %50, %cst {dimension_numbers = #tpu.dot_dimension_numbers<[1], [0], [0], [1], [0, 0, 1, 1], [], []>} : vector<256x512xbf16>, vector<512x128xbf16>, vector<256x128xf32> -> vector<256x128xf32>
    %c0_3 = arith.constant 0 : index
    %c0_4 = arith.constant 0 : index
    %52 = vector.load %arg3[%c0_3, %c0_4] : memref<1x128xf32, #tpu.memory_space<vmem>>, vector<1x128xf32>
    %53 = vector.broadcast %52 : vector<1x128xf32> to vector<256x128xf32>
    %54 = arith.addf %51, %53 : vector<256x128xf32>
    %cst_5 = arith.constant 0.000000e+00 : f32
    %55 = vector.broadcast %cst_5 : f32 to vector<256x128xf32>
    %56 = arith.maximumf %54, %55 : vector<256x128xf32>
    %57 = arith.truncf %56 : vector<256x128xf32> to vector<256x128xbf16>
    %c0_6 = arith.constant 0 : index
    %c0_7 = arith.constant 0 : index
    %58 = vector.load %arg4[%c0_6, %c0_7] : memref<128x128xbf16, #tpu.memory_space<vmem>>, vector<128x128xbf16>
    %cst_8 = arith.constant dense<0.000000e+00> : vector<256x128xf32>
    %59 = tpu.matmul %57, %58, %cst_8 {dimension_numbers = #tpu.dot_dimension_numbers<[1], [0], [0], [1], [0, 0, 1, 1], [], []>} : vector<256x128xbf16>, vector<128x128xbf16>, vector<256x128xf32> -> vector<256x128xf32>
    %c0_9 = arith.constant 0 : index
    %c0_10 = arith.constant 0 : index
    %60 = vector.load %arg5[%c0_9, %c0_10] : memref<1x128xf32, #tpu.memory_space<vmem>>, vector<1x128xf32>
    %61 = vector.broadcast %60 : vector<1x128xf32> to vector<256x128xf32>
    %62 = arith.addf %59, %61 : vector<256x128xf32>
    %cst_11 = arith.constant dense<0xFF800000> : vector<256xf32>
    %63 = vector.multi_reduction <maximumf>, %62, %cst_11 [1] : vector<256x128xf32> to vector<256xf32>
    %64 = vector.shape_cast %63 : vector<256xf32> to vector<256x1xf32>
    %65 = vector.broadcast %64 : vector<256x1xf32> to vector<256x128xf32>
    %66 = arith.subf %62, %65 : vector<256x128xf32>
    %67 = math.exp %66 : vector<256x128xf32>
    %cst_12 = arith.constant dense<0.000000e+00> : vector<256xf32>
    %68 = vector.multi_reduction <add>, %67, %cst_12 [1] : vector<256x128xf32> to vector<256xf32>
    %69 = vector.shape_cast %68 : vector<256xf32> to vector<256x1xf32>
    %70 = math.log %69 : vector<256x1xf32>
    %71 = vector.broadcast %70 : vector<256x1xf32> to vector<256x128xf32>
    %72 = arith.subf %66, %71 : vector<256x128xf32>
    %c0_13 = arith.constant 0 : index
    %c0_14 = arith.constant 0 : index
    %73 = vector.load %arg6[%c0_13, %c0_14] : memref<256x128xf32, #tpu.memory_space<vmem>>, vector<256x128xf32>
    tpu.vector_store %arg6[%c0_13, %c0_14], %72 {strides = array<i32>} : memref<256x128xf32, #tpu.memory_space<vmem>>, vector<256x128xf32>,
    return
  }
  func.func @transform_0(%arg0: i32) -> (i32, i32) {
    %c0_i32 = arith.constant 0 : i32
    %c0_i32_0 = arith.constant 0 : i32
    return %arg0, %c0_i32 : i32, i32
  }
  func.func @transform_1(%arg0: i32) -> (i32, i32) {
    %c0_i32 = arith.constant 0 : i32
    %c0_i32_0 = arith.constant 0 : i32
    %c0_i32_1 = arith.constant 0 : i32
    return %c0_i32, %c0_i32_0 : i32, i32
  }
  func.func @transform_2(%arg0: i32) -> (i32, i32) {
    %c0_i32 = arith.constant 0 : i32
    %c0_i32_0 = arith.constant 0 : i32
    %c0_i32_1 = arith.constant 0 : i32
    return %c0_i32, %c0_i32_0 : i32, i32
  }
  func.func @transform_3(%arg0: i32) -> (i32, i32) {
    %c0_i32 = arith.constant 0 : i32
    %c0_i32_0 = arith.constant 0 : i32
    %c0_i32_1 = arith.constant 0 : i32
    return %c0_i32, %c0_i32_0 : i32, i32
  }
  func.func @transform_4(%arg0: i32) -> (i32, i32) {
    %c0_i32 = arith.constant 0 : i32
    %c0_i32_0 = arith.constant 0 : i32
    %c0_i32_1 = arith.constant 0 : i32
    return %c0_i32, %c0_i32_0 : i32, i32
  }
  func.func @transform_5(%arg0: i32) -> (i32, i32) {
    %c0_i32 = arith.constant 0 : i32
    %c0_i32_0 = arith.constant 0 : i32
    return %arg0, %c0_i32 : i32, i32
  }
}

</mosaic_0001>

<llo_original>
// kernel: tpu_custom_call.1
$region0: #{tpu_custom_call.1}
  #allocation0 [shape = 'u32[]', space=smem, size = 0x4, offset = 0x4, fixed_abs, tag = 'smem constant byte address 0x4 - core index']
  #allocation1 [shape = 'u32[144,128]{1,0:T(1,128)}', space=vmem, size = 0x12000, scoped, tag = 'internal scratch']
  %s0 = inlined_call_operand.vmem [shape: s32[256,8], index: 0, kind: input, shape index: {}]
  %s1 = inlined_call_operand.vmem [shape: bf16[512,128], index: 1, kind: input, shape index: {}]
  %s2 = inlined_call_operand.vmem [shape: f32[1,128], index: 2, kind: input, shape index: {}]
  %s3 = inlined_call_operand.hbm [shape: bf16[128,128], index: 3, kind: input, shape index: {}]
  %s4 = inlined_call_operand.vmem [shape: f32[1,128], index: 4, kind: input, shape index: {}]
  %s5 = inlined_call_operand.hbm [shape: f32[256,128], index: 5, kind: output, shape index: {}]
  %s6 = sld [smem:[#allocation0]]
  $region34: #{tpu_custom_call.1} parent=0
    _
  %s8 = ssub.s32 1, %s6
  %s9 = scalar_select 0, %s8, %s6
  $region1: #{tpu_custom_call.1} parent=0
    #allocation2 [shape = 'u8[32768]{0}', space=vmem, size = 0x8000, scoped, tag = 'input window, operand 3, single buffered']
    #allocation3 [shape = 's32[1]{0}', space=sflag, size = 0x4, scoped, tag = 'scoped memory for tpu_custom_call.1']
    #allocation4 [shape = 's32[1]{0}', space=sflag, size = 0x4, scoped, tag = 'scoped memory for tpu_custom_call.1']
    #allocation5 [shape = 'u8[131072]{0}', space=vmem, size = 0x20000, scoped, tag = 'output window, operand 0, single buffered']
    %10 = vsyncpa [#allocation3], 0
    %11 = vsyncpa [#allocation4], 0
    // Predicated region
    $region2: #{tpu_custom_call.1} parent=1 // pred_check
      _
    $region3: #{tpu_custom_call.1} parent=1 // pred_check_branch
      %13 = sbr.rel (0) target = $region5
    $region4: #{tpu_custom_call.1} parent=1 // pred_region
      _
    $region5: #{tpu_custom_call.1} parent=1 // pred_fallthru
      _
    // Predicated region
    $region6: #{tpu_custom_call.1} parent=1 // pred_check
      _
    $region7: #{tpu_custom_call.1} parent=1 // pred_check_branch
      %15 = sbr.rel (0) target = $region9
    $region8: #{tpu_custom_call.1} parent=1 // pred_region
      _
    $region9: #{tpu_custom_call.1} parent=1 // pred_fallthru
      _
    // Predicated region
    $region10: #{tpu_custom_call.1} parent=1 // pred_check
      _
    $region11: #{tpu_custom_call.1} parent=1 // pred_check_branch
      %17 = sbr.rel (0) target = $region13
    $region12: #{tpu_custom_call.1} parent=1 // pred_region
      _
    $region13: #{tpu_custom_call.1} parent=1 // pred_fallthru
      _
    // Predicated region
    $region14: #{tpu_custom_call.1} parent=1 // pred_check
      _
    $region15: #{tpu_custom_call.1} parent=1 // pred_check_branch
      %19 = sbr.rel (0) target = $region17
    $region16: #{tpu_custom_call.1} parent=1 // pred_region
      %s21 = ssub.s32 1024, 1024
      %22 = vsyncadd [#allocation3], %s21
      %s23 = sshll.u32 [#allocation2], 4
      %s24 = int_to_ptr.vmem [resolvable:$true] %s23
      %29 = dma.hbm_to_vmem [thread:$0]  %s3, 1024, %s24, [#allocation3], 64, 64, 4
    $region17: #{tpu_custom_call.1} parent=1 // pred_fallthru
      _
    // Predicated region
    $region18: #{tpu_custom_call.1} parent=1 // pred_check
      _
    $region19: #{tpu_custom_call.1} parent=1 // pred_check_branch
      %31 = sbr.rel (0) target = $region21
    $region20: #{tpu_custom_call.1} parent=1 // pred_region
      _
    $region21: #{tpu_custom_call.1} parent=1 // pred_fallthru
      _
    // Predicated region
    $region22: #{tpu_custom_call.1} parent=1 // pred_check
      _
    $region23: #{tpu_custom_call.1} parent=1 // pred_check_branch
      %33 = sbr.rel (0) target = $region25
    $region24: #{tpu_custom_call.1} parent=1 // pred_region
      %34 = dma.done [#allocation3], 1024
    $region25: #{tpu_custom_call.1} parent=1 // pred_fallthru
      _
    %v36 = vld [vmem:[%s0] sm:$0xff]
    %v37 = vld [vmem:[%s0 + $0x8] sm:$0xff]
    %v38 = vld [vmem:[%s0 + $0x10] sm:$0xff]
    %v39 = vld [vmem:[%s0 + $0x18] sm:$0xff]
    %v40 = vld [vmem:[%s0 + $0x20] sm:$0xff]
    %v41 = vld [vmem:[%s0 + $0x28] sm:$0xff]
    %v42 = vld [vmem:[%s0 + $0x30] sm:$0xff]
    %v43 = vld [vmem:[%s0 + $0x38] sm:$0xff]
    %v44 = vld [vmem:[%s0 + $0x40] sm:$0xff]
    %v45 = vld [vmem:[%s0 + $0x48] sm:$0xff]
    %v46 = vld [vmem:[%s0 + $0x50] sm:$0xff]
    %v47 = vld [vmem:[%s0 + $0x58] sm:$0xff]
    %v48 = vld [vmem:[%s0 + $0x60] sm:$0xff]
    %v49 = vld [vmem:[%s0 + $0x68] sm:$0xff]
    %v50 = vld [vmem:[%s0 + $0x70] sm:$0xff]
    %v51 = vld [vmem:[%s0 + $0x78] sm:$0xff]
    %v52 = vld [vmem:[%s0 + $0x80] sm:$0xff]
    %v53 = vld [vmem:[%s0 + $0x88] sm:$0xff]
    %v54 = vld [vmem:[%s0 + $0x90] sm:$0xff]
    %v55 = vld [vmem:[%s0 + $0x98] sm:$0xff]
    %v56 = vld [vmem:[%s0 + $0xa0] sm:$0xff]
    %v57 = vld [vmem:[%s0 + $0xa8] sm:$0xff]
    %v58 = vld [vmem:[%s0 + $0xb0] sm:$0xff]
    %v59 = vld [vmem:[%s0 + $0xb8] sm:$0xff]
    %v60 = vld [vmem:[%s0 + $0xc0] sm:$0xff]
    %v61 = vld [vmem:[%s0 + $0xc8] sm:$0xff]
    %v62 = vld [vmem:[%s0 + $0xd0] sm:$0xff]
    %v63 = vld [vmem:[%s0 + $0xd8] sm:$0xff]
    %v64 = vld [vmem:[%s0 + $0xe0] sm:$0xff]
    %v65 = vld [vmem:[%s0 + $0xe8] sm:$0xff]
    %v66 = vld [vmem:[%s0 + $0xf0] sm:$0xff]
    %v67 = vld [vmem:[%s0 + $0xf8] sm:$0xff]
    %v68 = vlaneseq
    %v69 = vand.u32 %v68, 127
    %v70 = vadd.s32 %v69, 128
    %v71 = vadd.s32 %v69, 256
    %v72 = vadd.s32 %v69, 384
    %73 = vset.pattern.permute.xlu0 0
    %74 = vperm.xlu0 %73, %v36
    %v75 = vpop.permute.xlu0 %74
    %76 = vset.pattern.permute.xlu0 0
    %77 = vperm.xlu0 %76, %v37
    %v78 = vpop.permute.xlu0 %77
    %79 = vset.pattern.permute.xlu0 0
    %80 = vperm.xlu0 %79, %v38
    %v81 = vpop.permute.xlu0 %80
    %82 = vset.pattern.permute.xlu0 0
    %83 = vperm.xlu0 %82, %v39
    %v84 = vpop.permute.xlu0 %83
    %85 = vset.pattern.permute.xlu0 0
    %86 = vperm.xlu0 %85, %v40
    %v87 = vpop.permute.xlu0 %86
    %88 = vset.pattern.permute.xlu0 0
    %89 = vperm.xlu0 %88, %v41
    %v90 = vpop.permute.xlu0 %89
    %91 = vset.pattern.permute.xlu0 0
    %92 = vperm.xlu0 %91, %v42
    %v93 = vpop.permute.xlu0 %92
    %94 = vset.pattern.permute.xlu0 0
    %95 = vperm.xlu0 %94, %v43
    %v96 = vpop.permute.xlu0 %95
    %97 = vset.pattern.permute.xlu0 0
    %98 = vperm.xlu0 %97, %v44
    %v99 = vpop.permute.xlu0 %98
    %100 = vset.pattern.permute.xlu0 0
    %101 = vperm.xlu0 %100, %v45
    %v102 = vpop.permute.xlu0 %101
    %103 = vset.pattern.permute.xlu0 0
    %104 = vperm.xlu0 %103, %v46
    %v105 = vpop.permute.xlu0 %104
    %106 = vset.pattern.permute.xlu0 0
    %107 = vperm.xlu0 %106, %v47
    %v108 = vpop.permute.xlu0 %107
    %109 = vset.pattern.permute.xlu0 0
    %110 = vperm.xlu0 %109, %v48
    %v111 = vpop.permute.xlu0 %110
    %112 = vset.pattern.permute.xlu0 0
    %113 = vperm.xlu0 %112, %v49
    %v114 = vpop.permute.xlu0 %113
    %115 = vset.pattern.permute.xlu0 0
    %116 = vperm.xlu0 %115, %v50
    %v117 = vpop.permute.xlu0 %116
    %118 = vset.pattern.permute.xlu0 0
    %119 = vperm.xlu0 %118, %v51
    %v120 = vpop.permute.xlu0 %119
    %121 = vset.pattern.permute.xlu0 0
    %122 = vperm.xlu0 %121, %v52
    %v123 = vpop.permute.xlu0 %122
    %124 = vset.pattern.permute.xlu0 0
    %125 = vperm.xlu0 %124, %v53
    %v126 = vpop.permute.xlu0 %125
    %127 = vset.pattern.permute.xlu0 0
    %128 = vperm.xlu0 %127, %v54
    %v129 = vpop.permute.xlu0 %128
    %130 = vset.pattern.permute.xlu0 0
    %131 = vperm.xlu0 %130, %v55
    %v132 = vpop.permute.xlu0 %131
    %133 = vset.pattern.permute.xlu0 0
    %134 = vperm.xlu0 %133, %v56
    %v135 = vpop.permute.xlu0 %134
    %136 = vset.pattern.permute.xlu0 0
    %137 = vperm.xlu0 %136, %v57
    %v138 = vpop.permute.xlu0 %137
    %139 = vset.pattern.permute.xlu0 0
    %140 = vperm.xlu0 %139, %v58
    %v141 = vpop.permute.xlu0 %140
    %142 = vset.pattern.permute.xlu0 0
    %143 = vperm.xlu0 %142, %v59
    %v144 = vpop.permute.xlu0 %143
    %145 = vset.pattern.permute.xlu0 0
    %146 = vperm.xlu0 %145, %v60
    %v147 = vpop.permute.xlu0 %146
    %148 = vset.pattern.permute.xlu0 0
    %149 = vperm.xlu0 %148, %v61
    %v150 = vpop.permute.xlu0 %149
    %151 = vset.pattern.permute.xlu0 0
    %152 = vperm.xlu0 %151, %v62
    %v153 = vpop.permute.xlu0 %152
    %154 = vset.pattern.permute.xlu0 0
    %155 = vperm.xlu0 %154, %v63
    %v156 = vpop.permute.xlu0 %155
    %157 = vset.pattern.permute.xlu0 0
    %158 = vperm.xlu0 %157, %v64
    %v159 = vpop.permute.xlu0 %158
    %160 = vset.pattern.permute.xlu0 0
    %161 = vperm.xlu0 %160, %v65
    %v162 = vpop.permute.xlu0 %161
    %163 = vset.pattern.permute.xlu0 0
    %164 = vperm.xlu0 %163, %v66
    %v165 = vpop.permute.xlu0 %164
    %166 = vset.pattern.permute.xlu0 0
    %167 = vperm.xlu0 %166, %v67
    %v168 = vpop.permute.xlu0 %167
    %vm169 = vcmp.eq.s32.totalorder %v69, %v75
    %vm170 = vcmp.eq.s32.totalorder %v70, %v75
    %vm171 = vcmp.eq.s32.totalorder %v71, %v75
    %vm172 = vcmp.eq.s32.totalorder %v72, %v75
    %vm173 = vcmp.eq.s32.totalorder %v69, %v78
    %vm174 = vcmp.eq.s32.totalorder %v70, %v78
    %vm175 = vcmp.eq.s32.totalorder %v71, %v78
    %vm176 = vcmp.eq.s32.totalorder %v72, %v78
    %vm177 = vcmp.eq.s32.totalorder %v69, %v81
    %vm178 = vcmp.eq.s32.totalorder %v70, %v81
    %vm179 = vcmp.eq.s32.totalorder %v71, %v81
    %vm180 = vcmp.eq.s32.totalorder %v72, %v81
    %vm181 = vcmp.eq.s32.totalorder %v69, %v84
    %vm182 = vcmp.eq.s32.totalorder %v70, %v84
    %vm183 = vcmp.eq.s32.totalorder %v71, %v84
    %vm184 = vcmp.eq.s32.totalorder %v72, %v84
    %vm185 = vcmp.eq.s32.totalorder %v69, %v87
    %vm186 = vcmp.eq.s32.totalorder %v70, %v87
    %vm187 = vcmp.eq.s32.totalorder %v71, %v87
    %vm188 = vcmp.eq.s32.totalorder %v72, %v87
    %vm189 = vcmp.eq.s32.totalorder %v69, %v90
    %vm190 = vcmp.eq.s32.totalorder %v70, %v90
    %vm191 = vcmp.eq.s32.totalorder %v71, %v90
    %vm192 = vcmp.eq.s32.totalorder %v72, %v90
    %vm193 = vcmp.eq.s32.totalorder %v69, %v93
    %vm194 = vcmp.eq.s32.totalorder %v70, %v93
    %vm195 = vcmp.eq.s32.totalorder %v71, %v93
    %vm196 = vcmp.eq.s32.totalorder %v72, %v93
    %vm197 = vcmp.eq.s32.totalorder %v69, %v96
    %vm198 = vcmp.eq.s32.totalorder %v70, %v96
    %vm199 = vcmp.eq.s32.totalorder %v71, %v96
    %vm200 = vcmp.eq.s32.totalorder %v72, %v96
    %vm201 = vcmp.eq.s32.totalorder %v69, %v99
    %vm202 = vcmp.eq.s32.totalorder %v70, %v99
    %vm203 = vcmp.eq.s32.totalorder %v71, %v99
    %vm204 = vcmp.eq.s32.totalorder %v72, %v99
    %vm205 = vcmp.eq.s32.totalorder %v69, %v102
    %vm206 = vcmp.eq.s32.totalorder %v70, %v102
    %vm207 = vcmp.eq.s32.totalorder %v71, %v102
    %vm208 = vcmp.eq.s32.totalorder %v72, %v102
    %vm209 = vcmp.eq.s32.totalorder %v69, %v105
    %vm210 = vcmp.eq.s32.totalorder %v70, %v105
    %vm211 = vcmp.eq.s32.totalorder %v71, %v105
    %vm212 = vcmp.eq.s32.totalorder %v72, %v105
    %vm213 = vcmp.eq.s32.totalorder %v69, %v108
    %vm214 = vcmp.eq.s32.totalorder %v70, %v108
    %vm215 = vcmp.eq.s32.totalorder %v71, %v108
    %vm216 = vcmp.eq.s32.totalorder %v72, %v108
    %vm217 = vcmp.eq.s32.totalorder %v69, %v111
    %vm218 = vcmp.eq.s32.totalorder %v70, %v111
    %vm219 = vcmp.eq.s32.totalorder %v71, %v111
    %vm220 = vcmp.eq.s32.totalorder %v72, %v111
    %vm221 = vcmp.eq.s32.totalorder %v69, %v114
    %vm222 = vcmp.eq.s32.totalorder %v70, %v114
    %vm223 = vcmp.eq.s32.totalorder %v71, %v114
    %vm224 = vcmp.eq.s32.totalorder %v72, %v114
    %vm225 = vcmp.eq.s32.totalorder %v69, %v117
    %vm226 = vcmp.eq.s32.totalorder %v70, %v117
    %vm227 = vcmp.eq.s32.totalorder %v71, %v117
    %vm228 = vcmp.eq.s32.totalorder %v72, %v117
    %vm229 = vcmp.eq.s32.totalorder %v69, %v120
    %vm230 = vcmp.eq.s32.totalorder %v70, %v120
    %vm231 = vcmp.eq.s32.totalorder %v71, %v120
    %vm232 = vcmp.eq.s32.totalorder %v72, %v120
    %vm233 = vcmp.eq.s32.totalorder %v69, %v123
    %vm234 = vcmp.eq.s32.totalorder %v70, %v123
    %vm235 = vcmp.eq.s32.totalorder %v71, %v123
    %vm236 = vcmp.eq.s32.totalorder %v72, %v123
    %vm237 = vcmp.eq.s32.totalorder %v69, %v126
    %vm238 = vcmp.eq.s32.totalorder %v70, %v126
    %vm239 = vcmp.eq.s32.totalorder %v71, %v126
    %vm240 = vcmp.eq.s32.totalorder %v72, %v126
    %vm241 = vcmp.eq.s32.totalorder %v69, %v129
    %vm242 = vcmp.eq.s32.totalorder %v70, %v129
    %vm243 = vcmp.eq.s32.totalorder %v71, %v129
    %vm244 = vcmp.eq.s32.totalorder %v72, %v129
    %vm245 = vcmp.eq.s32.totalorder %v69, %v132
    %vm246 = vcmp.eq.s32.totalorder %v70, %v132
    %vm247 = vcmp.eq.s32.totalorder %v71, %v132
    %vm248 = vcmp.eq.s32.totalorder %v72, %v132
    %vm249 = vcmp.eq.s32.totalorder %v69, %v135
    %vm250 = vcmp.eq.s32.totalorder %v70, %v135
    %vm251 = vcmp.eq.s32.totalorder %v71, %v135
    %vm252 = vcmp.eq.s32.totalorder %v72, %v135
    %vm253 = vcmp.eq.s32.totalorder %v69, %v138
    %vm254 = vcmp.eq.s32.totalorder %v70, %v138
    %vm255 = vcmp.eq.s32.totalorder %v71, %v138
    %vm256 = vcmp.eq.s32.totalorder %v72, %v138
    %vm257 = vcmp.eq.s32.totalorder %v69, %v141
    %vm258 = vcmp.eq.s32.totalorder %v70, %v141
    %vm259 = vcmp.eq.s32.totalorder %v71, %v141
    %vm260 = vcmp.eq.s32.totalorder %v72, %v141
    %vm261 = vcmp.eq.s32.totalorder %v69, %v144
    %vm262 = vcmp.eq.s32.totalorder %v70, %v144
    %vm263 = vcmp.eq.s32.totalorder %v71, %v144
    %vm264 = vcmp.eq.s32.totalorder %v72, %v144
    %vm265 = vcmp.eq.s32.totalorder %v69, %v147
    %vm266 = vcmp.eq.s32.totalorder %v70, %v147
    %vm267 = vcmp.eq.s32.totalorder %v71, %v147
    %vm268 = vcmp.eq.s32.totalorder %v72, %v147
    %vm269 = vcmp.eq.s32.totalorder %v69, %v150
    %vm270 = vcmp.eq.s32.totalorder %v70, %v150
    %vm271 = vcmp.eq.s32.totalorder %v71, %v150
    %vm272 = vcmp.eq.s32.totalorder %v72, %v150
    %vm273 = vcmp.eq.s32.totalorder %v69, %v153
    %vm274 = vcmp.eq.s32.totalorder %v70, %v153
    %vm275 = vcmp.eq.s32.totalorder %v71, %v153
    %vm276 = vcmp.eq.s32.totalorder %v72, %v153
    %vm277 = vcmp.eq.s32.totalorder %v69, %v156
    %vm278 = vcmp.eq.s32.totalorder %v70, %v156
    %vm279 = vcmp.eq.s32.totalorder %v71, %v156
    %vm280 = vcmp.eq.s32.totalorder %v72, %v156
    %vm281 = vcmp.eq.s32.totalorder %v69, %v159
    %vm282 = vcmp.eq.s32.totalorder %v70, %v159
    %vm283 = vcmp.eq.s32.totalorder %v71, %v159
    %vm284 = vcmp.eq.s32.totalorder %v72, %v159
    %vm285 = vcmp.eq.s32.totalorder %v69, %v162
    %vm286 = vcmp.eq.s32.totalorder %v70, %v162
    %vm287 = vcmp.eq.s32.totalorder %v71, %v162
    %vm288 = vcmp.eq.s32.totalorder %v72, %v162
    %vm289 = vcmp.eq.s32.totalorder %v69, %v165
    %vm290 = vcmp.eq.s32.totalorder %v70, %v165
    %vm291 = vcmp.eq.s32.totalorder %v71, %v165
    %vm292 = vcmp.eq.s32.totalorder %v72, %v165
    %vm293 = vcmp.eq.s32.totalorder %v69, %v168
    %vm294 = vcmp.eq.s32.totalorder %v70, %v168
    %vm295 = vcmp.eq.s32.totalorder %v71, %v168
    %vm296 = vcmp.eq.s32.totalorder %v72, %v168
    %v297 = vadd.s32 %v36, 64
    %v298 = vadd.s32 %v37, 64
    %v299 = vadd.s32 %v38, 64
    %v300 = vadd.s32 %v39, 64
    %v301 = vadd.s32 %v40, 64
    %v302 = vadd.s32 %v41, 64
    %v303 = vadd.s32 %v42, 64
    %v304 = vadd.s32 %v43, 64
    %v305 = vadd.s32 %v44, 64
    %v306 = vadd.s32 %v45, 64
    %v307 = vadd.s32 %v46, 64
    %v308 = vadd.s32 %v47, 64
    %v309 = vadd.s32 %v48, 64
    %v310 = vadd.s32 %v49, 64
    %v311 = vadd.s32 %v50, 64
    %v312 = vadd.s32 %v51, 64
    %v313 = vadd.s32 %v52, 64
    %v314 = vadd.s32 %v53, 64
    %v315 = vadd.s32 %v54, 64
    %v316 = vadd.s32 %v55, 64
    %v317 = vadd.s32 %v56, 64
    %v318 = vadd.s32 %v57, 64
    %v319 = vadd.s32 %v58, 64
    %v320 = vadd.s32 %v59, 64
    %v321 = vadd.s32 %v60, 64
    %v322 = vadd.s32 %v61, 64
    %v323 = vadd.s32 %v62, 64
    %v324 = vadd.s32 %v63, 64
    %v325 = vadd.s32 %v64, 64
    %v326 = vadd.s32 %v65, 64
    %v327 = vadd.s32 %v66, 64
    %v328 = vadd.s32 %v67, 64
    %329 = vset.pattern.permute.xlu0 1
    %330 = vperm.xlu0 %329, %v297
    %v331 = vpop.permute.xlu0 %330
    %332 = vset.pattern.permute.xlu0 1
    %333 = vperm.xlu0 %332, %v298
    %v334 = vpop.permute.xlu0 %333
    %335 = vset.pattern.permute.xlu0 1
    %336 = vperm.xlu0 %335, %v299
    %v337 = vpop.permute.xlu0 %336
    %338 = vset.pattern.permute.xlu0 1
    %339 = vperm.xlu0 %338, %v300
    %v340 = vpop.permute.xlu0 %339
    %341 = vset.pattern.permute.xlu0 1
    %342 = vperm.xlu0 %341, %v301
    %v343 = vpop.permute.xlu0 %342
    %344 = vset.pattern.permute.xlu0 1
    %345 = vperm.xlu0 %344, %v302
    %v346 = vpop.permute.xlu0 %345
    %347 = vset.pattern.permute.xlu0 1
    %348 = vperm.xlu0 %347, %v303
    %v349 = vpop.permute.xlu0 %348
    %350 = vset.pattern.permute.xlu0 1
    %351 = vperm.xlu0 %350, %v304
    %v352 = vpop.permute.xlu0 %351
    %353 = vset.pattern.permute.xlu0 1
    %354 = vperm.xlu0 %353, %v305
    %v355 = vpop.permute.xlu0 %354
    %356 = vset.pattern.permute.xlu0 1
    %357 = vperm.xlu0 %356, %v306
    %v358 = vpop.permute.xlu0 %357
    %359 = vset.pattern.permute.xlu0 1
    %360 = vperm.xlu0 %359, %v307
    %v361 = vpop.permute.xlu0 %360
    %362 = vset.pattern.permute.xlu0 1
    %363 = vperm.xlu0 %362, %v308
    %v364 = vpop.permute.xlu0 %363
    %365 = vset.pattern.permute.xlu0 1
    %366 = vperm.xlu0 %365, %v309
    %v367 = vpop.permute.xlu0 %366
    %368 = vset.pattern.permute.xlu0 1
    %369 = vperm.xlu0 %368, %v310
    %v370 = vpop.permute.xlu0 %369
    %371 = vset.pattern.permute.xlu0 1
    %372 = vperm.xlu0 %371, %v311
    %v373 = vpop.permute.xlu0 %372
    %374 = vset.pattern.permute.xlu0 1
    %375 = vperm.xlu0 %374, %v312
    %v376 = vpop.permute.xlu0 %375
    %377 = vset.pattern.permute.xlu0 1
    %378 = vperm.xlu0 %377, %v313
    %v379 = vpop.permute.xlu0 %378
    %380 = vset.pattern.permute.xlu0 1
    %381 = vperm.xlu0 %380, %v314
    %v382 = vpop.permute.xlu0 %381
    %383 = vset.pattern.permute.xlu0 1
    %384 = vperm.xlu0 %383, %v315
    %v385 = vpop.permute.xlu0 %384
    %386 = vset.pattern.permute.xlu0 1
    %387 = vperm.xlu0 %386, %v316
    %v388 = vpop.permute.xlu0 %387
    %389 = vset.pattern.permute.xlu0 1
    %390 = vperm.xlu0 %389, %v317
    %v391 = vpop.permute.xlu0 %390
    %392 = vset.pattern.permute.xlu0 1
    %393 = vperm.xlu0 %392, %v318
    %v394 = vpop.permute.xlu0 %393
    %395 = vset.pattern.permute.xlu0 1
    %396 = vperm.xlu0 %395, %v319
    %v397 = vpop.permute.xlu0 %396
    %398 = vset.pattern.permute.xlu0 1
    %399 = vperm.xlu0 %398, %v320
    %v400 = vpop.permute.xlu0 %399
    %401 = vset.pattern.permute.xlu0 1
    %402 = vperm.xlu0 %401, %v321
    %v403 = vpop.permute.xlu0 %402
    %404 = vset.pattern.permute.xlu0 1
    %405 = vperm.xlu0 %404, %v322
    %v406 = vpop.permute.xlu0 %405
    %407 = vset.pattern.permute.xlu0 1
    %408 = vperm.xlu0 %407, %v323
    %v409 = vpop.permute.xlu0 %408
    %410 = vset.pattern.permute.xlu0 1
    %411 = vperm.xlu0 %410, %v324
    %v412 = vpop.permute.xlu0 %411
    %413 = vset.pattern.permute.xlu0 1
    %414 = vperm.xlu0 %413, %v325
    %v415 = vpop.permute.xlu0 %414
    %416 = vset.pattern.permute.xlu0 1
    %417 = vperm.xlu0 %416, %v326
    %v418 = vpop.permute.xlu0 %417
    %419 = vset.pattern.permute.xlu0 1
    %420 = vperm.xlu0 %419, %v327
    %v421 = vpop.permute.xlu0 %420
    %422 = vset.pattern.permute.xlu0 1
    %423 = vperm.xlu0 %422, %v328
    %v424 = vpop.permute.xlu0 %423
    %vm425 = vcmp.eq.s32.totalorder %v69, %v331
    %vm426 = vcmp.eq.s32.totalorder %v70, %v331
    %vm427 = vcmp.eq.s32.totalorder %v71, %v331
    %vm428 = vcmp.eq.s32.totalorder %v72, %v331
    %vm429 = vcmp.eq.s32.totalorder %v69, %v334
    %vm430 = vcmp.eq.s32.totalorder %v70, %v334
    %vm431 = vcmp.eq.s32.totalorder %v71, %v334
    %vm432 = vcmp.eq.s32.totalorder %v72, %v334
    %vm433 = vcmp.eq.s32.totalorder %v69, %v337
    %vm434 = vcmp.eq.s32.totalorder %v70, %v337
    %vm435 = vcmp.eq.s32.totalorder %v71, %v337
    %vm436 = vcmp.eq.s32.totalorder %v72, %v337
    %vm437 = vcmp.eq.s32.totalorder %v69, %v340
    %vm438 = vcmp.eq.s32.totalorder %v70, %v340
    %vm439 = vcmp.eq.s32.totalorder %v71, %v340
    %vm440 = vcmp.eq.s32.totalorder %v72, %v340
    %vm441 = vcmp.eq.s32.totalorder %v69, %v343
    %vm442 = vcmp.eq.s32.totalorder %v70, %v343
    %vm443 = vcmp.eq.s32.totalorder %v71, %v343
    %vm444 = vcmp.eq.s32.totalorder %v72, %v343
    %vm445 = vcmp.eq.s32.totalorder %v69, %v346
    %vm446 = vcmp.eq.s32.totalorder %v70, %v346
    %vm447 = vcmp.eq.s32.totalorder %v71, %v346
    %vm448 = vcmp.eq.s32.totalorder %v72, %v346
    %vm449 = vcmp.eq.s32.totalorder %v69, %v349
    %vm450 = vcmp.eq.s32.totalorder %v70, %v349
    %vm451 = vcmp.eq.s32.totalorder %v71, %v349
    %vm452 = vcmp.eq.s32.totalorder %v72, %v349
    %vm453 = vcmp.eq.s32.totalorder %v69, %v352
    %vm454 = vcmp.eq.s32.totalorder %v70, %v352
    %vm455 = vcmp.eq.s32.totalorder %v71, %v352
    %vm456 = vcmp.eq.s32.totalorder %v72, %v352
    %vm457 = vcmp.eq.s32.totalorder %v69, %v355
    %vm458 = vcmp.eq.s32.totalorder %v70, %v355
    %vm459 = vcmp.eq.s32.totalorder %v71, %v355
    %vm460 = vcmp.eq.s32.totalorder %v72, %v355
    %vm461 = vcmp.eq.s32.totalorder %v69, %v358
    %vm462 = vcmp.eq.s32.totalorder %v70, %v358
    %vm463 = vcmp.eq.s32.totalorder %v71, %v358
    %vm464 = vcmp.eq.s32.totalorder %v72, %v358
    %vm465 = vcmp.eq.s32.totalorder %v69, %v361
    %vm466 = vcmp.eq.s32.totalorder %v70, %v361
    %vm467 = vcmp.eq.s32.totalorder %v71, %v361
    %vm468 = vcmp.eq.s32.totalorder %v72, %v361
    %vm469 = vcmp.eq.s32.totalorder %v69, %v364
    %vm470 = vcmp.eq.s32.totalorder %v70, %v364
    %vm471 = vcmp.eq.s32.totalorder %v71, %v364
    %vm472 = vcmp.eq.s32.totalorder %v72, %v364
    %vm473 = vcmp.eq.s32.totalorder %v69, %v367
    %vm474 = vcmp.eq.s32.totalorder %v70, %v367
    %vm475 = vcmp.eq.s32.totalorder %v71, %v367
    %vm476 = vcmp.eq.s32.totalorder %v72, %v367
    %vm477 = vcmp.eq.s32.totalorder %v69, %v370
    %vm478 = vcmp.eq.s32.totalorder %v70, %v370
    %vm479 = vcmp.eq.s32.totalorder %v71, %v370
    %vm480 = vcmp.eq.s32.totalorder %v72, %v370
    %vm481 = vcmp.eq.s32.totalorder %v69, %v373
    %vm482 = vcmp.eq.s32.totalorder %v70, %v373
    %vm483 = vcmp.eq.s32.totalorder %v71, %v373
    %vm484 = vcmp.eq.s32.totalorder %v72, %v373
    %vm485 = vcmp.eq.s32.totalorder %v69, %v376
    %vm486 = vcmp.eq.s32.totalorder %v70, %v376
    %vm487 = vcmp.eq.s32.totalorder %v71, %v376
    %vm488 = vcmp.eq.s32.totalorder %v72, %v376
    %vm489 = vcmp.eq.s32.totalorder %v69, %v379
    %vm490 = vcmp.eq.s32.totalorder %v70, %v379
    %vm491 = vcmp.eq.s32.totalorder %v71, %v379
    %vm492 = vcmp.eq.s32.totalorder %v72, %v379
    %vm493 = vcmp.eq.s32.totalorder %v69, %v382
    %vm494 = vcmp.eq.s32.totalorder %v70, %v382
    %vm495 = vcmp.eq.s32.totalorder %v71, %v382
    %vm496 = vcmp.eq.s32.totalorder %v72, %v382
    %vm497 = vcmp.eq.s32.totalorder %v69, %v385
    %vm498 = vcmp.eq.s32.totalorder %v70, %v385
    %vm499 = vcmp.eq.s32.totalorder %v71, %v385
    %vm500 = vcmp.eq.s32.totalorder %v72, %v385
    %vm501 = vcmp.eq.s32.totalorder %v69, %v388
    %vm502 = vcmp.eq.s32.totalorder %v70, %v388
    %vm503 = vcmp.eq.s32.totalorder %v71, %v388
    %vm504 = vcmp.eq.s32.totalorder %v72, %v388
    %vm505 = vcmp.eq.s32.totalorder %v69, %v391
    %vm506 = vcmp.eq.s32.totalorder %v70, %v391
    %vm507 = vcmp.eq.s32.totalorder %v71, %v391
    %vm508 = vcmp.eq.s32.totalorder %v72, %v391
    %vm509 = vcmp.eq.s32.totalorder %v69, %v394
    %vm510 = vcmp.eq.s32.totalorder %v70, %v394
    %vm511 = vcmp.eq.s32.totalorder %v71, %v394
    %vm512 = vcmp.eq.s32.totalorder %v72, %v394
    %vm513 = vcmp.eq.s32.totalorder %v69, %v397
    %vm514 = vcmp.eq.s32.totalorder %v70, %v397
    %vm515 = vcmp.eq.s32.totalorder %v71, %v397
    %vm516 = vcmp.eq.s32.totalorder %v72, %v397
    %vm517 = vcmp.eq.s32.totalorder %v69, %v400
    %vm518 = vcmp.eq.s32.totalorder %v70, %v400
    %vm519 = vcmp.eq.s32.totalorder %v71, %v400
    %vm520 = vcmp.eq.s32.totalorder %v72, %v400
    %vm521 = vcmp.eq.s32.totalorder %v69, %v403
    %vm522 = vcmp.eq.s32.totalorder %v70, %v403
    %vm523 = vcmp.eq.s32.totalorder %v71, %v403
    %vm524 = vcmp.eq.s32.totalorder %v72, %v403
    %vm525 = vcmp.eq.s32.totalorder %v69, %v406
    %vm526 = vcmp.eq.s32.totalorder %v70, %v406
    %vm527 = vcmp.eq.s32.totalorder %v71, %v406
    %vm528 = vcmp.eq.s32.totalorder %v72, %v406
    %vm529 = vcmp.eq.s32.totalorder %v69, %v409
    %vm530 = vcmp.eq.s32.totalorder %v70, %v409
    %vm531 = vcmp.eq.s32.totalorder %v71, %v409
    %vm532 = vcmp.eq.s32.totalorder %v72, %v409
    %vm533 = vcmp.eq.s32.totalorder %v69, %v412
    %vm534 = vcmp.eq.s32.totalorder %v70, %v412
    %vm535 = vcmp.eq.s32.totalorder %v71, %v412
    %vm536 = vcmp.eq.s32.totalorder %v72, %v412
    %vm537 = vcmp.eq.s32.totalorder %v69, %v415
    %vm538 = vcmp.eq.s32.totalorder %v70, %v415
    %vm539 = vcmp.eq.s32.totalorder %v71, %v415
    %vm540 = vcmp.eq.s32.totalorder %v72, %v415
    %vm541 = vcmp.eq.s32.totalorder %v69, %v418
    %vm542 = vcmp.eq.s32.totalorder %v70, %v418
    %vm543 = vcmp.eq.s32.totalorder %v71, %v418
    %vm544 = vcmp.eq.s32.totalorder %v72, %v418
    %vm545 = vcmp.eq.s32.totalorder %v69, %v421
    %vm546 = vcmp.eq.s32.totalorder %v70, %v421
    %vm547 = vcmp.eq.s32.totalorder %v71, %v421
    %vm548 = vcmp.eq.s32.totalorder %v72, %v421
    %vm549 = vcmp.eq.s32.totalorder %v69, %v424
    %vm550 = vcmp.eq.s32.totalorder %v70, %v424
    %vm551 = vcmp.eq.s32.totalorder %v71, %v424
    %vm552 = vcmp.eq.s32.totalorder %v72, %v424
    %vm553 = vmor %vm169, %vm425
    %vm554 = vmor %vm170, %vm426
    %vm555 = vmor %vm171, %vm427
    %vm556 = vmor %vm172, %vm428
    %vm557 = vmor %vm173, %vm429
    %vm558 = vmor %vm174, %vm430
    %vm559 = vmor %vm175, %vm431
    %vm560 = vmor %vm176, %vm432
    %vm561 = vmor %vm177, %vm433
    %vm562 = vmor %vm178, %vm434
    %vm563 = vmor %vm179, %vm435
    %vm564 = vmor %vm180, %vm436
    %vm565 = vmor %vm181, %vm437
    %vm566 = vmor %vm182, %vm438
    %vm567 = vmor %vm183, %vm439
    %vm568 = vmor %vm184, %vm440
    %vm569 = vmor %vm185, %vm441
    %vm570 = vmor %vm186, %vm442
    %vm571 = vmor %vm187, %vm443
    %vm572 = vmor %vm188, %vm444
    %vm573 = vmor %vm189, %vm445
    %vm574 = vmor %vm190, %vm446
    %vm575 = vmor %vm191, %vm447
    %vm576 = vmor %vm192, %vm448
    %vm577 = vmor %vm193, %vm449
    %vm578 = vmor %vm194, %vm450
    %vm579 = vmor %vm195, %vm451
    %vm580 = vmor %vm196, %vm452
    %vm581 = vmor %vm197, %vm453
    %vm582 = vmor %vm198, %vm454
    %vm583 = vmor %vm199, %vm455
    %vm584 = vmor %vm200, %vm456
    %vm585 = vmor %vm201, %vm457
    %vm586 = vmor %vm202, %vm458
    %vm587 = vmor %vm203, %vm459
    %vm588 = vmor %vm204, %vm460
    %vm589 = vmor %vm205, %vm461
    %vm590 = vmor %vm206, %vm462
    %vm591 = vmor %vm207, %vm463
    %vm592 = vmor %vm208, %vm464
    %vm593 = vmor %vm209, %vm465
    %vm594 = vmor %vm210, %vm466
    %vm595 = vmor %vm211, %vm467
    %vm596 = vmor %vm212, %vm468
    %vm597 = vmor %vm213, %vm469
    %vm598 = vmor %vm214, %vm470
    %vm599 = vmor %vm215, %vm471
    %vm600 = vmor %vm216, %vm472
    %vm601 = vmor %vm217, %vm473
    %vm602 = vmor %vm218, %vm474
    %vm603 = vmor %vm219, %vm475
    %vm604 = vmor %vm220, %vm476
    %vm605 = vmor %vm221, %vm477
    %vm606 = vmor %vm222, %vm478
    %vm607 = vmor %vm223, %vm479
    %vm608 = vmor %vm224, %vm480
    %vm609 = vmor %vm225, %vm481
    %vm610 = vmor %vm226, %vm482
    %vm611 = vmor %vm227, %vm483
    %vm612 = vmor %vm228, %vm484
    %vm613 = vmor %vm229, %vm485
    %vm614 = vmor %vm230, %vm486
    %vm615 = vmor %vm231, %vm487
    %vm616 = vmor %vm232, %vm488
    %vm617 = vmor %vm233, %vm489
    %vm618 = vmor %vm234, %vm490
    %vm619 = vmor %vm235, %vm491
    %vm620 = vmor %vm236, %vm492
    %vm621 = vmor %vm237, %vm493
    %vm622 = vmor %vm238, %vm494
    %vm623 = vmor %vm239, %vm495
    %vm624 = vmor %vm240, %vm496
    %vm625 = vmor %vm241, %vm497
    %vm626 = vmor %vm242, %vm498
    %vm627 = vmor %vm243, %vm499
    %vm628 = vmor %vm244, %vm500
    %vm629 = vmor %vm245, %vm501
    %vm630 = vmor %vm246, %vm502
    %vm631 = vmor %vm247, %vm503
    %vm632 = vmor %vm248, %vm504
    %vm633 = vmor %vm249, %vm505
    %vm634 = vmor %vm250, %vm506
    %vm635 = vmor %vm251, %vm507
    %vm636 = vmor %vm252, %vm508
    %vm637 = vmor %vm253, %vm509
    %vm638 = vmor %vm254, %vm510
    %vm639 = vmor %vm255, %vm511
    %vm640 = vmor %vm256, %vm512
    %vm641 = vmor %vm257, %vm513
    %vm642 = vmor %vm258, %vm514
    %vm643 = vmor %vm259, %vm515
    %vm644 = vmor %vm260, %vm516
    %vm645 = vmor %vm261, %vm517
    %vm646 = vmor %vm262, %vm518
    %vm647 = vmor %vm263, %vm519
    %vm648 = vmor %vm264, %vm520
    %vm649 = vmor %vm265, %vm521
    %vm650 = vmor %vm266, %vm522
    %vm651 = vmor %vm267, %vm523
    %vm652 = vmor %vm268, %vm524
    %vm653 = vmor %vm269, %vm525
    %vm654 = vmor %vm270, %vm526
    %vm655 = vmor %vm271, %vm527
    %vm656 = vmor %vm272, %vm528
    %vm657 = vmor %vm273, %vm529
    %vm658 = vmor %vm274, %vm530
    %vm659 = vmor %vm275, %vm531
    %vm660 = vmor %vm276, %vm532
    %vm661 = vmor %vm277, %vm533
    %vm662 = vmor %vm278, %vm534
    %vm663 = vmor %vm279, %vm535
    %vm664 = vmor %vm280, %vm536
    %vm665 = vmor %vm281, %vm537
    %vm666 = vmor %vm282, %vm538
    %vm667 = vmor %vm283, %vm539
    %vm668 = vmor %vm284, %vm540
    %vm669 = vmor %vm285, %vm541
    %vm670 = vmor %vm286, %vm542
    %vm671 = vmor %vm287, %vm543
    %vm672 = vmor %vm288, %vm544
    %vm673 = vmor %vm289, %vm545
    %vm674 = vmor %vm290, %vm546
    %vm675 = vmor %vm291, %vm547
    %vm676 = vmor %vm292, %vm548
    %vm677 = vmor %vm293, %vm549
    %vm678 = vmor %vm294, %vm550
    %vm679 = vmor %vm295, %vm551
    %vm680 = vmor %vm296, %vm552
    %v681 = vadd.s32 %v36, 128
    %v682 = vadd.s32 %v37, 128
    %v683 = vadd.s32 %v38, 128
    %v684 = vadd.s32 %v39, 128
    %v685 = vadd.s32 %v40, 128
    %v686 = vadd.s32 %v41, 128
    %v687 = vadd.s32 %v42, 128
    %v688 = vadd.s32 %v43, 128
    %v689 = vadd.s32 %v44, 128
    %v690 = vadd.s32 %v45, 128
    %v691 = vadd.s32 %v46, 128
    %v692 = vadd.s32 %v47, 128
    %v693 = vadd.s32 %v48, 128
    %v694 = vadd.s32 %v49, 128
    %v695 = vadd.s32 %v50, 128
    %v696 = vadd.s32 %v51, 128
    %v697 = vadd.s32 %v52, 128
    %v698 = vadd.s32 %v53, 128
    %v699 = vadd.s32 %v54, 128
    %v700 = vadd.s32 %v55, 128
    %v701 = vadd.s32 %v56, 128
    %v702 = vadd.s32 %v57, 128
    %v703 = vadd.s32 %v58, 128
    %v704 = vadd.s32 %v59, 128
    %v705 = vadd.s32 %v60, 128
    %v706 = vadd.s32 %v61, 128
    %v707 = vadd.s32 %v62, 128
    %v708 = vadd.s32 %v63, 128
    %v709 = vadd.s32 %v64, 128
    %v710 = vadd.s32 %v65, 128
    %v711 = vadd.s32 %v66, 128
    %v712 = vadd.s32 %v67, 128
    %713 = vset.pattern.permute.xlu0 2
    %714 = vperm.xlu0 %713, %v681
    %v715 = vpop.permute.xlu0 %714
    %716 = vset.pattern.permute.xlu0 2
    %717 = vperm.xlu0 %716, %v682
    %v718 = vpop.permute.xlu0 %717
    %719 = vset.pattern.permute.xlu0 2
    %720 = vperm.xlu0 %719, %v683
    %v721 = vpop.permute.xlu0 %720
    %722 = vset.pattern.permute.xlu0 2
    %723 = vperm.xlu0 %722, %v684
    %v724 = vpop.permute.xlu0 %723
    %725 = vset.pattern.permute.xlu0 2
    %726 = vperm.xlu0 %725, %v685
    %v727 = vpop.permute.xlu0 %726
    %728 = vset.pattern.permute.xlu0 2
    %729 = vperm.xlu0 %728, %v686
    %v730 = vpop.permute.xlu0 %729
    %731 = vset.pattern.permute.xlu0 2
    %732 = vperm.xlu0 %731, %v687
    %v733 = vpop.permute.xlu0 %732
    %734 = vset.pattern.permute.xlu0 2
    %735 = vperm.xlu0 %734, %v688
    %v736 = vpop.permute.xlu0 %735
    %737 = vset.pattern.permute.xlu0 2
    %738 = vperm.xlu0 %737, %v689
    %v739 = vpop.permute.xlu0 %738
    %740 = vset.pattern.permute.xlu0 2
    %741 = vperm.xlu0 %740, %v690
    %v742 = vpop.permute.xlu0 %741
    %743 = vset.pattern.permute.xlu0 2
    %744 = vperm.xlu0 %743, %v691
    %v745 = vpop.permute.xlu0 %744
    %746 = vset.pattern.permute.xlu0 2
    %747 = vperm.xlu0 %746, %v692
    %v748 = vpop.permute.xlu0 %747
    %749 = vset.pattern.permute.xlu0 2
    %750 = vperm.xlu0 %749, %v693
    %v751 = vpop.permute.xlu0 %750
    %752 = vset.pattern.permute.xlu0 2
    %753 = vperm.xlu0 %752, %v694
    %v754 = vpop.permute.xlu0 %753
    %755 = vset.pattern.permute.xlu0 2
    %756 = vperm.xlu0 %755, %v695
    %v757 = vpop.permute.xlu0 %756
    %758 = vset.pattern.permute.xlu0 2
    %759 = vperm.xlu0 %758, %v696
    %v760 = vpop.permute.xlu0 %759
    %761 = vset.pattern.permute.xlu0 2
    %762 = vperm.xlu0 %761, %v697
    %v763 = vpop.permute.xlu0 %762
    %764 = vset.pattern.permute.xlu0 2
    %765 = vperm.xlu0 %764, %v698
    %v766 = vpop.permute.xlu0 %765
    %767 = vset.pattern.permute.xlu0 2
    %768 = vperm.xlu0 %767, %v699
    %v769 = vpop.permute.xlu0 %768
    %770 = vset.pattern.permute.xlu0 2
    %771 = vperm.xlu0 %770, %v700
    %v772 = vpop.permute.xlu0 %771
    %773 = vset.pattern.permute.xlu0 2
    %774 = vperm.xlu0 %773, %v701
    %v775 = vpop.permute.xlu0 %774
    %776 = vset.pattern.permute.xlu0 2
    %777 = vperm.xlu0 %776, %v702
    %v778 = vpop.permute.xlu0 %777
    %779 = vset.pattern.permute.xlu0 2
    %780 = vperm.xlu0 %779, %v703
    %v781 = vpop.permute.xlu0 %780
    %782 = vset.pattern.permute.xlu0 2
    %783 = vperm.xlu0 %782, %v704
    %v784 = vpop.permute.xlu0 %783
    %785 = vset.pattern.permute.xlu0 2
    %786 = vperm.xlu0 %785, %v705
    %v787 = vpop.permute.xlu0 %786
    %788 = vset.pattern.permute.xlu0 2
    %789 = vperm.xlu0 %788, %v706
    %v790 = vpop.permute.xlu0 %789
    %791 = vset.pattern.permute.xlu0 2
    %792 = vperm.xlu0 %791, %v707
    %v793 = vpop.permute.xlu0 %792
    %794 = vset.pattern.permute.xlu0 2
    %795 = vperm.xlu0 %794, %v708
    %v796 = vpop.permute.xlu0 %795
    %797 = vset.pattern.permute.xlu0 2
    %798 = vperm.xlu0 %797, %v709
    %v799 = vpop.permute.xlu0 %798
    %800 = vset.pattern.permute.xlu0 2
    %801 = vperm.xlu0 %800, %v710
    %v802 = vpop.permute.xlu0 %801
    %803 = vset.pattern.permute.xlu0 2
    %804 = vperm.xlu0 %803, %v711
    %v805 = vpop.permute.xlu0 %804
    %806 = vset.pattern.permute.xlu0 2
    %807 = vperm.xlu0 %806, %v712
    %v808 = vpop.permute.xlu0 %807
    %vm809 = vcmp.eq.s32.totalorder %v69, %v715
    %vm810 = vcmp.eq.s32.totalorder %v70, %v715
    %vm811 = vcmp.eq.s32.totalorder %v71, %v715
    %vm812 = vcmp.eq.s32.totalorder %v72, %v715
    %vm813 = vcmp.eq.s32.totalorder %v69, %v718
    %vm814 = vcmp.eq.s32.totalorder %v70, %v718
    %vm815 = vcmp.eq.s32.totalorder %v71, %v718
    %vm816 = vcmp.eq.s32.totalorder %v72, %v718
    %vm817 = vcmp.eq.s32.totalorder %v69, %v721
    %vm818 = vcmp.eq.s32.totalorder %v70, %v721
    %vm819 = vcmp.eq.s32.totalorder %v71, %v721
    %vm820 = vcmp.eq.s32.totalorder %v72, %v721
    %vm821 = vcmp.eq.s32.totalorder %v69, %v724
    %vm822 = vcmp.eq.s32.totalorder %v70, %v724
    %vm823 = vcmp.eq.s32.totalorder %v71, %v724
    %vm824 = vcmp.eq.s32.totalorder %v72, %v724
    %vm825 = vcmp.eq.s32.totalorder %v69, %v727
    %vm826 = vcmp.eq.s32.totalorder %v70, %v727
    %vm827 = vcmp.eq.s32.totalorder %v71, %v727
    %vm828 = vcmp.eq.s32.totalorder %v72, %v727
    %vm829 = vcmp.eq.s32.totalorder %v69, %v730
    %vm830 = vcmp.eq.s32.totalorder %v70, %v730
    %vm831 = vcmp.eq.s32.totalorder %v71, %v730
    %vm832 = vcmp.eq.s32.totalorder %v72, %v730
    %vm833 = vcmp.eq.s32.totalorder %v69, %v733
    %vm834 = vcmp.eq.s32.totalorder %v70, %v733
    %vm835 = vcmp.eq.s32.totalorder %v71, %v733
    %vm836 = vcmp.eq.s32.totalorder %v72, %v733
    %vm837 = vcmp.eq.s32.totalorder %v69, %v736
    %vm838 = vcmp.eq.s32.totalorder %v70, %v736
    %vm839 = vcmp.eq.s32.totalorder %v71, %v736
    %vm840 = vcmp.eq.s32.totalorder %v72, %v736
    %vm841 = vcmp.eq.s32.totalorder %v69, %v739
    %vm842 = vcmp.eq.s32.totalorder %v70, %v739
    %vm843 = vcmp.eq.s32.totalorder %v71, %v739
    %vm844 = vcmp.eq.s32.totalorder %v72, %v739
    %vm845 = vcmp.eq.s32.totalorder %v69, %v742
    %vm846 = vcmp.eq.s32.totalorder %v70, %v742
    %vm847 = vcmp.eq.s32.totalorder %v71, %v742
    %vm848 = vcmp.eq.s32.totalorder %v72, %v742
    %vm849 = vcmp.eq.s32.totalorder %v69, %v745
    %vm850 = vcmp.eq.s32.totalorder %v70, %v745
    %vm851 = vcmp.eq.s32.totalorder %v71, %v745
    %vm852 = vcmp.eq.s32.totalorder %v72, %v745
    %vm853 = vcmp.eq.s32.totalorder %v69, %v748
    %vm854 = vcmp.eq.s32.totalorder %v70, %v748
    %vm855 = vcmp.eq.s32.totalorder %v71, %v748
    %vm856 = vcmp.eq.s32.totalorder %v72, %v748
    %vm857 = vcmp.eq.s32.totalorder %v69, %v751
    %vm858 = vcmp.eq.s32.totalorder %v70, %v751
    %vm859 = vcmp.eq.s32.totalorder %v71, %v751
    %vm860 = vcmp.eq.s32.totalorder %v72, %v751
    %vm861 = vcmp.eq.s32.totalorder %v69, %v754
    %vm862 = vcmp.eq.s32.totalorder %v70, %v754
    %vm863 = vcmp.eq.s32.totalorder %v71, %v754
    %vm864 = vcmp.eq.s32.totalorder %v72, %v754
    %vm865 = vcmp.eq.s32.totalorder %v69, %v757
    %vm866 = vcmp.eq.s32.totalorder %v70, %v757
    %vm867 = vcmp.eq.s32.totalorder %v71, %v757
    %vm868 = vcmp.eq.s32.totalorder %v72, %v757
    %vm869 = vcmp.eq.s32.totalorder %v69, %v760
    %vm870 = vcmp.eq.s32.totalorder %v70, %v760
    %vm871 = vcmp.eq.s32.totalorder %v71, %v760
    %vm872 = vcmp.eq.s32.totalorder %v72, %v760
    %vm873 = vcmp.eq.s32.totalorder %v69, %v763
    %vm874 = vcmp.eq.s32.totalorder %v70, %v763
    %vm875 = vcmp.eq.s32.totalorder %v71, %v763
    %vm876 = vcmp.eq.s32.totalorder %v72, %v763
    %vm877 = vcmp.eq.s32.totalorder %v69, %v766
    %vm878 = vcmp.eq.s32.totalorder %v70, %v766
    %vm879 = vcmp.eq.s32.totalorder %v71, %v766
    %vm880 = vcmp.eq.s32.totalorder %v72, %v766
    %vm881 = vcmp.eq.s32.totalorder %v69, %v769
    %vm882 = vcmp.eq.s32.totalorder %v70, %v769
    %vm883 = vcmp.eq.s32.totalorder %v71, %v769
    %vm884 = vcmp.eq.s32.totalorder %v72, %v769
    %vm885 = vcmp.eq.s32.totalorder %v69, %v772
    %vm886 = vcmp.eq.s32.totalorder %v70, %v772
    %vm887 = vcmp.eq.s32.totalorder %v71, %v772
    %vm888 = vcmp.eq.s32.totalorder %v72, %v772
    %vm889 = vcmp.eq.s32.totalorder %v69, %v775
    %vm890 = vcmp.eq.s32.totalorder %v70, %v775
    %vm891 = vcmp.eq.s32.totalorder %v71, %v775
    %vm892 = vcmp.eq.s32.totalorder %v72, %v775
    %vm893 = vcmp.eq.s32.totalorder %v69, %v778
    %vm894 = vcmp.eq.s32.totalorder %v70, %v778
    %vm895 = vcmp.eq.s32.totalorder %v71, %v778
    %vm896 = vcmp.eq.s32.totalorder %v72, %v778
    %vm897 = vcmp.eq.s32.totalorder %v69, %v781
    %vm898 = vcmp.eq.s32.totalorder %v70, %v781
    %vm899 = vcmp.eq.s32.totalorder %v71, %v781
    %vm900 = vcmp.eq.s32.totalorder %v72, %v781
    %vm901 = vcmp.eq.s32.totalorder %v69, %v784
    %vm902 = vcmp.eq.s32.totalorder %v70, %v784
    %vm903 = vcmp.eq.s32.totalorder %v71, %v784
    %vm904 = vcmp.eq.s32.totalorder %v72, %v784
    %vm905 = vcmp.eq.s32.totalorder %v69, %v787
    %vm906 = vcmp.eq.s32.totalorder %v70, %v787
    %vm907 = vcmp.eq.s32.totalorder %v71, %v787
    %vm908 = vcmp.eq.s32.totalorder %v72, %v787
    %vm909 = vcmp.eq.s32.totalorder %v69, %v790
    %vm910 = vcmp.eq.s32.totalorder %v70, %v790
    %vm911 = vcmp.eq.s32.totalorder %v71, %v790
    %vm912 = vcmp.eq.s32.totalorder %v72, %v790
    %vm913 = vcmp.eq.s32.totalorder %v69, %v793
    %vm914 = vcmp.eq.s32.totalorder %v70, %v793
    %vm915 = vcmp.eq.s32.totalorder %v71, %v793
    %vm916 = vcmp.eq.s32.totalorder %v72, %v793
    %vm917 = vcmp.eq.s32.totalorder %v69, %v796
    %vm918 = vcmp.eq.s32.totalorder %v70, %v796
    %vm919 = vcmp.eq.s32.totalorder %v71, %v796
    %vm920 = vcmp.eq.s32.totalorder %v72, %v796
    %vm921 = vcmp.eq.s32.totalorder %v69, %v799
    %vm922 = vcmp.eq.s32.totalorder %v70, %v799
    %vm923 = vcmp.eq.s32.totalorder %v71, %v799
    %vm924 = vcmp.eq.s32.totalorder %v72, %v799
    %vm925 = vcmp.eq.s32.totalorder %v69, %v802
    %vm926 = vcmp.eq.s32.totalorder %v70, %v802
    %vm927 = vcmp.eq.s32.totalorder %v71, %v802
    %vm928 = vcmp.eq.s32.totalorder %v72, %v802
    %vm929 = vcmp.eq.s32.totalorder %v69, %v805
    %vm930 = vcmp.eq.s32.totalorder %v70, %v805
    %vm931 = vcmp.eq.s32.totalorder %v71, %v805
    %vm932 = vcmp.eq.s32.totalorder %v72, %v805
    %vm933 = vcmp.eq.s32.totalorder %v69, %v808
    %vm934 = vcmp.eq.s32.totalorder %v70, %v808
    %vm935 = vcmp.eq.s32.totalorder %v71, %v808
    %vm936 = vcmp.eq.s32.totalorder %v72, %v808
    %vm937 = vmor %vm553, %vm809
    %vm938 = vmor %vm554, %vm810
    %vm939 = vmor %vm555, %vm811
    %vm940 = vmor %vm556, %vm812
    %vm941 = vmor %vm557, %vm813
    %vm942 = vmor %vm558, %vm814
    %vm943 = vmor %vm559, %vm815
    %vm944 = vmor %vm560, %vm816
    %vm945 = vmor %vm561, %vm817
    %vm946 = vmor %vm562, %vm818
    %vm947 = vmor %vm563, %vm819
    %vm948 = vmor %vm564, %vm820
    %vm949 = vmor %vm565, %vm821
    %vm950 = vmor %vm566, %vm822
    %vm951 = vmor %vm567, %vm823
    %vm952 = vmor %vm568, %vm824
    %vm953 = vmor %vm569, %vm825
    %vm954 = vmor %vm570, %vm826
    %vm955 = vmor %vm571, %vm827
    %vm956 = vmor %vm572, %vm828
    %vm957 = vmor %vm573, %vm829
    %vm958 = vmor %vm574, %vm830
    %vm959 = vmor %vm575, %vm831
    %vm960 = vmor %vm576, %vm832
    %vm961 = vmor %vm577, %vm833
    %vm962 = vmor %vm578, %vm834
    %vm963 = vmor %vm579, %vm835
    %vm964 = vmor %vm580, %vm836
    %vm965 = vmor %vm581, %vm837
    %vm966 = vmor %vm582, %vm838
    %vm967 = vmor %vm583, %vm839
    %vm968 = vmor %vm584, %vm840
    %vm969 = vmor %vm585, %vm841
    %vm970 = vmor %vm586, %vm842
    %vm971 = vmor %vm587, %vm843
    %vm972 = vmor %vm588, %vm844
    %vm973 = vmor %vm589, %vm845
    %vm974 = vmor %vm590, %vm846
    %vm975 = vmor %vm591, %vm847
    %vm976 = vmor %vm592, %vm848
    %vm977 = vmor %vm593, %vm849
    %vm978 = vmor %vm594, %vm850
    %vm979 = vmor %vm595, %vm851
    %vm980 = vmor %vm596, %vm852
    %vm981 = vmor %vm597, %vm853
    %vm982 = vmor %vm598, %vm854
    %vm983 = vmor %vm599, %vm855
    %vm984 = vmor %vm600, %vm856
    %vm985 = vmor %vm601, %vm857
    %vm986 = vmor %vm602, %vm858
    %vm987 = vmor %vm603, %vm859
    %vm988 = vmor %vm604, %vm860
    %vm989 = vmor %vm605, %vm861
    %vm990 = vmor %vm606, %vm862
    %vm991 = vmor %vm607, %vm863
    %vm992 = vmor %vm608, %vm864
    %vm993 = vmor %vm609, %vm865
    %vm994 = vmor %vm610, %vm866
    %vm995 = vmor %vm611, %vm867
    %vm996 = vmor %vm612, %vm868
    %vm997 = vmor %vm613, %vm869
    %vm998 = vmor %vm614, %vm870
    %vm999 = vmor %vm615, %vm871
    %vm1000 = vmor %vm616, %vm872
    %vm1001 = vmor %vm617, %vm873
    %vm1002 = vmor %vm618, %vm874
    %vm1003 = vmor %vm619, %vm875
    %vm1004 = vmor %vm620, %vm876
    %vm1005 = vmor %vm621, %vm877
    %vm1006 = vmor %vm622, %vm878
    %vm1007 = vmor %vm623, %vm879
    %vm1008 = vmor %vm624, %vm880
    %vm1009 = vmor %vm625, %vm881
    %vm1010 = vmor %vm626, %vm882
    %vm1011 = vmor %vm627, %vm883
    %vm1012 = vmor %vm628, %vm884
    %vm1013 = vmor %vm629, %vm885
    %vm1014 = vmor %vm630, %vm886
    %vm1015 = vmor %vm631, %vm887
    %vm1016 = vmor %vm632, %vm888
    %vm1017 = vmor %vm633, %vm889
    %vm1018 = vmor %vm634, %vm890
    %vm1019 = vmor %vm635, %vm891
    %vm1020 = vmor %vm636, %vm892
    %vm1021 = vmor %vm637, %vm893
    %vm1022 = vmor %vm638, %vm894
    %vm1023 = vmor %vm639, %vm895
    %vm1024 = vmor %vm640, %vm896
    %vm1025 = vmor %vm641, %vm897
    %vm1026 = vmor %vm642, %vm898
    %vm1027 = vmor %vm643, %vm899
    %vm1028 = vmor %vm644, %vm900
    %vm1029 = vmor %vm645, %vm901
    %vm1030 = vmor %vm646, %vm902
    %vm1031 = vmor %vm647, %vm903
    %vm1032 = vmor %vm648, %vm904
    %vm1033 = vmor %vm649, %vm905
    %vm1034 = vmor %vm650, %vm906
    %vm1035 = vmor %vm651, %vm907
    %vm1036 = vmor %vm652, %vm908
    %vm1037 = vmor %vm653, %vm909
    %vm1038 = vmor %vm654, %vm910
    %vm1039 = vmor %vm655, %vm911
    %vm1040 = vmor %vm656, %vm912
    %vm1041 = vmor %vm657, %vm913
    %vm1042 = vmor %vm658, %vm914
    %vm1043 = vmor %vm659, %vm915
    %vm1044 = vmor %vm660, %vm916
    %vm1045 = vmor %vm661, %vm917
    %vm1046 = vmor %vm662, %vm918
    %vm1047 = vmor %vm663, %vm919
    %vm1048 = vmor %vm664, %vm920
    %vm1049 = vmor %vm665, %vm921
    %vm1050 = vmor %vm666, %vm922
    %vm1051 = vmor %vm667, %vm923
    %vm1052 = vmor %vm668, %vm924
    %vm1053 = vmor %vm669, %vm925
    %vm1054 = vmor %vm670, %vm926
    %vm1055 = vmor %vm671, %vm927
    %vm1056 = vmor %vm672, %vm928
    %vm1057 = vmor %vm673, %vm929
    %vm1058 = vmor %vm674, %vm930
    %vm1059 = vmor %vm675, %vm931
    %vm1060 = vmor %vm676, %vm932
    %vm1061 = vmor %vm677, %vm933
    %vm1062 = vmor %vm678, %vm934
    %vm1063 = vmor %vm679, %vm935
    %vm1064 = vmor %vm680, %vm936
    %v1065 = vadd.s32 %v36, 192
    %v1066 = vadd.s32 %v37, 192
    %v1067 = vadd.s32 %v38, 192
    %v1068 = vadd.s32 %v39, 192
    %v1069 = vadd.s32 %v40, 192
    %v1070 = vadd.s32 %v41, 192
    %v1071 = vadd.s32 %v42, 192
    %v1072 = vadd.s32 %v43, 192
    %v1073 = vadd.s32 %v44, 192
    %v1074 = vadd.s32 %v45, 192
    %v1075 = vadd.s32 %v46, 192
    %v1076 = vadd.s32 %v47, 192
    %v1077 = vadd.s32 %v48, 192
    %v1078 = vadd.s32 %v49, 192
    %v1079 = vadd.s32 %v50, 192
    %v1080 = vadd.s32 %v51, 192
    %v1081 = vadd.s32 %v52, 192
    %v1082 = vadd.s32 %v53, 192
    %v1083 = vadd.s32 %v54, 192
    %v1084 = vadd.s32 %v55, 192
    %v1085 = vadd.s32 %v56, 192
    %v1086 = vadd.s32 %v57, 192
    %v1087 = vadd.s32 %v58, 192
    %v1088 = vadd.s32 %v59, 192
    %v1089 = vadd.s32 %v60, 192
    %v1090 = vadd.s32 %v61, 192
    %v1091 = vadd.s32 %v62, 192
    %v1092 = vadd.s32 %v63, 192
    %v1093 = vadd.s32 %v64, 192
    %v1094 = vadd.s32 %v65, 192
    %v1095 = vadd.s32 %v66, 192
    %v1096 = vadd.s32 %v67, 192
    %1097 = vset.pattern.permute.xlu0 3
    %1098 = vperm.xlu0 %1097, %v1065
    %v1099 = vpop.permute.xlu0 %1098
    %1100 = vset.pattern.permute.xlu0 3
    %1101 = vperm.xlu0 %1100, %v1066
    %v1102 = vpop.permute.xlu0 %1101
    %1103 = vset.pattern.permute.xlu0 3
    %1104 = vperm.xlu0 %1103, %v1067
    %v1105 = vpop.permute.xlu0 %1104
    %1106 = vset.pattern.permute.xlu0 3
    %1107 = vperm.xlu0 %1106, %v1068
    %v1108 = vpop.permute.xlu0 %1107
    %1109 = vset.pattern.permute.xlu0 3
    %1110 = vperm.xlu0 %1109, %v1069
    %v1111 = vpop.permute.xlu0 %1110
    %1112 = vset.pattern.permute.xlu0 3
    %1113 = vperm.xlu0 %1112, %v1070
    %v1114 = vpop.permute.xlu0 %1113
    %1115 = vset.pattern.permute.xlu0 3
    %1116 = vperm.xlu0 %1115, %v1071
    %v1117 = vpop.permute.xlu0 %1116
    %1118 = vset.pattern.permute.xlu0 3
    %1119 = vperm.xlu0 %1118, %v1072
    %v1120 = vpop.permute.xlu0 %1119
    %1121 = vset.pattern.permute.xlu0 3
    %1122 = vperm.xlu0 %1121, %v1073
    %v1123 = vpop.permute.xlu0 %1122
    %1124 = vset.pattern.permute.xlu0 3
    %1125 = vperm.xlu0 %1124, %v1074
    %v1126 = vpop.permute.xlu0 %1125
    %1127 = vset.pattern.permute.xlu0 3
    %1128 = vperm.xlu0 %1127, %v1075
    %v1129 = vpop.permute.xlu0 %1128
    %1130 = vset.pattern.permute.xlu0 3
    %1131 = vperm.xlu0 %1130, %v1076
    %v1132 = vpop.permute.xlu0 %1131
    %1133 = vset.pattern.permute.xlu0 3
    %1134 = vperm.xlu0 %1133, %v1077
    %v1135 = vpop.permute.xlu0 %1134
    %1136 = vset.pattern.permute.xlu0 3
    %1137 = vperm.xlu0 %1136, %v1078
    %v1138 = vpop.permute.xlu0 %1137
    %1139 = vset.pattern.permute.xlu0 3
    %1140 = vperm.xlu0 %1139, %v1079
    %v1141 = vpop.permute.xlu0 %1140
    %1142 = vset.pattern.permute.xlu0 3
    %1143 = vperm.xlu0 %1142, %v1080
    %v1144 = vpop.permute.xlu0 %1143
    %1145 = vset.pattern.permute.xlu0 3
    %1146 = vperm.xlu0 %1145, %v1081
    %v1147 = vpop.permute.xlu0 %1146
    %1148 = vset.pattern.permute.xlu0 3
    %1149 = vperm.xlu0 %1148, %v1082
    %v1150 = vpop.permute.xlu0 %1149
    %1151 = vset.pattern.permute.xlu0 3
    %1152 = vperm.xlu0 %1151, %v1083
    %v1153 = vpop.permute.xlu0 %1152
    %1154 = vset.pattern.permute.xlu0 3
    %1155 = vperm.xlu0 %1154, %v1084
    %v1156 = vpop.permute.xlu0 %1155
    %1157 = vset.pattern.permute.xlu0 3
    %1158 = vperm.xlu0 %1157, %v1085
    %v1159 = vpop.permute.xlu0 %1158
    %1160 = vset.pattern.permute.xlu0 3
    %1161 = vperm.xlu0 %1160, %v1086
    %v1162 = vpop.permute.xlu0 %1161
    %1163 = vset.pattern.permute.xlu0 3
    %1164 = vperm.xlu0 %1163, %v1087
    %v1165 = vpop.permute.xlu0 %1164
    %1166 = vset.pattern.permute.xlu0 3
    %1167 = vperm.xlu0 %1166, %v1088
    %v1168 = vpop.permute.xlu0 %1167
    %1169 = vset.pattern.permute.xlu0 3
    %1170 = vperm.xlu0 %1169, %v1089
    %v1171 = vpop.permute.xlu0 %1170
    %1172 = vset.pattern.permute.xlu0 3
    %1173 = vperm.xlu0 %1172, %v1090
    %v1174 = vpop.permute.xlu0 %1173
    %1175 = vset.pattern.permute.xlu0 3
    %1176 = vperm.xlu0 %1175, %v1091
    %v1177 = vpop.permute.xlu0 %1176
    %1178 = vset.pattern.permute.xlu0 3
    %1179 = vperm.xlu0 %1178, %v1092
    %v1180 = vpop.permute.xlu0 %1179
    %1181 = vset.pattern.permute.xlu0 3
    %1182 = vperm.xlu0 %1181, %v1093
    %v1183 = vpop.permute.xlu0 %1182
    %1184 = vset.pattern.permute.xlu0 3
    %1185 = vperm.xlu0 %1184, %v1094
    %v1186 = vpop.permute.xlu0 %1185
    %1187 = vset.pattern.permute.xlu0 3
    %1188 = vperm.xlu0 %1187, %v1095
    %v1189 = vpop.permute.xlu0 %1188
    %1190 = vset.pattern.permute.xlu0 3
    %1191 = vperm.xlu0 %1190, %v1096
    %v1192 = vpop.permute.xlu0 %1191
    %vm1193 = vcmp.eq.s32.totalorder %v69, %v1099
    %vm1194 = vcmp.eq.s32.totalorder %v70, %v1099
    %vm1195 = vcmp.eq.s32.totalorder %v71, %v1099
    %vm1196 = vcmp.eq.s32.totalorder %v72, %v1099
    %vm1197 = vcmp.eq.s32.totalorder %v69, %v1102
    %vm1198 = vcmp.eq.s32.totalorder %v70, %v1102
    %vm1199 = vcmp.eq.s32.totalorder %v71, %v1102
    %vm1200 = vcmp.eq.s32.totalorder %v72, %v1102
    %vm1201 = vcmp.eq.s32.totalorder %v69, %v1105
    %vm1202 = vcmp.eq.s32.totalorder %v70, %v1105
    %vm1203 = vcmp.eq.s32.totalorder %v71, %v1105
    %vm1204 = vcmp.eq.s32.totalorder %v72, %v1105
    %vm1205 = vcmp.eq.s32.totalorder %v69, %v1108
    %vm1206 = vcmp.eq.s32.totalorder %v70, %v1108
    %vm1207 = vcmp.eq.s32.totalorder %v71, %v1108
    %vm1208 = vcmp.eq.s32.totalorder %v72, %v1108
    %vm1209 = vcmp.eq.s32.totalorder %v69, %v1111
    %vm1210 = vcmp.eq.s32.totalorder %v70, %v1111
    %vm1211 = vcmp.eq.s32.totalorder %v71, %v1111
    %vm1212 = vcmp.eq.s32.totalorder %v72, %v1111
    %vm1213 = vcmp.eq.s32.totalorder %v69, %v1114
    %vm1214 = vcmp.eq.s32.totalorder %v70, %v1114
    %vm1215 = vcmp.eq.s32.totalorder %v71, %v1114
    %vm1216 = vcmp.eq.s32.totalorder %v72, %v1114
    %vm1217 = vcmp.eq.s32.totalorder %v69, %v1117
    %vm1218 = vcmp.eq.s32.totalorder %v70, %v1117
    %vm1219 = vcmp.eq.s32.totalorder %v71, %v1117
    %vm1220 = vcmp.eq.s32.totalorder %v72, %v1117
    %vm1221 = vcmp.eq.s32.totalorder %v69, %v1120
    %vm1222 = vcmp.eq.s32.totalorder %v70, %v1120
    %vm1223 = vcmp.eq.s32.totalorder %v71, %v1120
    %vm1224 = vcmp.eq.s32.totalorder %v72, %v1120
    %vm1225 = vcmp.eq.s32.totalorder %v69, %v1123
    %vm1226 = vcmp.eq.s32.totalorder %v70, %v1123
    %vm1227 = vcmp.eq.s32.totalorder %v71, %v1123
    %vm1228 = vcmp.eq.s32.totalorder %v72, %v1123
    %vm1229 = vcmp.eq.s32.totalorder %v69, %v1126
    %vm1230 = vcmp.eq.s32.totalorder %v70, %v1126
    %vm1231 = vcmp.eq.s32.totalorder %v71, %v1126
    %vm1232 = vcmp.eq.s32.totalorder %v72, %v1126
    %vm1233 = vcmp.eq.s32.totalorder %v69, %v1129
    %vm1234 = vcmp.eq.s32.totalorder %v70, %v1129
    %vm1235 = vcmp.eq.s32.totalorder %v71, %v1129
    %vm1236 = vcmp.eq.s32.totalorder %v72, %v1129
    %vm1237 = vcmp.eq.s32.totalorder %v69, %v1132
    %vm1238 = vcmp.eq.s32.totalorder %v70, %v1132
    %vm1239 = vcmp.eq.s32.totalorder %v71, %v1132
    %vm1240 = vcmp.eq.s32.totalorder %v72, %v1132
    %vm1241 = vcmp.eq.s32.totalorder %v69, %v1135
    %vm1242 = vcmp.eq.s32.totalorder %v70, %v1135
    %vm1243 = vcmp.eq.s32.totalorder %v71, %v1135
    %vm1244 = vcmp.eq.s32.totalorder %v72, %v1135
    %vm1245 = vcmp.eq.s32.totalorder %v69, %v1138
    %vm1246 = vcmp.eq.s32.totalorder %v70, %v1138
    %vm1247 = vcmp.eq.s32.totalorder %v71, %v1138
    %vm1248 = vcmp.eq.s32.totalorder %v72, %v1138
    %vm1249 = vcmp.eq.s32.totalorder %v69, %v1141
    %vm1250 = vcmp.eq.s32.totalorder %v70, %v1141
    %vm1251 = vcmp.eq.s32.totalorder %v71, %v1141
    %vm1252 = vcmp.eq.s32.totalorder %v72, %v1141
    %vm1253 = vcmp.eq.s32.totalorder %v69, %v1144
    %vm1254 = vcmp.eq.s32.totalorder %v70, %v1144
    %vm1255 = vcmp.eq.s32.totalorder %v71, %v1144
    %vm1256 = vcmp.eq.s32.totalorder %v72, %v1144
    %vm1257 = vcmp.eq.s32.totalorder %v69, %v1147
    %vm1258 = vcmp.eq.s32.totalorder %v70, %v1147
    %vm1259 = vcmp.eq.s32.totalorder %v71, %v1147
    %vm1260 = vcmp.eq.s32.totalorder %v72, %v1147
    %vm1261 = vcmp.eq.s32.totalorder %v69, %v1150
    %vm1262 = vcmp.eq.s32.totalorder %v70, %v1150
    %vm1263 = vcmp.eq.s32.totalorder %v71, %v1150
    %vm1264 = vcmp.eq.s32.totalorder %v72, %v1150
    %vm1265 = vcmp.eq.s32.totalorder %v69, %v1153
    %vm1266 = vcmp.eq.s32.totalorder %v70, %v1153
    %vm1267 = vcmp.eq.s32.totalorder %v71, %v1153
    %vm1268 = vcmp.eq.s32.totalorder %v72, %v1153
    %vm1269 = vcmp.eq.s32.totalorder %v69, %v1156
    %vm1270 = vcmp.eq.s32.totalorder %v70, %v1156
    %vm1271 = vcmp.eq.s32.totalorder %v71, %v1156
    %vm1272 = vcmp.eq.s32.totalorder %v72, %v1156
    %vm1273 = vcmp.eq.s32.totalorder %v69, %v1159
    %vm1274 = vcmp.eq.s32.totalorder %v70, %v1159
    %vm1275 = vcmp.eq.s32.totalorder %v71, %v1159
    %vm1276 = vcmp.eq.s32.totalorder %v72, %v1159
    %vm1277 = vcmp.eq.s32.totalorder %v69, %v1162
    %vm1278 = vcmp.eq.s32.totalorder %v70, %v1162
    %vm1279 = vcmp.eq.s32.totalorder %v71, %v1162
    %vm1280 = vcmp.eq.s32.totalorder %v72, %v1162
    %vm1281 = vcmp.eq.s32.totalorder %v69, %v1165
    %vm1282 = vcmp.eq.s32.totalorder %v70, %v1165
    %vm1283 = vcmp.eq.s32.totalorder %v71, %v1165
    %vm1284 = vcmp.eq.s32.totalorder %v72, %v1165
    %vm1285 = vcmp.eq.s32.totalorder %v69, %v1168
    %vm1286 = vcmp.eq.s32.totalorder %v70, %v1168
    %vm1287 = vcmp.eq.s32.totalorder %v71, %v1168
    %vm1288 = vcmp.eq.s32.totalorder %v72, %v1168
    %vm1289 = vcmp.eq.s32.totalorder %v69, %v1171
    %vm1290 = vcmp.eq.s32.totalorder %v70, %v1171
    %vm1291 = vcmp.eq.s32.totalorder %v71, %v1171
    %vm1292 = vcmp.eq.s32.totalorder %v72, %v1171
    %vm1293 = vcmp.eq.s32.totalorder %v69, %v1174
    %vm1294 = vcmp.eq.s32.totalorder %v70, %v1174
    %vm1295 = vcmp.eq.s32.totalorder %v71, %v1174
    %vm1296 = vcmp.eq.s32.totalorder %v72, %v1174
    %vm1297 = vcmp.eq.s32.totalorder %v69, %v1177
    %vm1298 = vcmp.eq.s32.totalorder %v70, %v1177
    %vm1299 = vcmp.eq.s32.totalorder %v71, %v1177
    %vm1300 = vcmp.eq.s32.totalorder %v72, %v1177
    %vm1301 = vcmp.eq.s32.totalorder %v69, %v1180
    %vm1302 = vcmp.eq.s32.totalorder %v70, %v1180
    %vm1303 = vcmp.eq.s32.totalorder %v71, %v1180
    %vm1304 = vcmp.eq.s32.totalorder %v72, %v1180
    %vm1305 = vcmp.eq.s32.totalorder %v69, %v1183
    %vm1306 = vcmp.eq.s32.totalorder %v70, %v1183
    %vm1307 = vcmp.eq.s32.totalorder %v71, %v1183
    %vm1308 = vcmp.eq.s32.totalorder %v72, %v1183
    %vm1309 = vcmp.eq.s32.totalorder %v69, %v1186
    %vm1310 = vcmp.eq.s32.totalorder %v70, %v1186
    %vm1311 = vcmp.eq.s32.totalorder %v71, %v1186
    %vm1312 = vcmp.eq.s32.totalorder %v72, %v1186
    %vm1313 = vcmp.eq.s32.totalorder %v69, %v1189
    %vm1314 = vcmp.eq.s32.totalorder %v70, %v1189
    %vm1315 = vcmp.eq.s32.totalorder %v71, %v1189
    %vm1316 = vcmp.eq.s32.totalorder %v72, %v1189
    %vm1317 = vcmp.eq.s32.totalorder %v69, %v1192
    %vm1318 = vcmp.eq.s32.totalorder %v70, %v1192
    %vm1319 = vcmp.eq.s32.totalorder %v71, %v1192
    %vm1320 = vcmp.eq.s32.totalorder %v72, %v1192
    %vm1321 = vmor %vm937, %vm1193
    %vm1322 = vmor %vm938, %vm1194
    %vm1323 = vmor %vm939, %vm1195
    %vm1324 = vmor %vm940, %vm1196
    %vm1325 = vmor %vm941, %vm1197
    %vm1326 = vmor %vm942, %vm1198
    %vm1327 = vmor %vm943, %vm1199
    %vm1328 = vmor %vm944, %vm1200
    %vm1329 = vmor %vm945, %vm1201
    %vm1330 = vmor %vm946, %vm1202
    %vm1331 = vmor %vm947, %vm1203
    %vm1332 = vmor %vm948, %vm1204
    %vm1333 = vmor %vm949, %vm1205
    %vm1334 = vmor %vm950, %vm1206
    %vm1335 = vmor %vm951, %vm1207
    %vm1336 = vmor %vm952, %vm1208
    %vm1337 = vmor %vm953, %vm1209
    %vm1338 = vmor %vm954, %vm1210
    %vm1339 = vmor %vm955, %vm1211
    %vm1340 = vmor %vm956, %vm1212
    %vm1341 = vmor %vm957, %vm1213
    %vm1342 = vmor %vm958, %vm1214
    %vm1343 = vmor %vm959, %vm1215
    %vm1344 = vmor %vm960, %vm1216
    %vm1345 = vmor %vm961, %vm1217
    %vm1346 = vmor %vm962, %vm1218
    %vm1347 = vmor %vm963, %vm1219
    %vm1348 = vmor %vm964, %vm1220
    %vm1349 = vmor %vm965, %vm1221
    %vm1350 = vmor %vm966, %vm1222
    %vm1351 = vmor %vm967, %vm1223
    %vm1352 = vmor %vm968, %vm1224
    %vm1353 = vmor %vm969, %vm1225
    %vm1354 = vmor %vm970, %vm1226
    %vm1355 = vmor %vm971, %vm1227
    %vm1356 = vmor %vm972, %vm1228
    %vm1357 = vmor %vm973, %vm1229
    %vm1358 = vmor %vm974, %vm1230
    %vm1359 = vmor %vm975, %vm1231
    %vm1360 = vmor %vm976, %vm1232
    %vm1361 = vmor %vm977, %vm1233
    %vm1362 = vmor %vm978, %vm1234
    %vm1363 = vmor %vm979, %vm1235
    %vm1364 = vmor %vm980, %vm1236
    %vm1365 = vmor %vm981, %vm1237
    %vm1366 = vmor %vm982, %vm1238
    %vm1367 = vmor %vm983, %vm1239
    %vm1368 = vmor %vm984, %vm1240
    %vm1369 = vmor %vm985, %vm1241
    %vm1370 = vmor %vm986, %vm1242
    %vm1371 = vmor %vm987, %vm1243
    %vm1372 = vmor %vm988, %vm1244
    %vm1373 = vmor %vm989, %vm1245
    %vm1374 = vmor %vm990, %vm1246
    %vm1375 = vmor %vm991, %vm1247
    %vm1376 = vmor %vm992, %vm1248
    %vm1377 = vmor %vm993, %vm1249
    %vm1378 = vmor %vm994, %vm1250
    %vm1379 = vmor %vm995, %vm1251
    %vm1380 = vmor %vm996, %vm1252
    %vm1381 = vmor %vm997, %vm1253
    %vm1382 = vmor %vm998, %vm1254
    %vm1383 = vmor %vm999, %vm1255
    %vm1384 = vmor %vm1000, %vm1256
    %vm1385 = vmor %vm1001, %vm1257
    %vm1386 = vmor %vm1002, %vm1258
    %vm1387 = vmor %vm1003, %vm1259
    %vm1388 = vmor %vm1004, %vm1260
    %vm1389 = vmor %vm1005, %vm1261
    %vm1390 = vmor %vm1006, %vm1262
    %vm1391 = vmor %vm1007, %vm1263
    %vm1392 = vmor %vm1008, %vm1264
    %vm1393 = vmor %vm1009, %vm1265
    %vm1394 = vmor %vm1010, %vm1266
    %vm1395 = vmor %vm1011, %vm1267
    %vm1396 = vmor %vm1012, %vm1268
    %vm1397 = vmor %vm1013, %vm1269
    %vm1398 = vmor %vm1014, %vm1270
    %vm1399 = vmor %vm1015, %vm1271
    %vm1400 = vmor %vm1016, %vm1272
    %vm1401 = vmor %vm1017, %vm1273
    %vm1402 = vmor %vm1018, %vm1274
    %vm1403 = vmor %vm1019, %vm1275
    %vm1404 = vmor %vm1020, %vm1276
    %vm1405 = vmor %vm1021, %vm1277
    %vm1406 = vmor %vm1022, %vm1278
    %vm1407 = vmor %vm1023, %vm1279
    %vm1408 = vmor %vm1024, %vm1280
    %vm1409 = vmor %vm1025, %vm1281
    %vm1410 = vmor %vm1026, %vm1282
    %vm1411 = vmor %vm1027, %vm1283
    %vm1412 = vmor %vm1028, %vm1284
    %vm1413 = vmor %vm1029, %vm1285
    %vm1414 = vmor %vm1030, %vm1286
    %vm1415 = vmor %vm1031, %vm1287
    %vm1416 = vmor %vm1032, %vm1288
    %vm1417 = vmor %vm1033, %vm1289
    %vm1418 = vmor %vm1034, %vm1290
    %vm1419 = vmor %vm1035, %vm1291
    %vm1420 = vmor %vm1036, %vm1292
    %vm1421 = vmor %vm1037, %vm1293
    %vm1422 = vmor %vm1038, %vm1294
    %vm1423 = vmor %vm1039, %vm1295
    %vm1424 = vmor %vm1040, %vm1296
    %vm1425 = vmor %vm1041, %vm1297
    %vm1426 = vmor %vm1042, %vm1298
    %vm1427 = vmor %vm1043, %vm1299
    %vm1428 = vmor %vm1044, %vm1300
    %vm1429 = vmor %vm1045, %vm1301
    %vm1430 = vmor %vm1046, %vm1302
    %vm1431 = vmor %vm1047, %vm1303
    %vm1432 = vmor %vm1048, %vm1304
    %vm1433 = vmor %vm1049, %vm1305
    %vm1434 = vmor %vm1050, %vm1306
    %vm1435 = vmor %vm1051, %vm1307
    %vm1436 = vmor %vm1052, %vm1308
    %vm1437 = vmor %vm1053, %vm1309
    %vm1438 = vmor %vm1054, %vm1310
    %vm1439 = vmor %vm1055, %vm1311
    %vm1440 = vmor %vm1056, %vm1312
    %vm1441 = vmor %vm1057, %vm1313
    %vm1442 = vmor %vm1058, %vm1314
    %vm1443 = vmor %vm1059, %vm1315
    %vm1444 = vmor %vm1060, %vm1316
    %vm1445 = vmor %vm1061, %vm1317
    %vm1446 = vmor %vm1062, %vm1318
    %vm1447 = vmor %vm1063, %vm1319
    %vm1448 = vmor %vm1064, %vm1320
    %v1449 = vadd.s32 %v36, 256
    %v1450 = vadd.s32 %v37, 256
    %v1451 = vadd.s32 %v38, 256
    %v1452 = vadd.s32 %v39, 256
    %v1453 = vadd.s32 %v40, 256
    %v1454 = vadd.s32 %v41, 256
    %v1455 = vadd.s32 %v42, 256
    %v1456 = vadd.s32 %v43, 256
    %v1457 = vadd.s32 %v44, 256
    %v1458 = vadd.s32 %v45, 256
    %v1459 = vadd.s32 %v46, 256
    %v1460 = vadd.s32 %v47, 256
    %v1461 = vadd.s32 %v48, 256
    %v1462 = vadd.s32 %v49, 256
    %v1463 = vadd.s32 %v50, 256
    %v1464 = vadd.s32 %v51, 256
    %v1465 = vadd.s32 %v52, 256
    %v1466 = vadd.s32 %v53, 256
    %v1467 = vadd.s32 %v54, 256
    %v1468 = vadd.s32 %v55, 256
    %v1469 = vadd.s32 %v56, 256
    %v1470 = vadd.s32 %v57, 256
    %v1471 = vadd.s32 %v58, 256
    %v1472 = vadd.s32 %v59, 256
    %v1473 = vadd.s32 %v60, 256
    %v1474 = vadd.s32 %v61, 256
    %v1475 = vadd.s32 %v62, 256
    %v1476 = vadd.s32 %v63, 256
    %v1477 = vadd.s32 %v64, 256
    %v1478 = vadd.s32 %v65, 256
    %v1479 = vadd.s32 %v66, 256
    %v1480 = vadd.s32 %v67, 256
    %1481 = vset.pattern.permute.xlu0 4
    %1482 = vperm.xlu0 %1481, %v1449
    %v1483 = vpop.permute.xlu0 %1482
    %1484 = vset.pattern.permute.xlu0 4
    %1485 = vperm.xlu0 %1484, %v1450
    %v1486 = vpop.permute.xlu0 %1485
    %1487 = vset.pattern.permute.xlu0 4
    %1488 = vperm.xlu0 %1487, %v1451
    %v1489 = vpop.permute.xlu0 %1488
    %1490 = vset.pattern.permute.xlu0 4
    %1491 = vperm.xlu0 %1490, %v1452
    %v1492 = vpop.permute.xlu0 %1491
    %1493 = vset.pattern.permute.xlu0 4
    %1494 = vperm.xlu0 %1493, %v1453
    %v1495 = vpop.permute.xlu0 %1494
    %1496 = vset.pattern.permute.xlu0 4
    %1497 = vperm.xlu0 %1496, %v1454
    %v1498 = vpop.permute.xlu0 %1497
    %1499 = vset.pattern.permute.xlu0 4
    %1500 = vperm.xlu0 %1499, %v1455
    %v1501 = vpop.permute.xlu0 %1500
    %1502 = vset.pattern.permute.xlu0 4
    %1503 = vperm.xlu0 %1502, %v1456
    %v1504 = vpop.permute.xlu0 %1503
    %1505 = vset.pattern.permute.xlu0 4
    %1506 = vperm.xlu0 %1505, %v1457
    %v1507 = vpop.permute.xlu0 %1506
    %1508 = vset.pattern.permute.xlu0 4
    %1509 = vperm.xlu0 %1508, %v1458
    %v1510 = vpop.permute.xlu0 %1509
    %1511 = vset.pattern.permute.xlu0 4
    %1512 = vperm.xlu0 %1511, %v1459
    %v1513 = vpop.permute.xlu0 %1512
    %1514 = vset.pattern.permute.xlu0 4
    %1515 = vperm.xlu0 %1514, %v1460
    %v1516 = vpop.permute.xlu0 %1515
    %1517 = vset.pattern.permute.xlu0 4
    %1518 = vperm.xlu0 %1517, %v1461
    %v1519 = vpop.permute.xlu0 %1518
    %1520 = vset.pattern.permute.xlu0 4
    %1521 = vperm.xlu0 %1520, %v1462
    %v1522 = vpop.permute.xlu0 %1521
    %1523 = vset.pattern.permute.xlu0 4
    %1524 = vperm.xlu0 %1523, %v1463
    %v1525 = vpop.permute.xlu0 %1524
    %1526 = vset.pattern.permute.xlu0 4
    %1527 = vperm.xlu0 %1526, %v1464
    %v1528 = vpop.permute.xlu0 %1527
    %1529 = vset.pattern.permute.xlu0 4
    %1530 = vperm.xlu0 %1529, %v1465
    %v1531 = vpop.permute.xlu0 %1530
    %1532 = vset.pattern.permute.xlu0 4
    %1533 = vperm.xlu0 %1532, %v1466
    %v1534 = vpop.permute.xlu0 %1533
    %1535 = vset.pattern.permute.xlu0 4
    %1536 = vperm.xlu0 %1535, %v1467
    %v1537 = vpop.permute.xlu0 %1536
    %1538 = vset.pattern.permute.xlu0 4
    %1539 = vperm.xlu0 %1538, %v1468
    %v1540 = vpop.permute.xlu0 %1539
    %1541 = vset.pattern.permute.xlu0 4
    %1542 = vperm.xlu0 %1541, %v1469
    %v1543 = vpop.permute.xlu0 %1542
    %1544 = vset.pattern.permute.xlu0 4
    %1545 = vperm.xlu0 %1544, %v1470
    %v1546 = vpop.permute.xlu0 %1545
    %1547 = vset.pattern.permute.xlu0 4
    %1548 = vperm.xlu0 %1547, %v1471
    %v1549 = vpop.permute.xlu0 %1548
    %1550 = vset.pattern.permute.xlu0 4
    %1551 = vperm.xlu0 %1550, %v1472
    %v1552 = vpop.permute.xlu0 %1551
    %1553 = vset.pattern.permute.xlu0 4
    %1554 = vperm.xlu0 %1553, %v1473
    %v1555 = vpop.permute.xlu0 %1554
    %1556 = vset.pattern.permute.xlu0 4
    %1557 = vperm.xlu0 %1556, %v1474
    %v1558 = vpop.permute.xlu0 %1557
    %1559 = vset.pattern.permute.xlu0 4
    %1560 = vperm.xlu0 %1559, %v1475
    %v1561 = vpop.permute.xlu0 %1560
    %1562 = vset.pattern.permute.xlu0 4
    %1563 = vperm.xlu0 %1562, %v1476
    %v1564 = vpop.permute.xlu0 %1563
    %1565 = vset.pattern.permute.xlu0 4
    %1566 = vperm.xlu0 %1565, %v1477
    %v1567 = vpop.permute.xlu0 %1566
    %1568 = vset.pattern.permute.xlu0 4
    %1569 = vperm.xlu0 %1568, %v1478
    %v1570 = vpop.permute.xlu0 %1569
    %1571 = vset.pattern.permute.xlu0 4
    %1572 = vperm.xlu0 %1571, %v1479
    %v1573 = vpop.permute.xlu0 %1572
    %1574 = vset.pattern.permute.xlu0 4
    %1575 = vperm.xlu0 %1574, %v1480
    %v1576 = vpop.permute.xlu0 %1575
    %vm1577 = vcmp.eq.s32.totalorder %v69, %v1483
    %vm1578 = vcmp.eq.s32.totalorder %v70, %v1483
    %vm1579 = vcmp.eq.s32.totalorder %v71, %v1483
    %vm1580 = vcmp.eq.s32.totalorder %v72, %v1483
    %vm1581 = vcmp.eq.s32.totalorder %v69, %v1486
    %vm1582 = vcmp.eq.s32.totalorder %v70, %v1486
    %vm1583 = vcmp.eq.s32.totalorder %v71, %v1486
    %vm1584 = vcmp.eq.s32.totalorder %v72, %v1486
    %vm1585 = vcmp.eq.s32.totalorder %v69, %v1489
    %vm1586 = vcmp.eq.s32.totalorder %v70, %v1489
    %vm1587 = vcmp.eq.s32.totalorder %v71, %v1489
    %vm1588 = vcmp.eq.s32.totalorder %v72, %v1489
    %vm1589 = vcmp.eq.s32.totalorder %v69, %v1492
    %vm1590 = vcmp.eq.s32.totalorder %v70, %v1492
    %vm1591 = vcmp.eq.s32.totalorder %v71, %v1492
    %vm1592 = vcmp.eq.s32.totalorder %v72, %v1492
    %vm1593 = vcmp.eq.s32.totalorder %v69, %v1495
    %vm1594 = vcmp.eq.s32.totalorder %v70, %v1495
    %vm1595 = vcmp.eq.s32.totalorder %v71, %v1495
    %vm1596 = vcmp.eq.s32.totalorder %v72, %v1495
    %vm1597 = vcmp.eq.s32.totalorder %v69, %v1498
    %vm1598 = vcmp.eq.s32.totalorder %v70, %v1498
    %vm1599 = vcmp.eq.s32.totalorder %v71, %v1498
    %vm1600 = vcmp.eq.s32.totalorder %v72, %v1498
    %vm1601 = vcmp.eq.s32.totalorder %v69, %v1501
    %vm1602 = vcmp.eq.s32.totalorder %v70, %v1501
    %vm1603 = vcmp.eq.s32.totalorder %v71, %v1501
    %vm1604 = vcmp.eq.s32.totalorder %v72, %v1501
    %vm1605 = vcmp.eq.s32.totalorder %v69, %v1504
    %vm1606 = vcmp.eq.s32.totalorder %v70, %v1504
    %vm1607 = vcmp.eq.s32.totalorder %v71, %v1504
    %vm1608 = vcmp.eq.s32.totalorder %v72, %v1504
    %vm1609 = vcmp.eq.s32.totalorder %v69, %v1507
    %vm1610 = vcmp.eq.s32.totalorder %v70, %v1507
    %vm1611 = vcmp.eq.s32.totalorder %v71, %v1507
    %vm1612 = vcmp.eq.s32.totalorder %v72, %v1507
    %vm1613 = vcmp.eq.s32.totalorder %v69, %v1510
    %vm1614 = vcmp.eq.s32.totalorder %v70, %v1510
    %vm1615 = vcmp.eq.s32.totalorder %v71, %v1510
    %vm1616 = vcmp.eq.s32.totalorder %v72, %v1510
    %vm1617 = vcmp.eq.s32.totalorder %v69, %v1513
    %vm1618 = vcmp.eq.s32.totalorder %v70, %v1513
    %vm1619 = vcmp.eq.s32.totalorder %v71, %v1513
    %vm1620 = vcmp.eq.s32.totalorder %v72, %v1513
    %vm1621 = vcmp.eq.s32.totalorder %v69, %v1516
    %vm1622 = vcmp.eq.s32.totalorder %v70, %v1516
    %vm1623 = vcmp.eq.s32.totalorder %v71, %v1516
    %vm1624 = vcmp.eq.s32.totalorder %v72, %v1516
    %vm1625 = vcmp.eq.s32.totalorder %v69, %v1519
    %vm1626 = vcmp.eq.s32.totalorder %v70, %v1519
    %vm1627 = vcmp.eq.s32.totalorder %v71, %v1519
    %vm1628 = vcmp.eq.s32.totalorder %v72, %v1519
    %vm1629 = vcmp.eq.s32.totalorder %v69, %v1522
    %vm1630 = vcmp.eq.s32.totalorder %v70, %v1522
    %vm1631 = vcmp.eq.s32.totalorder %v71, %v1522
    %vm1632 = vcmp.eq.s32.totalorder %v72, %v1522
    %vm1633 = vcmp.eq.s32.totalorder %v69, %v1525
    %vm1634 = vcmp.eq.s32.totalorder %v70, %v1525
    %vm1635 = vcmp.eq.s32.totalorder %v71, %v1525
    %vm1636 = vcmp.eq.s32.totalorder %v72, %v1525
    %vm1637 = vcmp.eq.s32.totalorder %v69, %v1528
    %vm1638 = vcmp.eq.s32.totalorder %v70, %v1528
    %vm1639 = vcmp.eq.s32.totalorder %v71, %v1528
    %vm1640 = vcmp.eq.s32.totalorder %v72, %v1528
    %vm1641 = vcmp.eq.s32.totalorder %v69, %v1531
    %vm1642 = vcmp.eq.s32.totalorder %v70, %v1531
    %vm1643 = vcmp.eq.s32.totalorder %v71, %v1531
    %vm1644 = vcmp.eq.s32.totalorder %v72, %v1531
    %vm1645 = vcmp.eq.s32.totalorder %v69, %v1534
    %vm1646 = vcmp.eq.s32.totalorder %v70, %v1534
    %vm1647 = vcmp.eq.s32.totalorder %v71, %v1534
    %vm1648 = vcmp.eq.s32.totalorder %v72, %v1534
    %vm1649 = vcmp.eq.s32.totalorder %v69, %v1537
    %vm1650 = vcmp.eq.s32.totalorder %v70, %v1537
    %vm1651 = vcmp.eq.s32.totalorder %v71, %v1537
    %vm1652 = vcmp.eq.s32.totalorder %v72, %v1537
    %vm1653 = vcmp.eq.s32.totalorder %v69, %v1540
    %vm1654 = vcmp.eq.s32.totalorder %v70, %v1540
    %vm1655 = vcmp.eq.s32.totalorder %v71, %v1540
    %vm1656 = vcmp.eq.s32.totalorder %v72, %v1540
    %vm1657 = vcmp.eq.s32.totalorder %v69, %v1543
    %vm1658 = vcmp.eq.s32.totalorder %v70, %v1543
    %vm1659 = vcmp.eq.s32.totalorder %v71, %v1543
    %vm1660 = vcmp.eq.s32.totalorder %v72, %v1543
    %vm1661 = vcmp.eq.s32.totalorder %v69, %v1546
    %vm1662 = vcmp.eq.s32.totalorder %v70, %v1546
    %vm1663 = vcmp.eq.s32.totalorder %v71, %v1546
    %vm1664 = vcmp.eq.s32.totalorder %v72, %v1546
    %vm1665 = vcmp.eq.s32.totalorder %v69, %v1549
    %vm1666 = vcmp.eq.s32.totalorder %v70, %v1549
    %vm1667 = vcmp.eq.s32.totalorder %v71, %v1549
    %vm1668 = vcmp.eq.s32.totalorder %v72, %v1549
    %vm1669 = vcmp.eq.s32.totalorder %v69, %v1552
    %vm1670 = vcmp.eq.s32.totalorder %v70, %v1552
    %vm1671 = vcmp.eq.s32.totalorder %v71, %v1552
    %vm1672 = vcmp.eq.s32.totalorder %v72, %v1552
    %vm1673 = vcmp.eq.s32.totalorder %v69, %v1555
    %vm1674 = vcmp.eq.s32.totalorder %v70, %v1555
    %vm1675 = vcmp.eq.s32.totalorder %v71, %v1555
    %vm1676 = vcmp.eq.s32.totalorder %v72, %v1555
    %vm1677 = vcmp.eq.s32.totalorder %v69, %v1558
    %vm1678 = vcmp.eq.s32.totalorder %v70, %v1558
    %vm1679 = vcmp.eq.s32.totalorder %v71, %v1558
    %vm1680 = vcmp.eq.s32.totalorder %v72, %v1558
    %vm1681 = vcmp.eq.s32.totalorder %v69, %v1561
    %vm1682 = vcmp.eq.s32.totalorder %v70, %v1561
    %vm1683 = vcmp.eq.s32.totalorder %v71, %v1561
    %vm1684 = vcmp.eq.s32.totalorder %v72, %v1561
    %vm1685 = vcmp.eq.s32.totalorder %v69, %v1564
    %vm1686 = vcmp.eq.s32.totalorder %v70, %v1564
    %vm1687 = vcmp.eq.s32.totalorder %v71, %v1564
    %vm1688 = vcmp.eq.s32.totalorder %v72, %v1564
    %vm1689 = vcmp.eq.s32.totalorder %v69, %v1567
    %vm1690 = vcmp.eq.s32.totalorder %v70, %v1567
    %vm1691 = vcmp.eq.s32.totalorder %v71, %v1567
    %vm1692 = vcmp.eq.s32.totalorder %v72, %v1567
    %vm1693 = vcmp.eq.s32.totalorder %v69, %v1570
    %vm1694 = vcmp.eq.s32.totalorder %v70, %v1570
    %vm1695 = vcmp.eq.s32.totalorder %v71, %v1570
    %vm1696 = vcmp.eq.s32.totalorder %v72, %v1570
    %vm1697 = vcmp.eq.s32.totalorder %v69, %v1573
    %vm1698 = vcmp.eq.s32.totalorder %v70, %v1573
    %vm1699 = vcmp.eq.s32.totalorder %v71, %v1573
    %vm1700 = vcmp.eq.s32.totalorder %v72, %v1573
    %vm1701 = vcmp.eq.s32.totalorder %v69, %v1576
    %vm1702 = vcmp.eq.s32.totalorder %v70, %v1576
    %vm1703 = vcmp.eq.s32.totalorder %v71, %v1576
    %vm1704 = vcmp.eq.s32.totalorder %v72, %v1576
    %vm1705 = vmor %vm1321, %vm1577
    %vm1706 = vmor %vm1322, %vm1578
    %vm1707 = vmor %vm1323, %vm1579
    %vm1708 = vmor %vm1324, %vm1580
    %vm1709 = vmor %vm1325, %vm1581
    %vm1710 = vmor %vm1326, %vm1582
    %vm1711 = vmor %vm1327, %vm1583
    %vm1712 = vmor %vm1328, %vm1584
    %vm1713 = vmor %vm1329, %vm1585
    %vm1714 = vmor %vm1330, %vm1586
    %vm1715 = vmor %vm1331, %vm1587
    %vm1716 = vmor %vm1332, %vm1588
    %vm1717 = vmor %vm1333, %vm1589
    %vm1718 = vmor %vm1334, %vm1590
    %vm1719 = vmor %vm1335, %vm1591
    %vm1720 = vmor %vm1336, %vm1592
    %vm1721 = vmor %vm1337, %vm1593
    %vm1722 = vmor %vm1338, %vm1594
    %vm1723 = vmor %vm1339, %vm1595
    %vm1724 = vmor %vm1340, %vm1596
    %vm1725 = vmor %vm1341, %vm1597
    %vm1726 = vmor %vm1342, %vm1598
    %vm1727 = vmor %vm1343, %vm1599
    %vm1728 = vmor %vm1344, %vm1600
    %vm1729 = vmor %vm1345, %vm1601
    %vm1730 = vmor %vm1346, %vm1602
    %vm1731 = vmor %vm1347, %vm1603
    %vm1732 = vmor %vm1348, %vm1604
    %vm1733 = vmor %vm1349, %vm1605
    %vm1734 = vmor %vm1350, %vm1606
    %vm1735 = vmor %vm1351, %vm1607
    %vm1736 = vmor %vm1352, %vm1608
    %vm1737 = vmor %vm1353, %vm1609
    %vm1738 = vmor %vm1354, %vm1610
    %vm1739 = vmor %vm1355, %vm1611
    %vm1740 = vmor %vm1356, %vm1612
    %vm1741 = vmor %vm1357, %vm1613
    %vm1742 = vmor %vm1358, %vm1614
    %vm1743 = vmor %vm1359, %vm1615
    %vm1744 = vmor %vm1360, %vm1616
    %vm1745 = vmor %vm1361, %vm1617
    %vm1746 = vmor %vm1362, %vm1618
    %vm1747 = vmor %vm1363, %vm1619
    %vm1748 = vmor %vm1364, %vm1620
    %vm1749 = vmor %vm1365, %vm1621
    %vm1750 = vmor %vm1366, %vm1622
    %vm1751 = vmor %vm1367, %vm1623
    %vm1752 = vmor %vm1368, %vm1624
    %vm1753 = vmor %vm1369, %vm1625
    %vm1754 = vmor %vm1370, %vm1626
    %vm1755 = vmor %vm1371, %vm1627
    %vm1756 = vmor %vm1372, %vm1628
    %vm1757 = vmor %vm1373, %vm1629
    %vm1758 = vmor %vm1374, %vm1630
    %vm1759 = vmor %vm1375, %vm1631
    %vm1760 = vmor %vm1376, %vm1632
    %vm1761 = vmor %vm1377, %vm1633
    %vm1762 = vmor %vm1378, %vm1634
    %vm1763 = vmor %vm1379, %vm1635
    %vm1764 = vmor %vm1380, %vm1636
    %vm1765 = vmor %vm1381, %vm1637
    %vm1766 = vmor %vm1382, %vm1638
    %vm1767 = vmor %vm1383, %vm1639
    %vm1768 = vmor %vm1384, %vm1640
    %vm1769 = vmor %vm1385, %vm1641
    %vm1770 = vmor %vm1386, %vm1642
    %vm1771 = vmor %vm1387, %vm1643
    %vm1772 = vmor %vm1388, %vm1644
    %vm1773 = vmor %vm1389, %vm1645
    %vm1774 = vmor %vm1390, %vm1646
    %vm1775 = vmor %vm1391, %vm1647
    %vm1776 = vmor %vm1392, %vm1648
    %vm1777 = vmor %vm1393, %vm1649
    %vm1778 = vmor %vm1394, %vm1650
    %vm1779 = vmor %vm1395, %vm1651
    %vm1780 = vmor %vm1396, %vm1652
    %vm1781 = vmor %vm1397, %vm1653
    %vm1782 = vmor %vm1398, %vm1654
    %vm1783 = vmor %vm1399, %vm1655
    %vm1784 = vmor %vm1400, %vm1656
    %vm1785 = vmor %vm1401, %vm1657
    %vm1786 = vmor %vm1402, %vm1658
    %vm1787 = vmor %vm1403, %vm1659
    %vm1788 = vmor %vm1404, %vm1660
    %vm1789 = vmor %vm1405, %vm1661
    %vm1790 = vmor %vm1406, %vm1662
    %vm1791 = vmor %vm1407, %vm1663
    %vm1792 = vmor %vm1408, %vm1664
    %vm1793 = vmor %vm1409, %vm1665
    %vm1794 = vmor %vm1410, %vm1666
    %vm1795 = vmor %vm1411, %vm1667
    %vm1796 = vmor %vm1412, %vm1668
    %vm1797 = vmor %vm1413, %vm1669
    %vm1798 = vmor %vm1414, %vm1670
    %vm1799 = vmor %vm1415, %vm1671
    %vm1800 = vmor %vm1416, %vm1672
    %vm1801 = vmor %vm1417, %vm1673
    %vm1802 = vmor %vm1418, %vm1674
    %vm1803 = vmor %vm1419, %vm1675
    %vm1804 = vmor %vm1420, %vm1676
    %vm1805 = vmor %vm1421, %vm1677
    %vm1806 = vmor %vm1422, %vm1678
    %vm1807 = vmor %vm1423, %vm1679
    %vm1808 = vmor %vm1424, %vm1680
    %vm1809 = vmor %vm1425, %vm1681
    %vm1810 = vmor %vm1426, %vm1682
    %vm1811 = vmor %vm1427, %vm1683
    %vm1812 = vmor %vm1428, %vm1684
    %vm1813 = vmor %vm1429, %vm1685
    %vm1814 = vmor %vm1430, %vm1686
    %vm1815 = vmor %vm1431, %vm1687
    %vm1816 = vmor %vm1432, %vm1688
    %vm1817 = vmor %vm1433, %vm1689
    %vm1818 = vmor %vm1434, %vm1690
    %vm1819 = vmor %vm1435, %vm1691
    %vm1820 = vmor %vm1436, %vm1692
    %vm1821 = vmor %vm1437, %vm1693
    %vm1822 = vmor %vm1438, %vm1694
    %vm1823 = vmor %vm1439, %vm1695
    %vm1824 = vmor %vm1440, %vm1696
    %vm1825 = vmor %vm1441, %vm1697
    %vm1826 = vmor %vm1442, %vm1698
    %vm1827 = vmor %vm1443, %vm1699
    %vm1828 = vmor %vm1444, %vm1700
    %vm1829 = vmor %vm1445, %vm1701
    %vm1830 = vmor %vm1446, %vm1702
    %vm1831 = vmor %vm1447, %vm1703
    %vm1832 = vmor %vm1448, %vm1704
    %v1833 = vadd.s32 %v36, 320
    %v1834 = vadd.s32 %v37, 320
    %v1835 = vadd.s32 %v38, 320
    %v1836 = vadd.s32 %v39, 320
    %v1837 = vadd.s32 %v40, 320
    %v1838 = vadd.s32 %v41, 320
    %v1839 = vadd.s32 %v42, 320
    %v1840 = vadd.s32 %v43, 320
    %v1841 = vadd.s32 %v44, 320
    %v1842 = vadd.s32 %v45, 320
    %v1843 = vadd.s32 %v46, 320
    %v1844 = vadd.s32 %v47, 320
    %v1845 = vadd.s32 %v48, 320
    %v1846 = vadd.s32 %v49, 320
    %v1847 = vadd.s32 %v50, 320
    %v1848 = vadd.s32 %v51, 320
    %v1849 = vadd.s32 %v52, 320
    %v1850 = vadd.s32 %v53, 320
    %v1851 = vadd.s32 %v54, 320
    %v1852 = vadd.s32 %v55, 320
    %v1853 = vadd.s32 %v56, 320
    %v1854 = vadd.s32 %v57, 320
    %v1855 = vadd.s32 %v58, 320
    %v1856 = vadd.s32 %v59, 320
    %v1857 = vadd.s32 %v60, 320
    %v1858 = vadd.s32 %v61, 320
    %v1859 = vadd.s32 %v62, 320
    %v1860 = vadd.s32 %v63, 320
    %v1861 = vadd.s32 %v64, 320
    %v1862 = vadd.s32 %v65, 320
    %v1863 = vadd.s32 %v66, 320
    %v1864 = vadd.s32 %v67, 320
    %1865 = vset.pattern.permute.xlu0 5
    %1866 = vperm.xlu0 %1865, %v1833
    %v1867 = vpop.permute.xlu0 %1866
    %1868 = vset.pattern.permute.xlu0 5
    %1869 = vperm.xlu0 %1868, %v1834
    %v1870 = vpop.permute.xlu0 %1869
    %1871 = vset.pattern.permute.xlu0 5
    %1872 = vperm.xlu0 %1871, %v1835
    %v1873 = vpop.permute.xlu0 %1872
    %1874 = vset.pattern.permute.xlu0 5
    %1875 = vperm.xlu0 %1874, %v1836
    %v1876 = vpop.permute.xlu0 %1875
    %1877 = vset.pattern.permute.xlu0 5
    %1878 = vperm.xlu0 %1877, %v1837
    %v1879 = vpop.permute.xlu0 %1878
    %1880 = vset.pattern.permute.xlu0 5
    %1881 = vperm.xlu0 %1880, %v1838
    %v1882 = vpop.permute.xlu0 %1881
    %1883 = vset.pattern.permute.xlu0 5
    %1884 = vperm.xlu0 %1883, %v1839
    %v1885 = vpop.permute.xlu0 %1884
    %1886 = vset.pattern.permute.xlu0 5
    %1887 = vperm.xlu0 %1886, %v1840
    %v1888 = vpop.permute.xlu0 %1887
    %1889 = vset.pattern.permute.xlu0 5
    %1890 = vperm.xlu0 %1889, %v1841
    %v1891 = vpop.permute.xlu0 %1890
    %1892 = vset.pattern.permute.xlu0 5
    %1893 = vperm.xlu0 %1892, %v1842
    %v1894 = vpop.permute.xlu0 %1893
    %1895 = vset.pattern.permute.xlu0 5
    %1896 = vperm.xlu0 %1895, %v1843
    %v1897 = vpop.permute.xlu0 %1896
    %1898 = vset.pattern.permute.xlu0 5
    %1899 = vperm.xlu0 %1898, %v1844
    %v1900 = vpop.permute.xlu0 %1899
    %1901 = vset.pattern.permute.xlu0 5
    %1902 = vperm.xlu0 %1901, %v1845
    %v1903 = vpop.permute.xlu0 %1902
    %1904 = vset.pattern.permute.xlu0 5
    %1905 = vperm.xlu0 %1904, %v1846
    %v1906 = vpop.permute.xlu0 %1905
    %1907 = vset.pattern.permute.xlu0 5
    %1908 = vperm.xlu0 %1907, %v1847
    %v1909 = vpop.permute.xlu0 %1908
    %1910 = vset.pattern.permute.xlu0 5
    %1911 = vperm.xlu0 %1910, %v1848
    %v1912 = vpop.permute.xlu0 %1911
    %1913 = vset.pattern.permute.xlu0 5
    %1914 = vperm.xlu0 %1913, %v1849
    %v1915 = vpop.permute.xlu0 %1914
    %1916 = vset.pattern.permute.xlu0 5
    %1917 = vperm.xlu0 %1916, %v1850
    %v1918 = vpop.permute.xlu0 %1917
    %1919 = vset.pattern.permute.xlu0 5
    %1920 = vperm.xlu0 %1919, %v1851
    %v1921 = vpop.permute.xlu0 %1920
    %1922 = vset.pattern.permute.xlu0 5
    %1923 = vperm.xlu0 %1922, %v1852
    %v1924 = vpop.permute.xlu0 %1923
    %1925 = vset.pattern.permute.xlu0 5
    %1926 = vperm.xlu0 %1925, %v1853
    %v1927 = vpop.permute.xlu0 %1926
    %1928 = vset.pattern.permute.xlu0 5
    %1929 = vperm.xlu0 %1928, %v1854
    %v1930 = vpop.permute.xlu0 %1929
    %1931 = vset.pattern.permute.xlu0 5
    %1932 = vperm.xlu0 %1931, %v1855
    %v1933 = vpop.permute.xlu0 %1932
    %1934 = vset.pattern.permute.xlu0 5
    %1935 = vperm.xlu0 %1934, %v1856
    %v1936 = vpop.permute.xlu0 %1935
    %1937 = vset.pattern.permute.xlu0 5
    %1938 = vperm.xlu0 %1937, %v1857
    %v1939 = vpop.permute.xlu0 %1938
    %1940 = vset.pattern.permute.xlu0 5
    %1941 = vperm.xlu0 %1940, %v1858
    %v1942 = vpop.permute.xlu0 %1941
    %1943 = vset.pattern.permute.xlu0 5
    %1944 = vperm.xlu0 %1943, %v1859
    %v1945 = vpop.permute.xlu0 %1944
    %1946 = vset.pattern.permute.xlu0 5
    %1947 = vperm.xlu0 %1946, %v1860
    %v1948 = vpop.permute.xlu0 %1947
    %1949 = vset.pattern.permute.xlu0 5
    %1950 = vperm.xlu0 %1949, %v1861
    %v1951 = vpop.permute.xlu0 %1950
    %1952 = vset.pattern.permute.xlu0 5
    %1953 = vperm.xlu0 %1952, %v1862
    %v1954 = vpop.permute.xlu0 %1953
    %1955 = vset.pattern.permute.xlu0 5
    %1956 = vperm.xlu0 %1955, %v1863
    %v1957 = vpop.permute.xlu0 %1956
    %1958 = vset.pattern.permute.xlu0 5
    %1959 = vperm.xlu0 %1958, %v1864
    %v1960 = vpop.permute.xlu0 %1959
    %vm1961 = vcmp.eq.s32.totalorder %v69, %v1867
    %vm1962 = vcmp.eq.s32.totalorder %v70, %v1867
    %vm1963 = vcmp.eq.s32.totalorder %v71, %v1867
    %vm1964 = vcmp.eq.s32.totalorder %v72, %v1867
    %vm1965 = vcmp.eq.s32.totalorder %v69, %v1870
    %vm1966 = vcmp.eq.s32.totalorder %v70, %v1870
    %vm1967 = vcmp.eq.s32.totalorder %v71, %v1870
    %vm1968 = vcmp.eq.s32.totalorder %v72, %v1870
    %vm1969 = vcmp.eq.s32.totalorder %v69, %v1873
    %vm1970 = vcmp.eq.s32.totalorder %v70, %v1873
    %vm1971 = vcmp.eq.s32.totalorder %v71, %v1873
    %vm1972 = vcmp.eq.s32.totalorder %v72, %v1873
    %vm1973 = vcmp.eq.s32.totalorder %v69, %v1876
    %vm1974 = vcmp.eq.s32.totalorder %v70, %v1876
    %vm1975 = vcmp.eq.s32.totalorder %v71, %v1876
    %vm1976 = vcmp.eq.s32.totalorder %v72, %v1876
    %vm1977 = vcmp.eq.s32.totalorder %v69, %v1879
    %vm1978 = vcmp.eq.s32.totalorder %v70, %v1879
    %vm1979 = vcmp.eq.s32.totalorder %v71, %v1879
    %vm1980 = vcmp.eq.s32.totalorder %v72, %v1879
    %vm1981 = vcmp.eq.s32.totalorder %v69, %v1882
    %vm1982 = vcmp.eq.s32.totalorder %v70, %v1882
    %vm1983 = vcmp.eq.s32.totalorder %v71, %v1882
    %vm1984 = vcmp.eq.s32.totalorder %v72, %v1882
    %vm1985 = vcmp.eq.s32.totalorder %v69, %v1885
    %vm1986 = vcmp.eq.s32.totalorder %v70, %v1885
    %vm1987 = vcmp.eq.s32.totalorder %v71, %v1885
    %vm1988 = vcmp.eq.s32.totalorder %v72, %v1885
    %vm1989 = vcmp.eq.s32.totalorder %v69, %v1888
    %vm1990 = vcmp.eq.s32.totalorder %v70, %v1888
    %vm1991 = vcmp.eq.s32.totalorder %v71, %v1888
    %vm1992 = vcmp.eq.s32.totalorder %v72, %v1888
    %vm1993 = vcmp.eq.s32.totalorder %v69, %v1891
    %vm1994 = vcmp.eq.s32.totalorder %v70, %v1891
    %vm1995 = vcmp.eq.s32.totalorder %v71, %v1891
    %vm1996 = vcmp.eq.s32.totalorder %v72, %v1891
    %vm1997 = vcmp.eq.s32.totalorder %v69, %v1894
    %vm1998 = vcmp.eq.s32.totalorder %v70, %v1894
    %vm1999 = vcmp.eq.s32.totalorder %v71, %v1894
    %vm2000 = vcmp.eq.s32.totalorder %v72, %v1894
    %vm2001 = vcmp.eq.s32.totalorder %v69, %v1897
    %vm2002 = vcmp.eq.s32.totalorder %v70, %v1897
    %vm2003 = vcmp.eq.s32.totalorder %v71, %v1897
    %vm2004 = vcmp.eq.s32.totalorder %v72, %v1897
    %vm2005 = vcmp.eq.s32.totalorder %v69, %v1900
    %vm2006 = vcmp.eq.s32.totalorder %v70, %v1900
    %vm2007 = vcmp.eq.s32.totalorder %v71, %v1900
    %vm2008 = vcmp.eq.s32.totalorder %v72, %v1900
    %vm2009 = vcmp.eq.s32.totalorder %v69, %v1903
    %vm2010 = vcmp.eq.s32.totalorder %v70, %v1903
    %vm2011 = vcmp.eq.s32.totalorder %v71, %v1903
    %vm2012 = vcmp.eq.s32.totalorder %v72, %v1903
    %vm2013 = vcmp.eq.s32.totalorder %v69, %v1906
    %vm2014 = vcmp.eq.s32.totalorder %v70, %v1906
    %vm2015 = vcmp.eq.s32.totalorder %v71, %v1906
    %vm2016 = vcmp.eq.s32.totalorder %v72, %v1906
    %vm2017 = vcmp.eq.s32.totalorder %v69, %v1909
    %vm2018 = vcmp.eq.s32.totalorder %v70, %v1909
    %vm2019 = vcmp.eq.s32.totalorder %v71, %v1909
    %vm2020 = vcmp.eq.s32.totalorder %v72, %v1909
    %vm2021 = vcmp.eq.s32.totalorder %v69, %v1912
    %vm2022 = vcmp.eq.s32.totalorder %v70, %v1912
    %vm2023 = vcmp.eq.s32.totalorder %v71, %v1912
    %vm2024 = vcmp.eq.s32.totalorder %v72, %v1912
    %vm2025 = vcmp.eq.s32.totalorder %v69, %v1915
    %vm2026 = vcmp.eq.s32.totalorder %v70, %v1915
    %vm2027 = vcmp.eq.s32.totalorder %v71, %v1915
    %vm2028 = vcmp.eq.s32.totalorder %v72, %v1915
    %vm2029 = vcmp.eq.s32.totalorder %v69, %v1918
    %vm2030 = vcmp.eq.s32.totalorder %v70, %v1918
    %vm2031 = vcmp.eq.s32.totalorder %v71, %v1918
    %vm2032 = vcmp.eq.s32.totalorder %v72, %v1918
    %vm2033 = vcmp.eq.s32.totalorder %v69, %v1921
    %vm2034 = vcmp.eq.s32.totalorder %v70, %v1921
    %vm2035 = vcmp.eq.s32.totalorder %v71, %v1921
    %vm2036 = vcmp.eq.s32.totalorder %v72, %v1921
    %vm2037 = vcmp.eq.s32.totalorder %v69, %v1924
    %vm2038 = vcmp.eq.s32.totalorder %v70, %v1924
    %vm2039 = vcmp.eq.s32.totalorder %v71, %v1924
    %vm2040 = vcmp.eq.s32.totalorder %v72, %v1924
    %vm2041 = vcmp.eq.s32.totalorder %v69, %v1927
    %vm2042 = vcmp.eq.s32.totalorder %v70, %v1927
    %vm2043 = vcmp.eq.s32.totalorder %v71, %v1927
    %vm2044 = vcmp.eq.s32.totalorder %v72, %v1927
    %vm2045 = vcmp.eq.s32.totalorder %v69, %v1930
    %vm2046 = vcmp.eq.s32.totalorder %v70, %v1930
    %vm2047 = vcmp.eq.s32.totalorder %v71, %v1930
    %vm2048 = vcmp.eq.s32.totalorder %v72, %v1930
    %vm2049 = vcmp.eq.s32.totalorder %v69, %v1933
    %vm2050 = vcmp.eq.s32.totalorder %v70, %v1933
    %vm2051 = vcmp.eq.s32.totalorder %v71, %v1933
    %vm2052 = vcmp.eq.s32.totalorder %v72, %v1933
    %vm2053 = vcmp.eq.s32.totalorder %v69, %v1936
    %vm2054 = vcmp.eq.s32.totalorder %v70, %v1936
    %vm2055 = vcmp.eq.s32.totalorder %v71, %v1936
    %vm2056 = vcmp.eq.s32.totalorder %v72, %v1936
    %vm2057 = vcmp.eq.s32.totalorder %v69, %v1939
    %vm2058 = vcmp.eq.s32.totalorder %v70, %v1939
    %vm2059 = vcmp.eq.s32.totalorder %v71, %v1939
    %vm2060 = vcmp.eq.s32.totalorder %v72, %v1939
    %vm2061 = vcmp.eq.s32.totalorder %v69, %v1942
    %vm2062 = vcmp.eq.s32.totalorder %v70, %v1942
    %vm2063 = vcmp.eq.s32.totalorder %v71, %v1942
    %vm2064 = vcmp.eq.s32.totalorder %v72, %v1942
    %vm2065 = vcmp.eq.s32.totalorder %v69, %v1945
    %vm2066 = vcmp.eq.s32.totalorder %v70, %v1945
    %vm2067 = vcmp.eq.s32.totalorder %v71, %v1945
    %vm2068 = vcmp.eq.s32.totalorder %v72, %v1945
    %vm2069 = vcmp.eq.s32.totalorder %v69, %v1948
    %vm2070 = vcmp.eq.s32.totalorder %v70, %v1948
    %vm2071 = vcmp.eq.s32.totalorder %v71, %v1948
    %vm2072 = vcmp.eq.s32.totalorder %v72, %v1948
    %vm2073 = vcmp.eq.s32.totalorder %v69, %v1951
    %vm2074 = vcmp.eq.s32.totalorder %v70, %v1951
    %vm2075 = vcmp.eq.s32.totalorder %v71, %v1951
    %vm2076 = vcmp.eq.s32.totalorder %v72, %v1951
    %vm2077 = vcmp.eq.s32.totalorder %v69, %v1954
    %vm2078 = vcmp.eq.s32.totalorder %v70, %v1954
    %vm2079 = vcmp.eq.s32.totalorder %v71, %v1954
    %vm2080 = vcmp.eq.s32.totalorder %v72, %v1954
    %vm2081 = vcmp.eq.s32.totalorder %v69, %v1957
    %vm2082 = vcmp.eq.s32.totalorder %v70, %v1957
    %vm2083 = vcmp.eq.s32.totalorder %v71, %v1957
    %vm2084 = vcmp.eq.s32.totalorder %v72, %v1957
    %vm2085 = vcmp.eq.s32.totalorder %v69, %v1960
    %vm2086 = vcmp.eq.s32.totalorder %v70, %v1960
    %vm2087 = vcmp.eq.s32.totalorder %v71, %v1960
    %vm2088 = vcmp.eq.s32.totalorder %v72, %v1960
    %vm2089 = vmor %vm1705, %vm1961
    %vm2090 = vmor %vm1706, %vm1962
    %vm2091 = vmor %vm1707, %vm1963
    %vm2092 = vmor %vm1708, %vm1964
    %vm2093 = vmor %vm1709, %vm1965
    %vm2094 = vmor %vm1710, %vm1966
    %vm2095 = vmor %vm1711, %vm1967
    %vm2096 = vmor %vm1712, %vm1968
    %vm2097 = vmor %vm1713, %vm1969
    %vm2098 = vmor %vm1714, %vm1970
    %vm2099 = vmor %vm1715, %vm1971
    %vm2100 = vmor %vm1716, %vm1972
    %vm2101 = vmor %vm1717, %vm1973
    %vm2102 = vmor %vm1718, %vm1974
    %vm2103 = vmor %vm1719, %vm1975
    %vm2104 = vmor %vm1720, %vm1976
    %vm2105 = vmor %vm1721, %vm1977
    %vm2106 = vmor %vm1722, %vm1978
    %vm2107 = vmor %vm1723, %vm1979
    %vm2108 = vmor %vm1724, %vm1980
    %vm2109 = vmor %vm1725, %vm1981
    %vm2110 = vmor %vm1726, %vm1982
    %vm2111 = vmor %vm1727, %vm1983
    %vm2112 = vmor %vm1728, %vm1984
    %vm2113 = vmor %vm1729, %vm1985
    %vm2114 = vmor %vm1730, %vm1986
    %vm2115 = vmor %vm1731, %vm1987
    %vm2116 = vmor %vm1732, %vm1988
    %vm2117 = vmor %vm1733, %vm1989
    %vm2118 = vmor %vm1734, %vm1990
    %vm2119 = vmor %vm1735, %vm1991
    %vm2120 = vmor %vm1736, %vm1992
    %vm2121 = vmor %vm1737, %vm1993
    %vm2122 = vmor %vm1738, %vm1994
    %vm2123 = vmor %vm1739, %vm1995
    %vm2124 = vmor %vm1740, %vm1996
    %vm2125 = vmor %vm1741, %vm1997
    %vm2126 = vmor %vm1742, %vm1998
    %vm2127 = vmor %vm1743, %vm1999
    %vm2128 = vmor %vm1744, %vm2000
    %vm2129 = vmor %vm1745, %vm2001
    %vm2130 = vmor %vm1746, %vm2002
    %vm2131 = vmor %vm1747, %vm2003
    %vm2132 = vmor %vm1748, %vm2004
    %vm2133 = vmor %vm1749, %vm2005
    %vm2134 = vmor %vm1750, %vm2006
    %vm2135 = vmor %vm1751, %vm2007
    %vm2136 = vmor %vm1752, %vm2008
    %vm2137 = vmor %vm1753, %vm2009
    %vm2138 = vmor %vm1754, %vm2010
    %vm2139 = vmor %vm1755, %vm2011
    %vm2140 = vmor %vm1756, %vm2012
    %vm2141 = vmor %vm1757, %vm2013
    %vm2142 = vmor %vm1758, %vm2014
    %vm2143 = vmor %vm1759, %vm2015
    %vm2144 = vmor %vm1760, %vm2016
    %vm2145 = vmor %vm1761, %vm2017
    %vm2146 = vmor %vm1762, %vm2018
    %vm2147 = vmor %vm1763, %vm2019
    %vm2148 = vmor %vm1764, %vm2020
    %vm2149 = vmor %vm1765, %vm2021
    %vm2150 = vmor %vm1766, %vm2022
    %vm2151 = vmor %vm1767, %vm2023
    %vm2152 = vmor %vm1768, %vm2024
    %vm2153 = vmor %vm1769, %vm2025
    %vm2154 = vmor %vm1770, %vm2026
    %vm2155 = vmor %vm1771, %vm2027
    %vm2156 = vmor %vm1772, %vm2028
    %vm2157 = vmor %vm1773, %vm2029
    %vm2158 = vmor %vm1774, %vm2030
    %vm2159 = vmor %vm1775, %vm2031
    %vm2160 = vmor %vm1776, %vm2032
    %vm2161 = vmor %vm1777, %vm2033
    %vm2162 = vmor %vm1778, %vm2034
    %vm2163 = vmor %vm1779, %vm2035
    %vm2164 = vmor %vm1780, %vm2036
    %vm2165 = vmor %vm1781, %vm2037
    %vm2166 = vmor %vm1782, %vm2038
    %vm2167 = vmor %vm1783, %vm2039
    %vm2168 = vmor %vm1784, %vm2040
    %vm2169 = vmor %vm1785, %vm2041
    %vm2170 = vmor %vm1786, %vm2042
    %vm2171 = vmor %vm1787, %vm2043
    %vm2172 = vmor %vm1788, %vm2044
    %vm2173 = vmor %vm1789, %vm2045
    %vm2174 = vmor %vm1790, %vm2046
    %vm2175 = vmor %vm1791, %vm2047
    %vm2176 = vmor %vm1792, %vm2048
    %vm2177 = vmor %vm1793, %vm2049
    %vm2178 = vmor %vm1794, %vm2050
    %vm2179 = vmor %vm1795, %vm2051
    %vm2180 = vmor %vm1796, %vm2052
    %vm2181 = vmor %vm1797, %vm2053
    %vm2182 = vmor %vm1798, %vm2054
    %vm2183 = vmor %vm1799, %vm2055
    %vm2184 = vmor %vm1800, %vm2056
    %vm2185 = vmor %vm1801, %vm2057
    %vm2186 = vmor %vm1802, %vm2058
    %vm2187 = vmor %vm1803, %vm2059
    %vm2188 = vmor %vm1804, %vm2060
    %vm2189 = vmor %vm1805, %vm2061
    %vm2190 = vmor %vm1806, %vm2062
    %vm2191 = vmor %vm1807, %vm2063
    %vm2192 = vmor %vm1808, %vm2064
    %vm2193 = vmor %vm1809, %vm2065
    %vm2194 = vmor %vm1810, %vm2066
    %vm2195 = vmor %vm1811, %vm2067
    %vm2196 = vmor %vm1812, %vm2068
    %vm2197 = vmor %vm1813, %vm2069
    %vm2198 = vmor %vm1814, %vm2070
    %vm2199 = vmor %vm1815, %vm2071
    %vm2200 = vmor %vm1816, %vm2072
    %vm2201 = vmor %vm1817, %vm2073
    %vm2202 = vmor %vm1818, %vm2074
    %vm2203 = vmor %vm1819, %vm2075
    %vm2204 = vmor %vm1820, %vm2076
    %vm2205 = vmor %vm1821, %vm2077
    %vm2206 = vmor %vm1822, %vm2078
    %vm2207 = vmor %vm1823, %vm2079
    %vm2208 = vmor %vm1824, %vm2080
    %vm2209 = vmor %vm1825, %vm2081
    %vm2210 = vmor %vm1826, %vm2082
    %vm2211 = vmor %vm1827, %vm2083
    %vm2212 = vmor %vm1828, %vm2084
    %vm2213 = vmor %vm1829, %vm2085
    %vm2214 = vmor %vm1830, %vm2086
    %vm2215 = vmor %vm1831, %vm2087
    %vm2216 = vmor %vm1832, %vm2088
    %v2217 = vadd.s32 %v36, 384
    %v2218 = vadd.s32 %v37, 384
    %v2219 = vadd.s32 %v38, 384
    %v2220 = vadd.s32 %v39, 384
    %v2221 = vadd.s32 %v40, 384
    %v2222 = vadd.s32 %v41, 384
    %v2223 = vadd.s32 %v42, 384
    %v2224 = vadd.s32 %v43, 384
    %v2225 = vadd.s32 %v44, 384
    %v2226 = vadd.s32 %v45, 384
    %v2227 = vadd.s32 %v46, 384
    %v2228 = vadd.s32 %v47, 384
    %v2229 = vadd.s32 %v48, 384
    %v2230 = vadd.s32 %v49, 384
    %v2231 = vadd.s32 %v50, 384
    %v2232 = vadd.s32 %v51, 384
    %v2233 = vadd.s32 %v52, 384
    %v2234 = vadd.s32 %v53, 384
    %v2235 = vadd.s32 %v54, 384
    %v2236 = vadd.s32 %v55, 384
    %v2237 = vadd.s32 %v56, 384
    %v2238 = vadd.s32 %v57, 384
    %v2239 = vadd.s32 %v58, 384
    %v2240 = vadd.s32 %v59, 384
    %v2241 = vadd.s32 %v60, 384
    %v2242 = vadd.s32 %v61, 384
    %v2243 = vadd.s32 %v62, 384
    %v2244 = vadd.s32 %v63, 384
    %v2245 = vadd.s32 %v64, 384
    %v2246 = vadd.s32 %v65, 384
    %v2247 = vadd.s32 %v66, 384
    %v2248 = vadd.s32 %v67, 384
    %2249 = vset.pattern.permute.xlu0 6
    %2250 = vperm.xlu0 %2249, %v2217
    %v2251 = vpop.permute.xlu0 %2250
    %2252 = vset.pattern.permute.xlu0 6
    %2253 = vperm.xlu0 %2252, %v2218
    %v2254 = vpop.permute.xlu0 %2253
    %2255 = vset.pattern.permute.xlu0 6
    %2256 = vperm.xlu0 %2255, %v2219
    %v2257 = vpop.permute.xlu0 %2256
    %2258 = vset.pattern.permute.xlu0 6
    %2259 = vperm.xlu0 %2258, %v2220
    %v2260 = vpop.permute.xlu0 %2259
    %2261 = vset.pattern.permute.xlu0 6
    %2262 = vperm.xlu0 %2261, %v2221
    %v2263 = vpop.permute.xlu0 %2262
    %2264 = vset.pattern.permute.xlu0 6
    %2265 = vperm.xlu0 %2264, %v2222
    %v2266 = vpop.permute.xlu0 %2265
    %2267 = vset.pattern.permute.xlu0 6
    %2268 = vperm.xlu0 %2267, %v2223
    %v2269 = vpop.permute.xlu0 %2268
    %2270 = vset.pattern.permute.xlu0 6
    %2271 = vperm.xlu0 %2270, %v2224
    %v2272 = vpop.permute.xlu0 %2271
    %2273 = vset.pattern.permute.xlu0 6
    %2274 = vperm.xlu0 %2273, %v2225
    %v2275 = vpop.permute.xlu0 %2274
    %2276 = vset.pattern.permute.xlu0 6
    %2277 = vperm.xlu0 %2276, %v2226
    %v2278 = vpop.permute.xlu0 %2277
    %2279 = vset.pattern.permute.xlu0 6
    %2280 = vperm.xlu0 %2279, %v2227
    %v2281 = vpop.permute.xlu0 %2280
    %2282 = vset.pattern.permute.xlu0 6
    %2283 = vperm.xlu0 %2282, %v2228
    %v2284 = vpop.permute.xlu0 %2283
    %2285 = vset.pattern.permute.xlu0 6
    %2286 = vperm.xlu0 %2285, %v2229
    %v2287 = vpop.permute.xlu0 %2286
    %2288 = vset.pattern.permute.xlu0 6
    %2289 = vperm.xlu0 %2288, %v2230
    %v2290 = vpop.permute.xlu0 %2289
    %2291 = vset.pattern.permute.xlu0 6
    %2292 = vperm.xlu0 %2291, %v2231
    %v2293 = vpop.permute.xlu0 %2292
    %2294 = vset.pattern.permute.xlu0 6
    %2295 = vperm.xlu0 %2294, %v2232
    %v2296 = vpop.permute.xlu0 %2295
    %2297 = vset.pattern.permute.xlu0 6
    %2298 = vperm.xlu0 %2297, %v2233
    %v2299 = vpop.permute.xlu0 %2298
    %2300 = vset.pattern.permute.xlu0 6
    %2301 = vperm.xlu0 %2300, %v2234
    %v2302 = vpop.permute.xlu0 %2301
    %2303 = vset.pattern.permute.xlu0 6
    %2304 = vperm.xlu0 %2303, %v2235
    %v2305 = vpop.permute.xlu0 %2304
    %2306 = vset.pattern.permute.xlu0 6
    %2307 = vperm.xlu0 %2306, %v2236
    %v2308 = vpop.permute.xlu0 %2307
    %2309 = vset.pattern.permute.xlu0 6
    %2310 = vperm.xlu0 %2309, %v2237
    %v2311 = vpop.permute.xlu0 %2310
    %2312 = vset.pattern.permute.xlu0 6
    %2313 = vperm.xlu0 %2312, %v2238
    %v2314 = vpop.permute.xlu0 %2313
    %2315 = vset.pattern.permute.xlu0 6
    %2316 = vperm.xlu0 %2315, %v2239
    %v2317 = vpop.permute.xlu0 %2316
    %2318 = vset.pattern.permute.xlu0 6
    %2319 = vperm.xlu0 %2318, %v2240
    %v2320 = vpop.permute.xlu0 %2319
    %2321 = vset.pattern.permute.xlu0 6
    %2322 = vperm.xlu0 %2321, %v2241
    %v2323 = vpop.permute.xlu0 %2322
    %2324 = vset.pattern.permute.xlu0 6
    %2325 = vperm.xlu0 %2324, %v2242
    %v2326 = vpop.permute.xlu0 %2325
    %2327 = vset.pattern.permute.xlu0 6
    %2328 = vperm.xlu0 %2327, %v2243
    %v2329 = vpop.permute.xlu0 %2328
    %2330 = vset.pattern.permute.xlu0 6
    %2331 = vperm.xlu0 %2330, %v2244
    %v2332 = vpop.permute.xlu0 %2331
    %2333 = vset.pattern.permute.xlu0 6
    %2334 = vperm.xlu0 %2333, %v2245
    %v2335 = vpop.permute.xlu0 %2334
    %2336 = vset.pattern.permute.xlu0 6
    %2337 = vperm.xlu0 %2336, %v2246
    %v2338 = vpop.permute.xlu0 %2337
    %2339 = vset.pattern.permute.xlu0 6
    %2340 = vperm.xlu0 %2339, %v2247
    %v2341 = vpop.permute.xlu0 %2340
    %2342 = vset.pattern.permute.xlu0 6
    %2343 = vperm.xlu0 %2342, %v2248
    %v2344 = vpop.permute.xlu0 %2343
    %vm2345 = vcmp.eq.s32.totalorder %v69, %v2251
    %vm2346 = vcmp.eq.s32.totalorder %v70, %v2251
    %vm2347 = vcmp.eq.s32.totalorder %v71, %v2251
    %vm2348 = vcmp.eq.s32.totalorder %v72, %v2251
    %vm2349 = vcmp.eq.s32.totalorder %v69, %v2254
    %vm2350 = vcmp.eq.s32.totalorder %v70, %v2254
    %vm2351 = vcmp.eq.s32.totalorder %v71, %v2254
    %vm2352 = vcmp.eq.s32.totalorder %v72, %v2254
    %vm2353 = vcmp.eq.s32.totalorder %v69, %v2257
    %vm2354 = vcmp.eq.s32.totalorder %v70, %v2257
    %vm2355 = vcmp.eq.s32.totalorder %v71, %v2257
    %vm2356 = vcmp.eq.s32.totalorder %v72, %v2257
    %vm2357 = vcmp.eq.s32.totalorder %v69, %v2260
    %vm2358 = vcmp.eq.s32.totalorder %v70, %v2260
    %vm2359 = vcmp.eq.s32.totalorder %v71, %v2260
    %vm2360 = vcmp.eq.s32.totalorder %v72, %v2260
    %vm2361 = vcmp.eq.s32.totalorder %v69, %v2263
    %vm2362 = vcmp.eq.s32.totalorder %v70, %v2263
    %vm2363 = vcmp.eq.s32.totalorder %v71, %v2263
    %vm2364 = vcmp.eq.s32.totalorder %v72, %v2263
    %vm2365 = vcmp.eq.s32.totalorder %v69, %v2266
    %vm2366 = vcmp.eq.s32.totalorder %v70, %v2266
    %vm2367 = vcmp.eq.s32.totalorder %v71, %v2266
    %vm2368 = vcmp.eq.s32.totalorder %v72, %v2266
    %vm2369 = vcmp.eq.s32.totalorder %v69, %v2269
    %vm2370 = vcmp.eq.s32.totalorder %v70, %v2269
    %vm2371 = vcmp.eq.s32.totalorder %v71, %v2269
    %vm2372 = vcmp.eq.s32.totalorder %v72, %v2269
    %vm2373 = vcmp.eq.s32.totalorder %v69, %v2272
    %vm2374 = vcmp.eq.s32.totalorder %v70, %v2272
    %vm2375 = vcmp.eq.s32.totalorder %v71, %v2272
    %vm2376 = vcmp.eq.s32.totalorder %v72, %v2272
    %vm2377 = vcmp.eq.s32.totalorder %v69, %v2275
    %vm2378 = vcmp.eq.s32.totalorder %v70, %v2275
    %vm2379 = vcmp.eq.s32.totalorder %v71, %v2275
    %vm2380 = vcmp.eq.s32.totalorder %v72, %v2275
    %vm2381 = vcmp.eq.s32.totalorder %v69, %v2278
    %vm2382 = vcmp.eq.s32.totalorder %v70, %v2278
    %vm2383 = vcmp.eq.s32.totalorder %v71, %v2278
    %vm2384 = vcmp.eq.s32.totalorder %v72, %v2278
    %vm2385 = vcmp.eq.s32.totalorder %v69, %v2281
    %vm2386 = vcmp.eq.s32.totalorder %v70, %v2281
    %vm2387 = vcmp.eq.s32.totalorder %v71, %v2281
    %vm2388 = vcmp.eq.s32.totalorder %v72, %v2281
    %vm2389 = vcmp.eq.s32.totalorder %v69, %v2284
    %vm2390 = vcmp.eq.s32.totalorder %v70, %v2284
    %vm2391 = vcmp.eq.s32.totalorder %v71, %v2284
    %vm2392 = vcmp.eq.s32.totalorder %v72, %v2284
    %vm2393 = vcmp.eq.s32.totalorder %v69, %v2287
    %vm2394 = vcmp.eq.s32.totalorder %v70, %v2287
    %vm2395 = vcmp.eq.s32.totalorder %v71, %v2287
    %vm2396 = vcmp.eq.s32.totalorder %v72, %v2287
    %vm2397 = vcmp.eq.s32.totalorder %v69, %v2290
    %vm2398 = vcmp.eq.s32.totalorder %v70, %v2290
    %vm2399 = vcmp.eq.s32.totalorder %v71, %v2290
    %vm2400 = vcmp.eq.s32.totalorder %v72, %v2290
    %vm2401 = vcmp.eq.s32.totalorder %v69, %v2293
    %vm2402 = vcmp.eq.s32.totalorder %v70, %v2293
    %vm2403 = vcmp.eq.s32.totalorder %v71, %v2293
    %vm2404 = vcmp.eq.s32.totalorder %v72, %v2293
    %vm2405 = vcmp.eq.s32.totalorder %v69, %v2296
    %vm2406 = vcmp.eq.s32.totalorder %v70, %v2296
    %vm2407 = vcmp.eq.s32.totalorder %v71, %v2296
    %vm2408 = vcmp.eq.s32.totalorder %v72, %v2296
    %vm2409 = vcmp.eq.s32.totalorder %v69, %v2299
    %vm2410 = vcmp.eq.s32.totalorder %v70, %v2299
    %vm2411 = vcmp.eq.s32.totalorder %v71, %v2299
    %vm2412 = vcmp.eq.s32.totalorder %v72, %v2299
    %vm2413 = vcmp.eq.s32.totalorder %v69, %v2302
    %vm2414 = vcmp.eq.s32.totalorder %v70, %v2302
    %vm2415 = vcmp.eq.s32.totalorder %v71, %v2302
    %vm2416 = vcmp.eq.s32.totalorder %v72, %v2302
    %vm2417 = vcmp.eq.s32.totalorder %v69, %v2305
    %vm2418 = vcmp.eq.s32.totalorder %v70, %v2305
    %vm2419 = vcmp.eq.s32.totalorder %v71, %v2305
    %vm2420 = vcmp.eq.s32.totalorder %v72, %v2305
    %vm2421 = vcmp.eq.s32.totalorder %v69, %v2308
    %vm2422 = vcmp.eq.s32.totalorder %v70, %v2308
    %vm2423 = vcmp.eq.s32.totalorder %v71, %v2308
    %vm2424 = vcmp.eq.s32.totalorder %v72, %v2308
    %vm2425 = vcmp.eq.s32.totalorder %v69, %v2311
    %vm2426 = vcmp.eq.s32.totalorder %v70, %v2311
    %vm2427 = vcmp.eq.s32.totalorder %v71, %v2311
    %vm2428 = vcmp.eq.s32.totalorder %v72, %v2311
    %vm2429 = vcmp.eq.s32.totalorder %v69, %v2314
    %vm2430 = vcmp.eq.s32.totalorder %v70, %v2314
    %vm2431 = vcmp.eq.s32.totalorder %v71, %v2314
    %vm2432 = vcmp.eq.s32.totalorder %v72, %v2314
    %vm2433 = vcmp.eq.s32.totalorder %v69, %v2317
    %vm2434 = vcmp.eq.s32.totalorder %v70, %v2317
    %vm2435 = vcmp.eq.s32.totalorder %v71, %v2317
    %vm2436 = vcmp.eq.s32.totalorder %v72, %v2317
    %vm2437 = vcmp.eq.s32.totalorder %v69, %v2320
    %vm2438 = vcmp.eq.s32.totalorder %v70, %v2320
    %vm2439 = vcmp.eq.s32.totalorder %v71, %v2320
    %vm2440 = vcmp.eq.s32.totalorder %v72, %v2320
    %vm2441 = vcmp.eq.s32.totalorder %v69, %v2323
    %vm2442 = vcmp.eq.s32.totalorder %v70, %v2323
    %vm2443 = vcmp.eq.s32.totalorder %v71, %v2323
    %vm2444 = vcmp.eq.s32.totalorder %v72, %v2323
    %vm2445 = vcmp.eq.s32.totalorder %v69, %v2326
    %vm2446 = vcmp.eq.s32.totalorder %v70, %v2326
    %vm2447 = vcmp.eq.s32.totalorder %v71, %v2326
    %vm2448 = vcmp.eq.s32.totalorder %v72, %v2326
    %vm2449 = vcmp.eq.s32.totalorder %v69, %v2329
    %vm2450 = vcmp.eq.s32.totalorder %v70, %v2329
    %vm2451 = vcmp.eq.s32.totalorder %v71, %v2329
    %vm2452 = vcmp.eq.s32.totalorder %v72, %v2329
    %vm2453 = vcmp.eq.s32.totalorder %v69, %v2332
    %vm2454 = vcmp.eq.s32.totalorder %v70, %v2332
    %vm2455 = vcmp.eq.s32.totalorder %v71, %v2332
    %vm2456 = vcmp.eq.s32.totalorder %v72, %v2332
    %vm2457 = vcmp.eq.s32.totalorder %v69, %v2335
    %vm2458 = vcmp.eq.s32.totalorder %v70, %v2335
    %vm2459 = vcmp.eq.s32.totalorder %v71, %v2335
    %vm2460 = vcmp.eq.s32.totalorder %v72, %v2335
    %vm2461 = vcmp.eq.s32.totalorder %v69, %v2338
    %vm2462 = vcmp.eq.s32.totalorder %v70, %v2338
    %vm2463 = vcmp.eq.s32.totalorder %v71, %v2338
    %vm2464 = vcmp.eq.s32.totalorder %v72, %v2338
    %vm2465 = vcmp.eq.s32.totalorder %v69, %v2341
    %vm2466 = vcmp.eq.s32.totalorder %v70, %v2341
    %vm2467 = vcmp.eq.s32.totalorder %v71, %v2341
    %vm2468 = vcmp.eq.s32.totalorder %v72, %v2341
    %vm2469 = vcmp.eq.s32.totalorder %v69, %v2344
    %vm2470 = vcmp.eq.s32.totalorder %v70, %v2344
    %vm2471 = vcmp.eq.s32.totalorder %v71, %v2344
    %vm2472 = vcmp.eq.s32.totalorder %v72, %v2344
    %vm2473 = vmor %vm2089, %vm2345
    %vm2474 = vmor %vm2090, %vm2346
    %vm2475 = vmor %vm2091, %vm2347
    %vm2476 = vmor %vm2092, %vm2348
    %vm2477 = vmor %vm2093, %vm2349
    %vm2478 = vmor %vm2094, %vm2350
    %vm2479 = vmor %vm2095, %vm2351
    %vm2480 = vmor %vm2096, %vm2352
    %vm2481 = vmor %vm2097, %vm2353
    %vm2482 = vmor %vm2098, %vm2354
    %vm2483 = vmor %vm2099, %vm2355
    %vm2484 = vmor %vm2100, %vm2356
    %vm2485 = vmor %vm2101, %vm2357
    %vm2486 = vmor %vm2102, %vm2358
    %vm2487 = vmor %vm2103, %vm2359
    %vm2488 = vmor %vm2104, %vm2360
    %vm2489 = vmor %vm2105, %vm2361
    %vm2490 = vmor %vm2106, %vm2362
    %vm2491 = vmor %vm2107, %vm2363
    %vm2492 = vmor %vm2108, %vm2364
    %vm2493 = vmor %vm2109, %vm2365
    %vm2494 = vmor %vm2110, %vm2366
    %vm2495 = vmor %vm2111, %vm2367
    %vm2496 = vmor %vm2112, %vm2368
    %vm2497 = vmor %vm2113, %vm2369
    %vm2498 = vmor %vm2114, %vm2370
    %vm2499 = vmor %vm2115, %vm2371
    %vm2500 = vmor %vm2116, %vm2372
    %vm2501 = vmor %vm2117, %vm2373
    %vm2502 = vmor %vm2118, %vm2374
    %vm2503 = vmor %vm2119, %vm2375
    %vm2504 = vmor %vm2120, %vm2376
    %vm2505 = vmor %vm2121, %vm2377
    %vm2506 = vmor %vm2122, %vm2378
    %vm2507 = vmor %vm2123, %vm2379
    %vm2508 = vmor %vm2124, %vm2380
    %vm2509 = vmor %vm2125, %vm2381
    %vm2510 = vmor %vm2126, %vm2382
    %vm2511 = vmor %vm2127, %vm2383
    %vm2512 = vmor %vm2128, %vm2384
    %vm2513 = vmor %vm2129, %vm2385
    %vm2514 = vmor %vm2130, %vm2386
    %vm2515 = vmor %vm2131, %vm2387
    %vm2516 = vmor %vm2132, %vm2388
    %vm2517 = vmor %vm2133, %vm2389
    %vm2518 = vmor %vm2134, %vm2390
    %vm2519 = vmor %vm2135, %vm2391
    %vm2520 = vmor %vm2136, %vm2392
    %vm2521 = vmor %vm2137, %vm2393
    %vm2522 = vmor %vm2138, %vm2394
    %vm2523 = vmor %vm2139, %vm2395
    %vm2524 = vmor %vm2140, %vm2396
    %vm2525 = vmor %vm2141, %vm2397
    %vm2526 = vmor %vm2142, %vm2398
    %vm2527 = vmor %vm2143, %vm2399
    %vm2528 = vmor %vm2144, %vm2400
    %vm2529 = vmor %vm2145, %vm2401
    %vm2530 = vmor %vm2146, %vm2402
    %vm2531 = vmor %vm2147, %vm2403
    %vm2532 = vmor %vm2148, %vm2404
    %vm2533 = vmor %vm2149, %vm2405
    %vm2534 = vmor %vm2150, %vm2406
    %vm2535 = vmor %vm2151, %vm2407
    %vm2536 = vmor %vm2152, %vm2408
    %vm2537 = vmor %vm2153, %vm2409
    %vm2538 = vmor %vm2154, %vm2410
    %vm2539 = vmor %vm2155, %vm2411
    %vm2540 = vmor %vm2156, %vm2412
    %vm2541 = vmor %vm2157, %vm2413
    %vm2542 = vmor %vm2158, %vm2414
    %vm2543 = vmor %vm2159, %vm2415
    %vm2544 = vmor %vm2160, %vm2416
    %vm2545 = vmor %vm2161, %vm2417
    %vm2546 = vmor %vm2162, %vm2418
    %vm2547 = vmor %vm2163, %vm2419
    %vm2548 = vmor %vm2164, %vm2420
    %vm2549 = vmor %vm2165, %vm2421
    %vm2550 = vmor %vm2166, %vm2422
    %vm2551 = vmor %vm2167, %vm2423
    %vm2552 = vmor %vm2168, %vm2424
    %vm2553 = vmor %vm2169, %vm2425
    %vm2554 = vmor %vm2170, %vm2426
    %vm2555 = vmor %vm2171, %vm2427
    %vm2556 = vmor %vm2172, %vm2428
    %vm2557 = vmor %vm2173, %vm2429
    %vm2558 = vmor %vm2174, %vm2430
    %vm2559 = vmor %vm2175, %vm2431
    %vm2560 = vmor %vm2176, %vm2432
    %vm2561 = vmor %vm2177, %vm2433
    %vm2562 = vmor %vm2178, %vm2434
    %vm2563 = vmor %vm2179, %vm2435
    %vm2564 = vmor %vm2180, %vm2436
    %vm2565 = vmor %vm2181, %vm2437
    %vm2566 = vmor %vm2182, %vm2438
    %vm2567 = vmor %vm2183, %vm2439
    %vm2568 = vmor %vm2184, %vm2440
    %vm2569 = vmor %vm2185, %vm2441
    %vm2570 = vmor %vm2186, %vm2442
    %vm2571 = vmor %vm2187, %vm2443
    %vm2572 = vmor %vm2188, %vm2444
    %vm2573 = vmor %vm2189, %vm2445
    %vm2574 = vmor %vm2190, %vm2446
    %vm2575 = vmor %vm2191, %vm2447
    %vm2576 = vmor %vm2192, %vm2448
    %vm2577 = vmor %vm2193, %vm2449
    %vm2578 = vmor %vm2194, %vm2450
    %vm2579 = vmor %vm2195, %vm2451
    %vm2580 = vmor %vm2196, %vm2452
    %vm2581 = vmor %vm2197, %vm2453
    %vm2582 = vmor %vm2198, %vm2454
    %vm2583 = vmor %vm2199, %vm2455
    %vm2584 = vmor %vm2200, %vm2456
    %vm2585 = vmor %vm2201, %vm2457
    %vm2586 = vmor %vm2202, %vm2458
    %vm2587 = vmor %vm2203, %vm2459
    %vm2588 = vmor %vm2204, %vm2460
    %vm2589 = vmor %vm2205, %vm2461
    %vm2590 = vmor %vm2206, %vm2462
    %vm2591 = vmor %vm2207, %vm2463
    %vm2592 = vmor %vm2208, %vm2464
    %vm2593 = vmor %vm2209, %vm2465
    %vm2594 = vmor %vm2210, %vm2466
    %vm2595 = vmor %vm2211, %vm2467
    %vm2596 = vmor %vm2212, %vm2468
    %vm2597 = vmor %vm2213, %vm2469
    %vm2598 = vmor %vm2214, %vm2470
    %vm2599 = vmor %vm2215, %vm2471
    %vm2600 = vmor %vm2216, %vm2472
    %v2601 = vadd.s32 %v36, 448
    %v2602 = vadd.s32 %v37, 448
    %v2603 = vadd.s32 %v38, 448
    %v2604 = vadd.s32 %v39, 448
    %v2605 = vadd.s32 %v40, 448
    %v2606 = vadd.s32 %v41, 448
    %v2607 = vadd.s32 %v42, 448
    %v2608 = vadd.s32 %v43, 448
    %v2609 = vadd.s32 %v44, 448
    %v2610 = vadd.s32 %v45, 448
    %v2611 = vadd.s32 %v46, 448
    %v2612 = vadd.s32 %v47, 448
    %v2613 = vadd.s32 %v48, 448
    %v2614 = vadd.s32 %v49, 448
    %v2615 = vadd.s32 %v50, 448
    %v2616 = vadd.s32 %v51, 448
    %v2617 = vadd.s32 %v52, 448
    %v2618 = vadd.s32 %v53, 448
    %v2619 = vadd.s32 %v54, 448
    %v2620 = vadd.s32 %v55, 448
    %v2621 = vadd.s32 %v56, 448
    %v2622 = vadd.s32 %v57, 448
    %v2623 = vadd.s32 %v58, 448
    %v2624 = vadd.s32 %v59, 448
    %v2625 = vadd.s32 %v60, 448
    %v2626 = vadd.s32 %v61, 448
    %v2627 = vadd.s32 %v62, 448
    %v2628 = vadd.s32 %v63, 448
    %v2629 = vadd.s32 %v64, 448
    %v2630 = vadd.s32 %v65, 448
    %v2631 = vadd.s32 %v66, 448
    %v2632 = vadd.s32 %v67, 448
    %2633 = vset.pattern.permute.xlu0 7
    %2634 = vperm.xlu0 %2633, %v2601
    %v2635 = vpop.permute.xlu0 %2634
    %2636 = vset.pattern.permute.xlu0 7
    %2637 = vperm.xlu0 %2636, %v2602
    %v2638 = vpop.permute.xlu0 %2637
    %2639 = vset.pattern.permute.xlu0 7
    %2640 = vperm.xlu0 %2639, %v2603
    %v2641 = vpop.permute.xlu0 %2640
    %2642 = vset.pattern.permute.xlu0 7
    %2643 = vperm.xlu0 %2642, %v2604
    %v2644 = vpop.permute.xlu0 %2643
    %2645 = vset.pattern.permute.xlu0 7
    %2646 = vperm.xlu0 %2645, %v2605
    %v2647 = vpop.permute.xlu0 %2646
    %2648 = vset.pattern.permute.xlu0 7
    %2649 = vperm.xlu0 %2648, %v2606
    %v2650 = vpop.permute.xlu0 %2649
    %2651 = vset.pattern.permute.xlu0 7
    %2652 = vperm.xlu0 %2651, %v2607
    %v2653 = vpop.permute.xlu0 %2652
    %2654 = vset.pattern.permute.xlu0 7
    %2655 = vperm.xlu0 %2654, %v2608
    %v2656 = vpop.permute.xlu0 %2655
    %2657 = vset.pattern.permute.xlu0 7
    %2658 = vperm.xlu0 %2657, %v2609
    %v2659 = vpop.permute.xlu0 %2658
    %2660 = vset.pattern.permute.xlu0 7
    %2661 = vperm.xlu0 %2660, %v2610
    %v2662 = vpop.permute.xlu0 %2661
    %2663 = vset.pattern.permute.xlu0 7
    %2664 = vperm.xlu0 %2663, %v2611
    %v2665 = vpop.permute.xlu0 %2664
    %2666 = vset.pattern.permute.xlu0 7
    %2667 = vperm.xlu0 %2666, %v2612
    %v2668 = vpop.permute.xlu0 %2667
    %2669 = vset.pattern.permute.xlu0 7
    %2670 = vperm.xlu0 %2669, %v2613
    %v2671 = vpop.permute.xlu0 %2670
    %2672 = vset.pattern.permute.xlu0 7
    %2673 = vperm.xlu0 %2672, %v2614
    %v2674 = vpop.permute.xlu0 %2673
    %2675 = vset.pattern.permute.xlu0 7
    %2676 = vperm.xlu0 %2675, %v2615
    %v2677 = vpop.permute.xlu0 %2676
    %2678 = vset.pattern.permute.xlu0 7
    %2679 = vperm.xlu0 %2678, %v2616
    %v2680 = vpop.permute.xlu0 %2679
    %2681 = vset.pattern.permute.xlu0 7
    %2682 = vperm.xlu0 %2681, %v2617
    %v2683 = vpop.permute.xlu0 %2682
    %2684 = vset.pattern.permute.xlu0 7
    %2685 = vperm.xlu0 %2684, %v2618
    %v2686 = vpop.permute.xlu0 %2685
    %2687 = vset.pattern.permute.xlu0 7
    %2688 = vperm.xlu0 %2687, %v2619
    %v2689 = vpop.permute.xlu0 %2688
    %2690 = vset.pattern.permute.xlu0 7
    %2691 = vperm.xlu0 %2690, %v2620
    %v2692 = vpop.permute.xlu0 %2691
    %2693 = vset.pattern.permute.xlu0 7
    %2694 = vperm.xlu0 %2693, %v2621
    %v2695 = vpop.permute.xlu0 %2694
    %2696 = vset.pattern.permute.xlu0 7
    %2697 = vperm.xlu0 %2696, %v2622
    %v2698 = vpop.permute.xlu0 %2697
    %2699 = vset.pattern.permute.xlu0 7
    %2700 = vperm.xlu0 %2699, %v2623
    %v2701 = vpop.permute.xlu0 %2700
    %2702 = vset.pattern.permute.xlu0 7
    %2703 = vperm.xlu0 %2702, %v2624
    %v2704 = vpop.permute.xlu0 %2703
    %2705 = vset.pattern.permute.xlu0 7
    %2706 = vperm.xlu0 %2705, %v2625
    %v2707 = vpop.permute.xlu0 %2706
    %2708 = vset.pattern.permute.xlu0 7
    %2709 = vperm.xlu0 %2708, %v2626
    %v2710 = vpop.permute.xlu0 %2709
    %2711 = vset.pattern.permute.xlu0 7
    %2712 = vperm.xlu0 %2711, %v2627
    %v2713 = vpop.permute.xlu0 %2712
    %2714 = vset.pattern.permute.xlu0 7
    %2715 = vperm.xlu0 %2714, %v2628
    %v2716 = vpop.permute.xlu0 %2715
    %2717 = vset.pattern.permute.xlu0 7
    %2718 = vperm.xlu0 %2717, %v2629
    %v2719 = vpop.permute.xlu0 %2718
    %2720 = vset.pattern.permute.xlu0 7
    %2721 = vperm.xlu0 %2720, %v2630
    %v2722 = vpop.permute.xlu0 %2721
    %2723 = vset.pattern.permute.xlu0 7
    %2724 = vperm.xlu0 %2723, %v2631
    %v2725 = vpop.permute.xlu0 %2724
    %2726 = vset.pattern.permute.xlu0 7
    %2727 = vperm.xlu0 %2726, %v2632
    %v2728 = vpop.permute.xlu0 %2727
    %vm2729 = vcmp.eq.s32.totalorder %v69, %v2635
    %vm2730 = vcmp.eq.s32.totalorder %v70, %v2635
    %vm2731 = vcmp.eq.s32.totalorder %v71, %v2635
    %vm2732 = vcmp.eq.s32.totalorder %v72, %v2635
    %vm2733 = vcmp.eq.s32.totalorder %v69, %v2638
    %vm2734 = vcmp.eq.s32.totalorder %v70, %v2638
    %vm2735 = vcmp.eq.s32.totalorder %v71, %v2638
    %vm2736 = vcmp.eq.s32.totalorder %v72, %v2638
    %vm2737 = vcmp.eq.s32.totalorder %v69, %v2641
    %vm2738 = vcmp.eq.s32.totalorder %v70, %v2641
    %vm2739 = vcmp.eq.s32.totalorder %v71, %v2641
    %vm2740 = vcmp.eq.s32.totalorder %v72, %v2641
    %vm2741 = vcmp.eq.s32.totalorder %v69, %v2644
    %vm2742 = vcmp.eq.s32.totalorder %v70, %v2644
    %vm2743 = vcmp.eq.s32.totalorder %v71, %v2644
    %vm2744 = vcmp.eq.s32.totalorder %v72, %v2644
    %vm2745 = vcmp.eq.s32.totalorder %v69, %v2647
    %vm2746 = vcmp.eq.s32.totalorder %v70, %v2647
    %vm2747 = vcmp.eq.s32.totalorder %v71, %v2647
    %vm2748 = vcmp.eq.s32.totalorder %v72, %v2647
    %vm2749 = vcmp.eq.s32.totalorder %v69, %v2650
    %vm2750 = vcmp.eq.s32.totalorder %v70, %v2650
    %vm2751 = vcmp.eq.s32.totalorder %v71, %v2650
    %vm2752 = vcmp.eq.s32.totalorder %v72, %v2650
    %vm2753 = vcmp.eq.s32.totalorder %v69, %v2653
    %vm2754 = vcmp.eq.s32.totalorder %v70, %v2653
    %vm2755 = vcmp.eq.s32.totalorder %v71, %v2653
    %vm2756 = vcmp.eq.s32.totalorder %v72, %v2653
    %vm2757 = vcmp.eq.s32.totalorder %v69, %v2656
    %vm2758 = vcmp.eq.s32.totalorder %v70, %v2656
    %vm2759 = vcmp.eq.s32.totalorder %v71, %v2656
    %vm2760 = vcmp.eq.s32.totalorder %v72, %v2656
    %vm2761 = vcmp.eq.s32.totalorder %v69, %v2659
    %vm2762 = vcmp.eq.s32.totalorder %v70, %v2659
    %vm2763 = vcmp.eq.s32.totalorder %v71, %v2659
    %vm2764 = vcmp.eq.s32.totalorder %v72, %v2659
    %vm2765 = vcmp.eq.s32.totalorder %v69, %v2662
    %vm2766 = vcmp.eq.s32.totalorder %v70, %v2662
    %vm2767 = vcmp.eq.s32.totalorder %v71, %v2662
    %vm2768 = vcmp.eq.s32.totalorder %v72, %v2662
    %vm2769 = vcmp.eq.s32.totalorder %v69, %v2665
    %vm2770 = vcmp.eq.s32.totalorder %v70, %v2665
    %vm2771 = vcmp.eq.s32.totalorder %v71, %v2665
    %vm2772 = vcmp.eq.s32.totalorder %v72, %v2665
    %vm2773 = vcmp.eq.s32.totalorder %v69, %v2668
    %vm2774 = vcmp.eq.s32.totalorder %v70, %v2668
    %vm2775 = vcmp.eq.s32.totalorder %v71, %v2668
    %vm2776 = vcmp.eq.s32.totalorder %v72, %v2668
    %vm2777 = vcmp.eq.s32.totalorder %v69, %v2671
    %vm2778 = vcmp.eq.s32.totalorder %v70, %v2671
    %vm2779 = vcmp.eq.s32.totalorder %v71, %v2671
    %vm2780 = vcmp.eq.s32.totalorder %v72, %v2671
    %vm2781 = vcmp.eq.s32.totalorder %v69, %v2674
    %vm2782 = vcmp.eq.s32.totalorder %v70, %v2674
    %vm2783 = vcmp.eq.s32.totalorder %v71, %v2674
    %vm2784 = vcmp.eq.s32.totalorder %v72, %v2674
    %vm2785 = vcmp.eq.s32.totalorder %v69, %v2677
    %vm2786 = vcmp.eq.s32.totalorder %v70, %v2677
    %vm2787 = vcmp.eq.s32.totalorder %v71, %v2677
    %vm2788 = vcmp.eq.s32.totalorder %v72, %v2677
    %vm2789 = vcmp.eq.s32.totalorder %v69, %v2680
    %vm2790 = vcmp.eq.s32.totalorder %v70, %v2680
    %vm2791 = vcmp.eq.s32.totalorder %v71, %v2680
    %vm2792 = vcmp.eq.s32.totalorder %v72, %v2680
    %vm2793 = vcmp.eq.s32.totalorder %v69, %v2683
    %vm2794 = vcmp.eq.s32.totalorder %v70, %v2683
    %vm2795 = vcmp.eq.s32.totalorder %v71, %v2683
    %vm2796 = vcmp.eq.s32.totalorder %v72, %v2683
    %vm2797 = vcmp.eq.s32.totalorder %v69, %v2686
    %vm2798 = vcmp.eq.s32.totalorder %v70, %v2686
    %vm2799 = vcmp.eq.s32.totalorder %v71, %v2686
    %vm2800 = vcmp.eq.s32.totalorder %v72, %v2686
    %vm2801 = vcmp.eq.s32.totalorder %v69, %v2689
    %vm2802 = vcmp.eq.s32.totalorder %v70, %v2689
    %vm2803 = vcmp.eq.s32.totalorder %v71, %v2689
    %vm2804 = vcmp.eq.s32.totalorder %v72, %v2689
    %vm2805 = vcmp.eq.s32.totalorder %v69, %v2692
    %vm2806 = vcmp.eq.s32.totalorder %v70, %v2692
    %vm2807 = vcmp.eq.s32.totalorder %v71, %v2692
    %vm2808 = vcmp.eq.s32.totalorder %v72, %v2692
    %vm2809 = vcmp.eq.s32.totalorder %v69, %v2695
    %vm2810 = vcmp.eq.s32.totalorder %v70, %v2695
    %vm2811 = vcmp.eq.s32.totalorder %v71, %v2695
    %vm2812 = vcmp.eq.s32.totalorder %v72, %v2695
    %vm2813 = vcmp.eq.s32.totalorder %v69, %v2698
    %vm2814 = vcmp.eq.s32.totalorder %v70, %v2698
    %vm2815 = vcmp.eq.s32.totalorder %v71, %v2698
    %vm2816 = vcmp.eq.s32.totalorder %v72, %v2698
    %vm2817 = vcmp.eq.s32.totalorder %v69, %v2701
    %vm2818 = vcmp.eq.s32.totalorder %v70, %v2701
    %vm2819 = vcmp.eq.s32.totalorder %v71, %v2701
    %vm2820 = vcmp.eq.s32.totalorder %v72, %v2701
    %vm2821 = vcmp.eq.s32.totalorder %v69, %v2704
    %vm2822 = vcmp.eq.s32.totalorder %v70, %v2704
    %vm2823 = vcmp.eq.s32.totalorder %v71, %v2704
    %vm2824 = vcmp.eq.s32.totalorder %v72, %v2704
    %vm2825 = vcmp.eq.s32.totalorder %v69, %v2707
    %vm2826 = vcmp.eq.s32.totalorder %v70, %v2707
    %vm2827 = vcmp.eq.s32.totalorder %v71, %v2707
    %vm2828 = vcmp.eq.s32.totalorder %v72, %v2707
    %vm2829 = vcmp.eq.s32.totalorder %v69, %v2710
    %vm2830 = vcmp.eq.s32.totalorder %v70, %v2710
    %vm2831 = vcmp.eq.s32.totalorder %v71, %v2710
    %vm2832 = vcmp.eq.s32.totalorder %v72, %v2710
    %vm2833 = vcmp.eq.s32.totalorder %v69, %v2713
    %vm2834 = vcmp.eq.s32.totalorder %v70, %v2713
    %vm2835 = vcmp.eq.s32.totalorder %v71, %v2713
    %vm2836 = vcmp.eq.s32.totalorder %v72, %v2713
    %vm2837 = vcmp.eq.s32.totalorder %v69, %v2716
    %vm2838 = vcmp.eq.s32.totalorder %v70, %v2716
    %vm2839 = vcmp.eq.s32.totalorder %v71, %v2716
    %vm2840 = vcmp.eq.s32.totalorder %v72, %v2716
    %vm2841 = vcmp.eq.s32.totalorder %v69, %v2719
    %vm2842 = vcmp.eq.s32.totalorder %v70, %v2719
    %vm2843 = vcmp.eq.s32.totalorder %v71, %v2719
    %vm2844 = vcmp.eq.s32.totalorder %v72, %v2719
    %vm2845 = vcmp.eq.s32.totalorder %v69, %v2722
    %vm2846 = vcmp.eq.s32.totalorder %v70, %v2722
    %vm2847 = vcmp.eq.s32.totalorder %v71, %v2722
    %vm2848 = vcmp.eq.s32.totalorder %v72, %v2722
    %vm2849 = vcmp.eq.s32.totalorder %v69, %v2725
    %vm2850 = vcmp.eq.s32.totalorder %v70, %v2725
    %vm2851 = vcmp.eq.s32.totalorder %v71, %v2725
    %vm2852 = vcmp.eq.s32.totalorder %v72, %v2725
    %vm2853 = vcmp.eq.s32.totalorder %v69, %v2728
    %vm2854 = vcmp.eq.s32.totalorder %v70, %v2728
    %vm2855 = vcmp.eq.s32.totalorder %v71, %v2728
    %vm2856 = vcmp.eq.s32.totalorder %v72, %v2728
    %vm2857 = vmor %vm2473, %vm2729
    %vm2858 = vmor %vm2474, %vm2730
    %vm2859 = vmor %vm2475, %vm2731
    %vm2860 = vmor %vm2476, %vm2732
    %vm2861 = vmor %vm2477, %vm2733
    %vm2862 = vmor %vm2478, %vm2734
    %vm2863 = vmor %vm2479, %vm2735
    %vm2864 = vmor %vm2480, %vm2736
    %vm2865 = vmor %vm2481, %vm2737
    %vm2866 = vmor %vm2482, %vm2738
    %vm2867 = vmor %vm2483, %vm2739
    %vm2868 = vmor %vm2484, %vm2740
    %vm2869 = vmor %vm2485, %vm2741
    %vm2870 = vmor %vm2486, %vm2742
    %vm2871 = vmor %vm2487, %vm2743
    %vm2872 = vmor %vm2488, %vm2744
    %vm2873 = vmor %vm2489, %vm2745
    %vm2874 = vmor %vm2490, %vm2746
    %vm2875 = vmor %vm2491, %vm2747
    %vm2876 = vmor %vm2492, %vm2748
    %vm2877 = vmor %vm2493, %vm2749
    %vm2878 = vmor %vm2494, %vm2750
    %vm2879 = vmor %vm2495, %vm2751
    %vm2880 = vmor %vm2496, %vm2752
    %vm2881 = vmor %vm2497, %vm2753
    %vm2882 = vmor %vm2498, %vm2754
    %vm2883 = vmor %vm2499, %vm2755
    %vm2884 = vmor %vm2500, %vm2756
    %vm2885 = vmor %vm2501, %vm2757
    %vm2886 = vmor %vm2502, %vm2758
    %vm2887 = vmor %vm2503, %vm2759
    %vm2888 = vmor %vm2504, %vm2760
    %vm2889 = vmor %vm2505, %vm2761
    %vm2890 = vmor %vm2506, %vm2762
    %vm2891 = vmor %vm2507, %vm2763
    %vm2892 = vmor %vm2508, %vm2764
    %vm2893 = vmor %vm2509, %vm2765
    %vm2894 = vmor %vm2510, %vm2766
    %vm2895 = vmor %vm2511, %vm2767
    %vm2896 = vmor %vm2512, %vm2768
    %vm2897 = vmor %vm2513, %vm2769
    %vm2898 = vmor %vm2514, %vm2770
    %vm2899 = vmor %vm2515, %vm2771
    %vm2900 = vmor %vm2516, %vm2772
    %vm2901 = vmor %vm2517, %vm2773
    %vm2902 = vmor %vm2518, %vm2774
    %vm2903 = vmor %vm2519, %vm2775
    %vm2904 = vmor %vm2520, %vm2776
    %vm2905 = vmor %vm2521, %vm2777
    %vm2906 = vmor %vm2522, %vm2778
    %vm2907 = vmor %vm2523, %vm2779
    %vm2908 = vmor %vm2524, %vm2780
    %vm2909 = vmor %vm2525, %vm2781
    %vm2910 = vmor %vm2526, %vm2782
    %vm2911 = vmor %vm2527, %vm2783
    %vm2912 = vmor %vm2528, %vm2784
    %vm2913 = vmor %vm2529, %vm2785
    %vm2914 = vmor %vm2530, %vm2786
    %vm2915 = vmor %vm2531, %vm2787
    %vm2916 = vmor %vm2532, %vm2788
    %vm2917 = vmor %vm2533, %vm2789
    %vm2918 = vmor %vm2534, %vm2790
    %vm2919 = vmor %vm2535, %vm2791
    %vm2920 = vmor %vm2536, %vm2792
    %vm2921 = vmor %vm2537, %vm2793
    %vm2922 = vmor %vm2538, %vm2794
    %vm2923 = vmor %vm2539, %vm2795
    %vm2924 = vmor %vm2540, %vm2796
    %vm2925 = vmor %vm2541, %vm2797
    %vm2926 = vmor %vm2542, %vm2798
    %vm2927 = vmor %vm2543, %vm2799
    %vm2928 = vmor %vm2544, %vm2800
    %vm2929 = vmor %vm2545, %vm2801
    %vm2930 = vmor %vm2546, %vm2802
    %vm2931 = vmor %vm2547, %vm2803
    %vm2932 = vmor %vm2548, %vm2804
    %vm2933 = vmor %vm2549, %vm2805
    %vm2934 = vmor %vm2550, %vm2806
    %vm2935 = vmor %vm2551, %vm2807
    %vm2936 = vmor %vm2552, %vm2808
    %vm2937 = vmor %vm2553, %vm2809
    %vm2938 = vmor %vm2554, %vm2810
    %vm2939 = vmor %vm2555, %vm2811
    %vm2940 = vmor %vm2556, %vm2812
    %vm2941 = vmor %vm2557, %vm2813
    %vm2942 = vmor %vm2558, %vm2814
    %vm2943 = vmor %vm2559, %vm2815
    %vm2944 = vmor %vm2560, %vm2816
    %vm2945 = vmor %vm2561, %vm2817
    %vm2946 = vmor %vm2562, %vm2818
    %vm2947 = vmor %vm2563, %vm2819
    %vm2948 = vmor %vm2564, %vm2820
    %vm2949 = vmor %vm2565, %vm2821
    %vm2950 = vmor %vm2566, %vm2822
    %vm2951 = vmor %vm2567, %vm2823
    %vm2952 = vmor %vm2568, %vm2824
    %vm2953 = vmor %vm2569, %vm2825
    %vm2954 = vmor %vm2570, %vm2826
    %vm2955 = vmor %vm2571, %vm2827
    %vm2956 = vmor %vm2572, %vm2828
    %vm2957 = vmor %vm2573, %vm2829
    %vm2958 = vmor %vm2574, %vm2830
    %vm2959 = vmor %vm2575, %vm2831
    %vm2960 = vmor %vm2576, %vm2832
    %vm2961 = vmor %vm2577, %vm2833
    %vm2962 = vmor %vm2578, %vm2834
    %vm2963 = vmor %vm2579, %vm2835
    %vm2964 = vmor %vm2580, %vm2836
    %vm2965 = vmor %vm2581, %vm2837
    %vm2966 = vmor %vm2582, %vm2838
    %vm2967 = vmor %vm2583, %vm2839
    %vm2968 = vmor %vm2584, %vm2840
    %vm2969 = vmor %vm2585, %vm2841
    %vm2970 = vmor %vm2586, %vm2842
    %vm2971 = vmor %vm2587, %vm2843
    %vm2972 = vmor %vm2588, %vm2844
    %vm2973 = vmor %vm2589, %vm2845
    %vm2974 = vmor %vm2590, %vm2846
    %vm2975 = vmor %vm2591, %vm2847
    %vm2976 = vmor %vm2592, %vm2848
    %vm2977 = vmor %vm2593, %vm2849
    %vm2978 = vmor %vm2594, %vm2850
    %vm2979 = vmor %vm2595, %vm2851
    %vm2980 = vmor %vm2596, %vm2852
    %vm2981 = vmor %vm2597, %vm2853
    %vm2982 = vmor %vm2598, %vm2854
    %vm2983 = vmor %vm2599, %vm2855
    %vm2984 = vmor %vm2600, %vm2856
    %v2985 = vsel %vm2857, 1, 0
    %v2986 = vsel %vm2858, 1, 0
    %v2987 = vsel %vm2859, 1, 0
    %v2988 = vsel %vm2860, 1, 0
    %v2989 = vsel %vm2861, 1, 0
    %v2990 = vsel %vm2862, 1, 0
    %v2991 = vsel %vm2863, 1, 0
    %v2992 = vsel %vm2864, 1, 0
    %v2993 = vsel %vm2865, 1, 0
    %v2994 = vsel %vm2866, 1, 0
    %v2995 = vsel %vm2867, 1, 0
    %v2996 = vsel %vm2868, 1, 0
    %v2997 = vsel %vm2869, 1, 0
    %v2998 = vsel %vm2870, 1, 0
    %v2999 = vsel %vm2871, 1, 0
    %v3000 = vsel %vm2872, 1, 0
    %v3001 = vsel %vm2873, 1, 0
    %v3002 = vsel %vm2874, 1, 0
    %v3003 = vsel %vm2875, 1, 0
    %v3004 = vsel %vm2876, 1, 0
    %v3005 = vsel %vm2877, 1, 0
    %v3006 = vsel %vm2878, 1, 0
    %v3007 = vsel %vm2879, 1, 0
    %v3008 = vsel %vm2880, 1, 0
    %v3009 = vsel %vm2881, 1, 0
    %v3010 = vsel %vm2882, 1, 0
    %v3011 = vsel %vm2883, 1, 0
    %v3012 = vsel %vm2884, 1, 0
    %v3013 = vsel %vm2885, 1, 0
    %v3014 = vsel %vm2886, 1, 0
    %v3015 = vsel %vm2887, 1, 0
    %v3016 = vsel %vm2888, 1, 0
    %v3017 = vsel %vm2889, 1, 0
    %v3018 = vsel %vm2890, 1, 0
    %v3019 = vsel %vm2891, 1, 0
    %v3020 = vsel %vm2892, 1, 0
    %v3021 = vsel %vm2893, 1, 0
    %v3022 = vsel %vm2894, 1, 0
    %v3023 = vsel %vm2895, 1, 0
    %v3024 = vsel %vm2896, 1, 0
    %v3025 = vsel %vm2897, 1, 0
    %v3026 = vsel %vm2898, 1, 0
    %v3027 = vsel %vm2899, 1, 0
    %v3028 = vsel %vm2900, 1, 0
    %v3029 = vsel %vm2901, 1, 0
    %v3030 = vsel %vm2902, 1, 0
    %v3031 = vsel %vm2903, 1, 0
    %v3032 = vsel %vm2904, 1, 0
    %v3033 = vsel %vm2905, 1, 0
    %v3034 = vsel %vm2906, 1, 0
    %v3035 = vsel %vm2907, 1, 0
    %v3036 = vsel %vm2908, 1, 0
    %v3037 = vsel %vm2909, 1, 0
    %v3038 = vsel %vm2910, 1, 0
    %v3039 = vsel %vm2911, 1, 0
    %v3040 = vsel %vm2912, 1, 0
    %v3041 = vsel %vm2913, 1, 0
    %v3042 = vsel %vm2914, 1, 0
    %v3043 = vsel %vm2915, 1, 0
    %v3044 = vsel %vm2916, 1, 0
    %v3045 = vsel %vm2917, 1, 0
    %v3046 = vsel %vm2918, 1, 0
    %v3047 = vsel %vm2919, 1, 0
    %v3048 = vsel %vm2920, 1, 0
    %v3049 = vsel %vm2921, 1, 0
    %v3050 = vsel %vm2922, 1, 0
    %v3051 = vsel %vm2923, 1, 0
    %v3052 = vsel %vm2924, 1, 0
    %v3053 = vsel %vm2925, 1, 0
    %v3054 = vsel %vm2926, 1, 0
    %v3055 = vsel %vm2927, 1, 0
    %v3056 = vsel %vm2928, 1, 0
    %v3057 = vsel %vm2929, 1, 0
    %v3058 = vsel %vm2930, 1, 0
    %v3059 = vsel %vm2931, 1, 0
    %v3060 = vsel %vm2932, 1, 0
    %v3061 = vsel %vm2933, 1, 0
    %v3062 = vsel %vm2934, 1, 0
    %v3063 = vsel %vm2935, 1, 0
    %v3064 = vsel %vm2936, 1, 0
    %v3065 = vsel %vm2937, 1, 0
    %v3066 = vsel %vm2938, 1, 0
    %v3067 = vsel %vm2939, 1, 0
    %v3068 = vsel %vm2940, 1, 0
    %v3069 = vsel %vm2941, 1, 0
    %v3070 = vsel %vm2942, 1, 0
    %v3071 = vsel %vm2943, 1, 0
    %v3072 = vsel %vm2944, 1, 0
    %v3073 = vsel %vm2945, 1, 0
    %v3074 = vsel %vm2946, 1, 0
    %v3075 = vsel %vm2947, 1, 0
    %v3076 = vsel %vm2948, 1, 0
    %v3077 = vsel %vm2949, 1, 0
    %v3078 = vsel %vm2950, 1, 0
    %v3079 = vsel %vm2951, 1, 0
    %v3080 = vsel %vm2952, 1, 0
    %v3081 = vsel %vm2953, 1, 0
    %v3082 = vsel %vm2954, 1, 0
    %v3083 = vsel %vm2955, 1, 0
    %v3084 = vsel %vm2956, 1, 0
    %v3085 = vsel %vm2957, 1, 0
    %v3086 = vsel %vm2958, 1, 0
    %v3087 = vsel %vm2959, 1, 0
    %v3088 = vsel %vm2960, 1, 0
    %v3089 = vsel %vm2961, 1, 0
    %v3090 = vsel %vm2962, 1, 0
    %v3091 = vsel %vm2963, 1, 0
    %v3092 = vsel %vm2964, 1, 0
    %v3093 = vsel %vm2965, 1, 0
    %v3094 = vsel %vm2966, 1, 0
    %v3095 = vsel %vm2967, 1, 0
    %v3096 = vsel %vm2968, 1, 0
    %v3097 = vsel %vm2969, 1, 0
    %v3098 = vsel %vm2970, 1, 0
    %v3099 = vsel %vm2971, 1, 0
    %v3100 = vsel %vm2972, 1, 0
    %v3101 = vsel %vm2973, 1, 0
    %v3102 = vsel %vm2974, 1, 0
    %v3103 = vsel %vm2975, 1, 0
    %v3104 = vsel %vm2976, 1, 0
    %v3105 = vsel %vm2977, 1, 0
    %v3106 = vsel %vm2978, 1, 0
    %v3107 = vsel %vm2979, 1, 0
    %v3108 = vsel %vm2980, 1, 0
    %v3109 = vsel %vm2981, 1, 0
    %v3110 = vsel %vm2982, 1, 0
    %v3111 = vsel %vm2983, 1, 0
    %v3112 = vsel %vm2984, 1, 0
    %v3113 = vcvt.s32.f32 %v2985
    %v3114 = vcvt.s32.f32 %v2986
    %v3115 = vcvt.s32.f32 %v2987
    %v3116 = vcvt.s32.f32 %v2988
    %v3117 = vcvt.s32.f32 %v2989
    %v3118 = vcvt.s32.f32 %v2990
    %v3119 = vcvt.s32.f32 %v2991
    %v3120 = vcvt.s32.f32 %v2992
    %v3121 = vcvt.s32.f32 %v2993
    %v3122 = vcvt.s32.f32 %v2994
    %v3123 = vcvt.s32.f32 %v2995
    %v3124 = vcvt.s32.f32 %v2996
    %v3125 = vcvt.s32.f32 %v2997
    %v3126 = vcvt.s32.f32 %v2998
    %v3127 = vcvt.s32.f32 %v2999
    %v3128 = vcvt.s32.f32 %v3000
    %v3129 = vcvt.s32.f32 %v3001
    %v3130 = vcvt.s32.f32 %v3002
    %v3131 = vcvt.s32.f32 %v3003
    %v3132 = vcvt.s32.f32 %v3004
    %v3133 = vcvt.s32.f32 %v3005
    %v3134 = vcvt.s32.f32 %v3006
    %v3135 = vcvt.s32.f32 %v3007
    %v3136 = vcvt.s32.f32 %v3008
    %v3137 = vcvt.s32.f32 %v3009
    %v3138 = vcvt.s32.f32 %v3010
    %v3139 = vcvt.s32.f32 %v3011
    %v3140 = vcvt.s32.f32 %v3012
    %v3141 = vcvt.s32.f32 %v3013
    %v3142 = vcvt.s32.f32 %v3014
    %v3143 = vcvt.s32.f32 %v3015
    %v3144 = vcvt.s32.f32 %v3016
    %v3145 = vcvt.s32.f32 %v3017
    %v3146 = vcvt.s32.f32 %v3018
    %v3147 = vcvt.s32.f32 %v3019
    %v3148 = vcvt.s32.f32 %v3020
    %v3149 = vcvt.s32.f32 %v3021
    %v3150 = vcvt.s32.f32 %v3022
    %v3151 = vcvt.s32.f32 %v3023
    %v3152 = vcvt.s32.f32 %v3024
    %v3153 = vcvt.s32.f32 %v3025
    %v3154 = vcvt.s32.f32 %v3026
    %v3155 = vcvt.s32.f32 %v3027
    %v3156 = vcvt.s32.f32 %v3028
    %v3157 = vcvt.s32.f32 %v3029
    %v3158 = vcvt.s32.f32 %v3030
    %v3159 = vcvt.s32.f32 %v3031
    %v3160 = vcvt.s32.f32 %v3032
    %v3161 = vcvt.s32.f32 %v3033
    %v3162 = vcvt.s32.f32 %v3034
    %v3163 = vcvt.s32.f32 %v3035
    %v3164 = vcvt.s32.f32 %v3036
    %v3165 = vcvt.s32.f32 %v3037
    %v3166 = vcvt.s32.f32 %v3038
    %v3167 = vcvt.s32.f32 %v3039
    %v3168 = vcvt.s32.f32 %v3040
    %v3169 = vcvt.s32.f32 %v3041
    %v3170 = vcvt.s32.f32 %v3042
    %v3171 = vcvt.s32.f32 %v3043
    %v3172 = vcvt.s32.f32 %v3044
    %v3173 = vcvt.s32.f32 %v3045
    %v3174 = vcvt.s32.f32 %v3046
    %v3175 = vcvt.s32.f32 %v3047
    %v3176 = vcvt.s32.f32 %v3048
    %v3177 = vcvt.s32.f32 %v3049
    %v3178 = vcvt.s32.f32 %v3050
    %v3179 = vcvt.s32.f32 %v3051
    %v3180 = vcvt.s32.f32 %v3052
    %v3181 = vcvt.s32.f32 %v3053
    %v3182 = vcvt.s32.f32 %v3054
    %v3183 = vcvt.s32.f32 %v3055
    %v3184 = vcvt.s32.f32 %v3056
    %v3185 = vcvt.s32.f32 %v3057
    %v3186 = vcvt.s32.f32 %v3058
    %v3187 = vcvt.s32.f32 %v3059
    %v3188 = vcvt.s32.f32 %v3060
    %v3189 = vcvt.s32.f32 %v3061
    %v3190 = vcvt.s32.f32 %v3062
    %v3191 = vcvt.s32.f32 %v3063
    %v3192 = vcvt.s32.f32 %v3064
    %v3193 = vcvt.s32.f32 %v3065
    %v3194 = vcvt.s32.f32 %v3066
    %v3195 = vcvt.s32.f32 %v3067
    %v3196 = vcvt.s32.f32 %v3068
    %v3197 = vcvt.s32.f32 %v3069
    %v3198 = vcvt.s32.f32 %v3070
    %v3199 = vcvt.s32.f32 %v3071
    %v3200 = vcvt.s32.f32 %v3072
    %v3201 = vcvt.s32.f32 %v3073
    %v3202 = vcvt.s32.f32 %v3074
    %v3203 = vcvt.s32.f32 %v3075
    %v3204 = vcvt.s32.f32 %v3076
    %v3205 = vcvt.s32.f32 %v3077
    %v3206 = vcvt.s32.f32 %v3078
    %v3207 = vcvt.s32.f32 %v3079
    %v3208 = vcvt.s32.f32 %v3080
    %v3209 = vcvt.s32.f32 %v3081
    %v3210 = vcvt.s32.f32 %v3082
    %v3211 = vcvt.s32.f32 %v3083
    %v3212 = vcvt.s32.f32 %v3084
    %v3213 = vcvt.s32.f32 %v3085
    %v3214 = vcvt.s32.f32 %v3086
    %v3215 = vcvt.s32.f32 %v3087
    %v3216 = vcvt.s32.f32 %v3088
    %v3217 = vcvt.s32.f32 %v3089
    %v3218 = vcvt.s32.f32 %v3090
    %v3219 = vcvt.s32.f32 %v3091
    %v3220 = vcvt.s32.f32 %v3092
    %v3221 = vcvt.s32.f32 %v3093
    %v3222 = vcvt.s32.f32 %v3094
    %v3223 = vcvt.s32.f32 %v3095
    %v3224 = vcvt.s32.f32 %v3096
    %v3225 = vcvt.s32.f32 %v3097
    %v3226 = vcvt.s32.f32 %v3098
    %v3227 = vcvt.s32.f32 %v3099
    %v3228 = vcvt.s32.f32 %v3100
    %v3229 = vcvt.s32.f32 %v3101
    %v3230 = vcvt.s32.f32 %v3102
    %v3231 = vcvt.s32.f32 %v3103
    %v3232 = vcvt.s32.f32 %v3104
    %v3233 = vcvt.s32.f32 %v3105
    %v3234 = vcvt.s32.f32 %v3106
    %v3235 = vcvt.s32.f32 %v3107
    %v3236 = vcvt.s32.f32 %v3108
    %v3237 = vcvt.s32.f32 %v3109
    %v3238 = vcvt.s32.f32 %v3110
    %v3239 = vcvt.s32.f32 %v3111
    %v3240 = vcvt.s32.f32 %v3112
    %v3241 = vpack.c.bf16 %v3117, %v3113
    %v3242 = vpack.c.bf16 %v3118, %v3114
    %v3243 = vpack.c.bf16 %v3119, %v3115
    %v3244 = vpack.c.bf16 %v3120, %v3116
    %v3245 = vpack.c.bf16 %v3125, %v3121
    %v3246 = vpack.c.bf16 %v3126, %v3122
    %v3247 = vpack.c.bf16 %v3127, %v3123
    %v3248 = vpack.c.bf16 %v3128, %v3124
    %v3249 = vpack.c.bf16 %v3133, %v3129
    %v3250 = vpack.c.bf16 %v3134, %v3130
    %v3251 = vpack.c.bf16 %v3135, %v3131
    %v3252 = vpack.c.bf16 %v3136, %v3132
    %v3253 = vpack.c.bf16 %v3141, %v3137
    %v3254 = vpack.c.bf16 %v3142, %v3138
    %v3255 = vpack.c.bf16 %v3143, %v3139
    %v3256 = vpack.c.bf16 %v3144, %v3140
    %v3257 = vpack.c.bf16 %v3149, %v3145
    %v3258 = vpack.c.bf16 %v3150, %v3146
    %v3259 = vpack.c.bf16 %v3151, %v3147
    %v3260 = vpack.c.bf16 %v3152, %v3148
    %v3261 = vpack.c.bf16 %v3157, %v3153
    %v3262 = vpack.c.bf16 %v3158, %v3154
    %v3263 = vpack.c.bf16 %v3159, %v3155
    %v3264 = vpack.c.bf16 %v3160, %v3156
    %v3265 = vpack.c.bf16 %v3165, %v3161
    %v3266 = vpack.c.bf16 %v3166, %v3162
    %v3267 = vpack.c.bf16 %v3167, %v3163
    %v3268 = vpack.c.bf16 %v3168, %v3164
    %v3269 = vpack.c.bf16 %v3173, %v3169
    %v3270 = vpack.c.bf16 %v3174, %v3170
    %v3271 = vpack.c.bf16 %v3175, %v3171
    %v3272 = vpack.c.bf16 %v3176, %v3172
    %v3273 = vpack.c.bf16 %v3181, %v3177
    %v3274 = vpack.c.bf16 %v3182, %v3178
    %v3275 = vpack.c.bf16 %v3183, %v3179
    %v3276 = vpack.c.bf16 %v3184, %v3180
    %v3277 = vpack.c.bf16 %v3189, %v3185
    %v3278 = vpack.c.bf16 %v3190, %v3186
    %v3279 = vpack.c.bf16 %v3191, %v3187
    %v3280 = vpack.c.bf16 %v3192, %v3188
    %v3281 = vpack.c.bf16 %v3197, %v3193
    %v3282 = vpack.c.bf16 %v3198, %v3194
    %v3283 = vpack.c.bf16 %v3199, %v3195
    %v3284 = vpack.c.bf16 %v3200, %v3196
    %v3285 = vpack.c.bf16 %v3205, %v3201
    %v3286 = vpack.c.bf16 %v3206, %v3202
    %v3287 = vpack.c.bf16 %v3207, %v3203
    %v3288 = vpack.c.bf16 %v3208, %v3204
    %v3289 = vpack.c.bf16 %v3213, %v3209
    %v3290 = vpack.c.bf16 %v3214, %v3210
    %v3291 = vpack.c.bf16 %v3215, %v3211
    %v3292 = vpack.c.bf16 %v3216, %v3212
    %v3293 = vpack.c.bf16 %v3221, %v3217
    %v3294 = vpack.c.bf16 %v3222, %v3218
    %v3295 = vpack.c.bf16 %v3223, %v3219
    %v3296 = vpack.c.bf16 %v3224, %v3220
    %v3297 = vpack.c.bf16 %v3229, %v3225
    %v3298 = vpack.c.bf16 %v3230, %v3226
    %v3299 = vpack.c.bf16 %v3231, %v3227
    %v3300 = vpack.c.bf16 %v3232, %v3228
    %v3301 = vpack.c.bf16 %v3237, %v3233
    %v3302 = vpack.c.bf16 %v3238, %v3234
    %v3303 = vpack.c.bf16 %v3239, %v3235
    %v3304 = vpack.c.bf16 %v3240, %v3236
    %v3305 = vld [vmem:[%s1] sm:$0xf]
    %v3306 = vld [vmem:[%s1 + $0x4] sm:$0xf]
    %v3307 = vld [vmem:[%s1 + $0x8] sm:$0xf]
    %v3308 = vld [vmem:[%s1 + $0xc] sm:$0xf]
    %v3309 = vld [vmem:[%s1 + $0x10] sm:$0xf]
    %v3310 = vld [vmem:[%s1 + $0x14] sm:$0xf]
    %v3311 = vld [vmem:[%s1 + $0x18] sm:$0xf]
    %v3312 = vld [vmem:[%s1 + $0x1c] sm:$0xf]
    %v3313 = vld [vmem:[%s1 + $0x20] sm:$0xf]
    %v3314 = vld [vmem:[%s1 + $0x24] sm:$0xf]
    %v3315 = vld [vmem:[%s1 + $0x28] sm:$0xf]
    %v3316 = vld [vmem:[%s1 + $0x2c] sm:$0xf]
    %v3317 = vld [vmem:[%s1 + $0x30] sm:$0xf]
    %v3318 = vld [vmem:[%s1 + $0x34] sm:$0xf]
    %v3319 = vld [vmem:[%s1 + $0x38] sm:$0xf]
    %v3320 = vld [vmem:[%s1 + $0x3c] sm:$0xf]
    %v3321 = vld [vmem:[%s1 + $0x40] sm:$0xf]
    %v3322 = vld [vmem:[%s1 + $0x44] sm:$0xf]
    %v3323 = vld [vmem:[%s1 + $0x48] sm:$0xf]
    %v3324 = vld [vmem:[%s1 + $0x4c] sm:$0xf]
    %v3325 = vld [vmem:[%s1 + $0x50] sm:$0xf]
    %v3326 = vld [vmem:[%s1 + $0x54] sm:$0xf]
    %v3327 = vld [vmem:[%s1 + $0x58] sm:$0xf]
    %v3328 = vld [vmem:[%s1 + $0x5c] sm:$0xf]
    %v3329 = vld [vmem:[%s1 + $0x60] sm:$0xf]
    %v3330 = vld [vmem:[%s1 + $0x64] sm:$0xf]
    %v3331 = vld [vmem:[%s1 + $0x68] sm:$0xf]
    %v3332 = vld [vmem:[%s1 + $0x6c] sm:$0xf]
    %v3333 = vld [vmem:[%s1 + $0x70] sm:$0xf]
    %v3334 = vld [vmem:[%s1 + $0x74] sm:$0xf]
    %v3335 = vld [vmem:[%s1 + $0x78] sm:$0xf]
    %v3336 = vld [vmem:[%s1 + $0x7c] sm:$0xf]
    %v3337 = vld [vmem:[%s1 + $0x80] sm:$0xf]
    %v3338 = vld [vmem:[%s1 + $0x84] sm:$0xf]
    %v3339 = vld [vmem:[%s1 + $0x88] sm:$0xf]
    %v3340 = vld [vmem:[%s1 + $0x8c] sm:$0xf]
    %v3341 = vld [vmem:[%s1 + $0x90] sm:$0xf]
    %v3342 = vld [vmem:[%s1 + $0x94] sm:$0xf]
    %v3343 = vld [vmem:[%s1 + $0x98] sm:$0xf]
    %v3344 = vld [vmem:[%s1 + $0x9c] sm:$0xf]
    %v3345 = vld [vmem:[%s1 + $0xa0] sm:$0xf]
    %v3346 = vld [vmem:[%s1 + $0xa4] sm:$0xf]
    %v3347 = vld [vmem:[%s1 + $0xa8] sm:$0xf]
    %v3348 = vld [vmem:[%s1 + $0xac] sm:$0xf]
    %v3349 = vld [vmem:[%s1 + $0xb0] sm:$0xf]
    %v3350 = vld [vmem:[%s1 + $0xb4] sm:$0xf]
    %v3351 = vld [vmem:[%s1 + $0xb8] sm:$0xf]
    %v3352 = vld [vmem:[%s1 + $0xbc] sm:$0xf]
    %v3353 = vld [vmem:[%s1 + $0xc0] sm:$0xf]
    %v3354 = vld [vmem:[%s1 + $0xc4] sm:$0xf]
    %v3355 = vld [vmem:[%s1 + $0xc8] sm:$0xf]
    %v3356 = vld [vmem:[%s1 + $0xcc] sm:$0xf]
    %v3357 = vld [vmem:[%s1 + $0xd0] sm:$0xf]
    %v3358 = vld [vmem:[%s1 + $0xd4] sm:$0xf]
    %v3359 = vld [vmem:[%s1 + $0xd8] sm:$0xf]
    %v3360 = vld [vmem:[%s1 + $0xdc] sm:$0xf]
    %v3361 = vld [vmem:[%s1 + $0xe0] sm:$0xf]
    %v3362 = vld [vmem:[%s1 + $0xe4] sm:$0xf]
    %v3363 = vld [vmem:[%s1 + $0xe8] sm:$0xf]
    %v3364 = vld [vmem:[%s1 + $0xec] sm:$0xf]
    %v3365 = vld [vmem:[%s1 + $0xf0] sm:$0xf]
    %v3366 = vld [vmem:[%s1 + $0xf4] sm:$0xf]
    %v3367 = vld [vmem:[%s1 + $0xf8] sm:$0xf]
    %v3368 = vld [vmem:[%s1 + $0xfc] sm:$0xf]
    %v3369 = vld [vmem:[%s2] sm:$0x1]
    %v3371 = vlaneseq
    %v3372 = vshrl.u32 %v3371, 7
    %v3373 = vsub.s32 0, %v3372
    %v3374 = vrot.slane %v3369, %v3373
    %v3440 = vunpack.c.l.b16 %v3305
    %v3441 = vunpack.c.l.b16 %v3306
    %v3442 = vunpack.c.l.b16 %v3307
    %v3443 = vunpack.c.l.b16 %v3308
    %v3444 = vunpack.c.l.b16 %v3309
    %v3445 = vunpack.c.l.b16 %v3310
    %v3446 = vunpack.c.l.b16 %v3311
    %v3447 = vunpack.c.l.b16 %v3312
    %v3448 = vunpack.c.l.b16 %v3313
    %v3449 = vunpack.c.l.b16 %v3314
    %v3450 = vunpack.c.l.b16 %v3315
    %v3451 = vunpack.c.l.b16 %v3316
    %v3452 = vunpack.c.l.b16 %v3317
    %v3453 = vunpack.c.l.b16 %v3318
    %v3454 = vunpack.c.l.b16 %v3319
    %v3455 = vunpack.c.l.b16 %v3320
    %v3456 = vunpack.c.l.b16 %v3321
    %v3457 = vunpack.c.l.b16 %v3322
    %v3458 = vunpack.c.l.b16 %v3323
    %v3459 = vunpack.c.l.b16 %v3324
    %v3460 = vunpack.c.l.b16 %v3325
    %v3461 = vunpack.c.l.b16 %v3326
    %v3462 = vunpack.c.l.b16 %v3327
    %v3463 = vunpack.c.l.b16 %v3328
    %v3464 = vunpack.c.l.b16 %v3329
    %v3465 = vunpack.c.l.b16 %v3330
    %v3466 = vunpack.c.l.b16 %v3331
    %v3467 = vunpack.c.l.b16 %v3332
    %v3468 = vunpack.c.l.b16 %v3333
    %v3469 = vunpack.c.l.b16 %v3334
    %v3470 = vunpack.c.l.b16 %v3335
    %v3471 = vunpack.c.l.b16 %v3336
    %v3472 = vunpack.c.l.b16 %v3337
    %v3473 = vunpack.c.l.b16 %v3338
    %v3474 = vunpack.c.l.b16 %v3339
    %v3475 = vunpack.c.l.b16 %v3340
    %v3476 = vunpack.c.l.b16 %v3341
    %v3477 = vunpack.c.l.b16 %v3342
    %v3478 = vunpack.c.l.b16 %v3343
    %v3479 = vunpack.c.l.b16 %v3344
    %v3480 = vunpack.c.l.b16 %v3345
    %v3481 = vunpack.c.l.b16 %v3346
    %v3482 = vunpack.c.l.b16 %v3347
    %v3483 = vunpack.c.l.b16 %v3348
    %v3484 = vunpack.c.l.b16 %v3349
    %v3485 = vunpack.c.l.b16 %v3350
    %v3486 = vunpack.c.l.b16 %v3351
    %v3487 = vunpack.c.l.b16 %v3352
    %v3488 = vunpack.c.l.b16 %v3353
    %v3489 = vunpack.c.l.b16 %v3354
    %v3490 = vunpack.c.l.b16 %v3355
    %v3491 = vunpack.c.l.b16 %v3356
    %v3492 = vunpack.c.l.b16 %v3357
    %v3493 = vunpack.c.l.b16 %v3358
    %v3494 = vunpack.c.l.b16 %v3359
    %v3495 = vunpack.c.l.b16 %v3360
    %v3496 = vunpack.c.l.b16 %v3361
    %v3497 = vunpack.c.l.b16 %v3362
    %v3498 = vunpack.c.l.b16 %v3363
    %v3499 = vunpack.c.l.b16 %v3364
    %v3500 = vunpack.c.l.b16 %v3365
    %v3501 = vunpack.c.l.b16 %v3366
    %v3502 = vunpack.c.l.b16 %v3367
    %v3503 = vunpack.c.l.b16 %v3368
    %v3504 = vpack.c.b16 %v3441, %v3440
    %v3505 = vpack.c.b16 %v3443, %v3442
    %v3506 = vpack.c.b16 %v3445, %v3444
    %v3507 = vpack.c.b16 %v3447, %v3446
    %v3508 = vpack.c.b16 %v3449, %v3448
    %v3509 = vpack.c.b16 %v3451, %v3450
    %v3510 = vpack.c.b16 %v3453, %v3452
    %v3511 = vpack.c.b16 %v3455, %v3454
    %v3512 = vpack.c.b16 %v3457, %v3456
    %v3513 = vpack.c.b16 %v3459, %v3458
    %v3514 = vpack.c.b16 %v3461, %v3460
    %v3515 = vpack.c.b16 %v3463, %v3462
    %v3516 = vpack.c.b16 %v3465, %v3464
    %v3517 = vpack.c.b16 %v3467, %v3466
    %v3518 = vpack.c.b16 %v3469, %v3468
    %v3519 = vpack.c.b16 %v3471, %v3470
    %v3520 = vpack.c.b16 %v3473, %v3472
    %v3521 = vpack.c.b16 %v3475, %v3474
    %v3522 = vpack.c.b16 %v3477, %v3476
    %v3523 = vpack.c.b16 %v3479, %v3478
    %v3524 = vpack.c.b16 %v3481, %v3480
    %v3525 = vpack.c.b16 %v3483, %v3482
    %v3526 = vpack.c.b16 %v3485, %v3484
    %v3527 = vpack.c.b16 %v3487, %v3486
    %v3528 = vpack.c.b16 %v3489, %v3488
    %v3529 = vpack.c.b16 %v3491, %v3490
    %v3530 = vpack.c.b16 %v3493, %v3492
    %v3531 = vpack.c.b16 %v3495, %v3494
    %v3532 = vpack.c.b16 %v3497, %v3496
    %v3533 = vpack.c.b16 %v3499, %v3498
    %v3534 = vpack.c.b16 %v3501, %v3500
    %v3535 = vpack.c.b16 %v3503, %v3502
    %3568 = vmatprep.subr.bf16.mxu0 0
    %3569 = vmatpush1.bf16.msra.mxu0 %v3504
    %3570 = vmatprep.subr.bf16.mxu0 0
    %3571 = vmatpush1.bf16.msra.mxu0 %v3505
    %3572 = vmatprep.subr.bf16.mxu0 0
    %3573 = vmatpush1.bf16.msra.mxu0 %v3506
    %3574 = vmatprep.subr.bf16.mxu0 0
    %3575 = vmatpush1.bf16.msra.mxu0 %v3507
    %3576 = vmatprep.subr.bf16.mxu0 0
    %3577 = vmatpush1.bf16.msra.mxu0 %v3508
    %3578 = vmatprep.subr.bf16.mxu0 0
    %3579 = vmatpush1.bf16.msra.mxu0 %v3509
    %3580 = vmatprep.subr.bf16.mxu0 0
    %3581 = vmatpush1.bf16.msra.mxu0 %v3510
    %3582 = vmatprep.subr.bf16.mxu0 0
    %3583 = vmatpush1.bf16.msra.mxu0 %v3511
    %3584 = vmatprep.subr.bf16.mxu0 0
    %3585 = vmatpush1.bf16.msra.mxu0 %v3512
    %3586 = vmatprep.subr.bf16.mxu0 0
    %3587 = vmatpush1.bf16.msra.mxu0 %v3513
    %3588 = vmatprep.subr.bf16.mxu0 0
    %3589 = vmatpush1.bf16.msra.mxu0 %v3514
    %3590 = vmatprep.subr.bf16.mxu0 0
    %3591 = vmatpush1.bf16.msra.mxu0 %v3515
    %3592 = vmatprep.subr.bf16.mxu0 0
    %3593 = vmatpush1.bf16.msra.mxu0 %v3516
    %3594 = vmatprep.subr.bf16.mxu0 0
    %3595 = vmatpush1.bf16.msra.mxu0 %v3517
    %3596 = vmatprep.subr.bf16.mxu0 0
    %3597 = vmatpush1.bf16.msra.mxu0 %v3518
    %3598 = vmatprep.subr.bf16.mxu0 0
    %3599 = vmatpush1.bf16.msra.mxu0 %v3519
    %3600 = vmatprep.mubr.bf16.mxu0 %v3242
    %3601 = vmatmul.mubr.bf16.gmra.mrb[0].mxu0 %v3241
    %v3602 = vpop.f32.mrb[0].mxu0
    %v3603 = vadd.f32 %v3374, %v3602
    %v3604 = vpop.f32.mrb[0].mxu0
    %v3605 = vpop.f32.mrb[0].mxu0
    %v3606 = vadd.f32 %v3374, %v3605
    %v3607 = vpop.f32.mrb[0].mxu0
    %3608 = vmatprep.mubr.bf16.mxu0 %v3246
    %3609 = vmatmul.mubr.bf16.gmra.mrb[0].mxu0 %v3245
    %v3610 = vpop.f32.mrb[0].mxu0
    %v3611 = vadd.f32 %v3374, %v3610
    %v3612 = vpop.f32.mrb[0].mxu0
    %v3613 = vpop.f32.mrb[0].mxu0
    %v3614 = vadd.f32 %v3374, %v3613
    %v3615 = vpop.f32.mrb[0].mxu0
    %3616 = vmatprep.mubr.bf16.mxu0 %v3250
    %3617 = vmatmul.mubr.bf16.gmra.mrb[0].mxu0 %v3249
    %v3618 = vpop.f32.mrb[0].mxu0
    %v3619 = vadd.f32 %v3374, %v3618
    %v3620 = vpop.f32.mrb[0].mxu0
    %v3621 = vpop.f32.mrb[0].mxu0
    %v3622 = vadd.f32 %v3374, %v3621
    %v3623 = vpop.f32.mrb[0].mxu0
    %3624 = vmatprep.mubr.bf16.mxu0 %v3254
    %3625 = vmatmul.mubr.bf16.gmra.mrb[0].mxu0 %v3253
    %v3626 = vpop.f32.mrb[0].mxu0
    %v3627 = vadd.f32 %v3374, %v3626
    %v3628 = vpop.f32.mrb[0].mxu0
    %v3629 = vpop.f32.mrb[0].mxu0
    %v3630 = vadd.f32 %v3374, %v3629
    %v3631 = vpop.f32.mrb[0].mxu0
    %3632 = vmatprep.mubr.bf16.mxu0 %v3258
    %3633 = vmatmul.mubr.bf16.gmra.mrb[0].mxu0 %v3257
    %v3634 = vpop.f32.mrb[0].mxu0
    %v3635 = vadd.f32 %v3374, %v3634
    %v3636 = vpop.f32.mrb[0].mxu0
    %v3637 = vpop.f32.mrb[0].mxu0
    %v3638 = vadd.f32 %v3374, %v3637
    %v3639 = vpop.f32.mrb[0].mxu0
    %3640 = vmatprep.mubr.bf16.mxu0 %v3262
    %3641 = vmatmul.mubr.bf16.gmra.mrb[0].mxu0 %v3261
    %v3642 = vpop.f32.mrb[0].mxu0
    %v3643 = vadd.f32 %v3374, %v3642
    %v3644 = vpop.f32.mrb[0].mxu0
    %v3645 = vpop.f32.mrb[0].mxu0
    %v3646 = vadd.f32 %v3374, %v3645
    %v3647 = vpop.f32.mrb[0].mxu0
    %3648 = vmatprep.mubr.bf16.mxu0 %v3266
    %3649 = vmatmul.mubr.bf16.gmra.mrb[0].mxu0 %v3265
    %v3650 = vpop.f32.mrb[0].mxu0
    %v3651 = vadd.f32 %v3374, %v3650
    %v3652 = vpop.f32.mrb[0].mxu0
    %v3653 = vpop.f32.mrb[0].mxu0
    %v3654 = vadd.f32 %v3374, %v3653
    %v3655 = vpop.f32.mrb[0].mxu0
    %3656 = vmatprep.mubr.bf16.mxu0 %v3270
    %3657 = vmatmul.mubr.bf16.gmra.mrb[0].mxu0 %v3269
    %v3658 = vpop.f32.mrb[0].mxu0
    %v3659 = vadd.f32 %v3374, %v3658
    %v3660 = vpop.f32.mrb[0].mxu0
    %v3661 = vpop.f32.mrb[0].mxu0
    %v3662 = vadd.f32 %v3374, %v3661
    %v3663 = vpop.f32.mrb[0].mxu0
    %3664 = vmatprep.mubr.bf16.mxu0 %v3274
    %3665 = vmatmul.mubr.bf16.gmra.mrb[0].mxu0 %v3273
    %v3666 = vpop.f32.mrb[0].mxu0
    %v3667 = vadd.f32 %v3374, %v3666
    %v3668 = vpop.f32.mrb[0].mxu0
    %v3669 = vpop.f32.mrb[0].mxu0
    %v3670 = vadd.f32 %v3374, %v3669
    %v3671 = vpop.f32.mrb[0].mxu0
    %3672 = vmatprep.mubr.bf16.mxu0 %v3278
    %3673 = vmatmul.mubr.bf16.gmra.mrb[0].mxu0 %v3277
    %v3674 = vpop.f32.mrb[0].mxu0
    %v3675 = vadd.f32 %v3374, %v3674
    %v3676 = vpop.f32.mrb[0].mxu0
    %v3677 = vpop.f32.mrb[0].mxu0
    %v3678 = vadd.f32 %v3374, %v3677
    %v3679 = vpop.f32.mrb[0].mxu0
    %3680 = vmatprep.mubr.bf16.mxu0 %v3282
    %3681 = vmatmul.mubr.bf16.gmra.mrb[0].mxu0 %v3281
    %v3682 = vpop.f32.mrb[0].mxu0
    %v3683 = vadd.f32 %v3374, %v3682
    %v3684 = vpop.f32.mrb[0].mxu0
    %v3685 = vpop.f32.mrb[0].mxu0
    %v3686 = vadd.f32 %v3374, %v3685
    %v3687 = vpop.f32.mrb[0].mxu0
    %3688 = vmatprep.mubr.bf16.mxu0 %v3286
    %3689 = vmatmul.mubr.bf16.gmra.mrb[0].mxu0 %v3285
    %v3690 = vpop.f32.mrb[0].mxu0
    %v3691 = vadd.f32 %v3374, %v3690
    %v3692 = vpop.f32.mrb[0].mxu0
    %v3693 = vpop.f32.mrb[0].mxu0
    %v3694 = vadd.f32 %v3374, %v3693
    %v3695 = vpop.f32.mrb[0].mxu0
    %3696 = vmatprep.mubr.bf16.mxu0 %v3290
    %3697 = vmatmul.mubr.bf16.gmra.mrb[0].mxu0 %v3289
    %v3698 = vpop.f32.mrb[0].mxu0
    %v3699 = vadd.f32 %v3374, %v3698
    %v3700 = vpop.f32.mrb[0].mxu0
    %v3701 = vpop.f32.mrb[0].mxu0
    %v3702 = vadd.f32 %v3374, %v3701
    %v3703 = vpop.f32.mrb[0].mxu0
    %3704 = vmatprep.mubr.bf16.mxu0 %v3294
    %3705 = vmatmul.mubr.bf16.gmra.mrb[0].mxu0 %v3293
    %v3706 = vpop.f32.mrb[0].mxu0
    %v3707 = vadd.f32 %v3374, %v3706
    %v3708 = vpop.f32.mrb[0].mxu0
    %v3709 = vpop.f32.mrb[0].mxu0
    %v3710 = vadd.f32 %v3374, %v3709
    %v3711 = vpop.f32.mrb[0].mxu0
    %3712 = vmatprep.mubr.bf16.mxu0 %v3298
    %3713 = vmatmul.mubr.bf16.gmra.mrb[0].mxu0 %v3297
    %v3714 = vpop.f32.mrb[0].mxu0
    %v3715 = vadd.f32 %v3374, %v3714
    %v3716 = vpop.f32.mrb[0].mxu0
    %v3717 = vpop.f32.mrb[0].mxu0
    %v3718 = vadd.f32 %v3374, %v3717
    %v3719 = vpop.f32.mrb[0].mxu0
    %3720 = vmatprep.mubr.bf16.mxu0 %v3302
    %3721 = vmatmul.mubr.bf16.gmra.mrb[0].mxu0 %v3301
    %v3722 = vpop.f32.mrb[0].mxu0
    %v3723 = vadd.f32 %v3374, %v3722
    %v3724 = vpop.f32.mrb[0].mxu0
    %v3725 = vpop.f32.mrb[0].mxu0
    %v3726 = vadd.f32 %v3374, %v3725
    %v3727 = vpop.f32.mrb[0].mxu0
    %3728 = vdwg.mxu0
    %3729 = vmatprep.subr.bf16.mxu0 0
    %3730 = vmatpush1.bf16.msra.mxu0 %v3520
    %3731 = vmatprep.subr.bf16.mxu0 0
    %3732 = vmatpush1.bf16.msra.mxu0 %v3521
    %3733 = vmatprep.subr.bf16.mxu0 0
    %3734 = vmatpush1.bf16.msra.mxu0 %v3522
    %3735 = vmatprep.subr.bf16.mxu0 0
    %3736 = vmatpush1.bf16.msra.mxu0 %v3523
    %3737 = vmatprep.subr.bf16.mxu0 0
    %3738 = vmatpush1.bf16.msra.mxu0 %v3524
    %3739 = vmatprep.subr.bf16.mxu0 0
    %3740 = vmatpush1.bf16.msra.mxu0 %v3525
    %3741 = vmatprep.subr.bf16.mxu0 0
    %3742 = vmatpush1.bf16.msra.mxu0 %v3526
    %3743 = vmatprep.subr.bf16.mxu0 0
    %3744 = vmatpush1.bf16.msra.mxu0 %v3527
    %3745 = vmatprep.subr.bf16.mxu0 0
    %3746 = vmatpush1.bf16.msra.mxu0 %v3528
    %3747 = vmatprep.subr.bf16.mxu0 0
    %3748 = vmatpush1.bf16.msra.mxu0 %v3529
    %3749 = vmatprep.subr.bf16.mxu0 0
    %3750 = vmatpush1.bf16.msra.mxu0 %v3530
    %3751 = vmatprep.subr.bf16.mxu0 0
    %3752 = vmatpush1.bf16.msra.mxu0 %v3531
    %3753 = vmatprep.subr.bf16.mxu0 0
    %3754 = vmatpush1.bf16.msra.mxu0 %v3532
    %3755 = vmatprep.subr.bf16.mxu0 0
    %3756 = vmatpush1.bf16.msra.mxu0 %v3533
    %3757 = vmatprep.subr.bf16.mxu0 0
    %3758 = vmatpush1.bf16.msra.mxu0 %v3534
    %3759 = vmatprep.subr.bf16.mxu0 0
    %3760 = vmatpush1.bf16.msra.mxu0 %v3535
    %3761 = vmatprep.mubr.bf16.mxu0 %v3244
    %3762 = vmatmul.mubr.bf16.gmra.mrb[0].mxu0 %v3243
    %v3763 = vpop.f32.mrb[0].mxu0
    %v3764 = vadd.f32 %v3603, %v3763
    %v3765 = vpop.f32.mrb[0].mxu0
    %v3766 = vpop.f32.mrb[0].mxu0
    %v3767 = vadd.f32 %v3606, %v3766
    %v3768 = vpop.f32.mrb[0].mxu0
    %3769 = vmatprep.mubr.bf16.mxu0 %v3248
    %3770 = vmatmul.mubr.bf16.gmra.mrb[0].mxu0 %v3247
    %v3771 = vpop.f32.mrb[0].mxu0
    %v3772 = vadd.f32 %v3611, %v3771
    %v3773 = vpop.f32.mrb[0].mxu0
    %v3774 = vpop.f32.mrb[0].mxu0
    %v3775 = vadd.f32 %v3614, %v3774
    %v3776 = vpop.f32.mrb[0].mxu0
    %3777 = vmatprep.mubr.bf16.mxu0 %v3252
    %3778 = vmatmul.mubr.bf16.gmra.mrb[0].mxu0 %v3251
    %v3779 = vpop.f32.mrb[0].mxu0
    %v3780 = vadd.f32 %v3619, %v3779
    %v3781 = vpop.f32.mrb[0].mxu0
    %v3782 = vpop.f32.mrb[0].mxu0
    %v3783 = vadd.f32 %v3622, %v3782
    %v3784 = vpop.f32.mrb[0].mxu0
    %3785 = vmatprep.mubr.bf16.mxu0 %v3256
    %3786 = vmatmul.mubr.bf16.gmra.mrb[0].mxu0 %v3255
    %v3787 = vpop.f32.mrb[0].mxu0
    %v3788 = vadd.f32 %v3627, %v3787
    %v3789 = vpop.f32.mrb[0].mxu0
    %v3790 = vpop.f32.mrb[0].mxu0
    %v3791 = vadd.f32 %v3630, %v3790
    %v3792 = vpop.f32.mrb[0].mxu0
    %3793 = vmatprep.mubr.bf16.mxu0 %v3260
    %3794 = vmatmul.mubr.bf16.gmra.mrb[0].mxu0 %v3259
    %v3795 = vpop.f32.mrb[0].mxu0
    %v3796 = vadd.f32 %v3635, %v3795
    %v3797 = vpop.f32.mrb[0].mxu0
    %v3798 = vpop.f32.mrb[0].mxu0
    %v3799 = vadd.f32 %v3638, %v3798
    %v3800 = vpop.f32.mrb[0].mxu0
    %3801 = vmatprep.mubr.bf16.mxu0 %v3264
    %3802 = vmatmul.mubr.bf16.gmra.mrb[0].mxu0 %v3263
    %v3803 = vpop.f32.mrb[0].mxu0
    %v3804 = vadd.f32 %v3643, %v3803
    %v3805 = vpop.f32.mrb[0].mxu0
    %v3806 = vpop.f32.mrb[0].mxu0
    %v3807 = vadd.f32 %v3646, %v3806
    %v3808 = vpop.f32.mrb[0].mxu0
    %3809 = vmatprep.mubr.bf16.mxu0 %v3268
    %3810 = vmatmul.mubr.bf16.gmra.mrb[0].mxu0 %v3267
    %v3811 = vpop.f32.mrb[0].mxu0
    %v3812 = vadd.f32 %v3651, %v3811
    %v3813 = vpop.f32.mrb[0].mxu0
    %v3814 = vpop.f32.mrb[0].mxu0
    %v3815 = vadd.f32 %v3654, %v3814
    %v3816 = vpop.f32.mrb[0].mxu0
    %3817 = vmatprep.mubr.bf16.mxu0 %v3272
    %3818 = vmatmul.mubr.bf16.gmra.mrb[0].mxu0 %v3271
    %v3819 = vpop.f32.mrb[0].mxu0
    %v3820 = vadd.f32 %v3659, %v3819
    %v3821 = vpop.f32.mrb[0].mxu0
    %v3822 = vpop.f32.mrb[0].mxu0
    %v3823 = vadd.f32 %v3662, %v3822
    %v3824 = vpop.f32.mrb[0].mxu0
    %3825 = vmatprep.mubr.bf16.mxu0 %v3276
    %3826 = vmatmul.mubr.bf16.gmra.mrb[0].mxu0 %v3275
    %v3827 = vpop.f32.mrb[0].mxu0
    %v3828 = vadd.f32 %v3667, %v3827
    %v3829 = vpop.f32.mrb[0].mxu0
    %v3830 = vpop.f32.mrb[0].mxu0
    %v3831 = vadd.f32 %v3670, %v3830
    %v3832 = vpop.f32.mrb[0].mxu0
    %3833 = vmatprep.mubr.bf16.mxu0 %v3280
    %3834 = vmatmul.mubr.bf16.gmra.mrb[0].mxu0 %v3279
    %v3835 = vpop.f32.mrb[0].mxu0
    %v3836 = vadd.f32 %v3675, %v3835
    %v3837 = vpop.f32.mrb[0].mxu0
    %v3838 = vpop.f32.mrb[0].mxu0
    %v3839 = vadd.f32 %v3678, %v3838
    %v3840 = vpop.f32.mrb[0].mxu0
    %3841 = vmatprep.mubr.bf16.mxu0 %v3284
    %3842 = vmatmul.mubr.bf16.gmra.mrb[0].mxu0 %v3283
    %v3843 = vpop.f32.mrb[0].mxu0
    %v3844 = vadd.f32 %v3683, %v3843
    %v3845 = vpop.f32.mrb[0].mxu0
    %v3846 = vpop.f32.mrb[0].mxu0
    %v3847 = vadd.f32 %v3686, %v3846
    %v3848 = vpop.f32.mrb[0].mxu0
    %3849 = vmatprep.mubr.bf16.mxu0 %v3288
    %3850 = vmatmul.mubr.bf16.gmra.mrb[0].mxu0 %v3287
    %v3851 = vpop.f32.mrb[0].mxu0
    %v3852 = vadd.f32 %v3691, %v3851
    %v3853 = vpop.f32.mrb[0].mxu0
    %v3854 = vpop.f32.mrb[0].mxu0
    %v3855 = vadd.f32 %v3694, %v3854
    %v3856 = vpop.f32.mrb[0].mxu0
    %3857 = vmatprep.mubr.bf16.mxu0 %v3292
    %3858 = vmatmul.mubr.bf16.gmra.mrb[0].mxu0 %v3291
    %v3859 = vpop.f32.mrb[0].mxu0
    %v3860 = vadd.f32 %v3699, %v3859
    %v3861 = vpop.f32.mrb[0].mxu0
    %v3862 = vpop.f32.mrb[0].mxu0
    %v3863 = vadd.f32 %v3702, %v3862
    %v3864 = vpop.f32.mrb[0].mxu0
    %3865 = vmatprep.mubr.bf16.mxu0 %v3296
    %3866 = vmatmul.mubr.bf16.gmra.mrb[0].mxu0 %v3295
    %v3867 = vpop.f32.mrb[0].mxu0
    %v3868 = vadd.f32 %v3707, %v3867
    %v3869 = vpop.f32.mrb[0].mxu0
    %v3870 = vpop.f32.mrb[0].mxu0
    %v3871 = vadd.f32 %v3710, %v3870
    %v3872 = vpop.f32.mrb[0].mxu0
    %3873 = vmatprep.mubr.bf16.mxu0 %v3300
    %3874 = vmatmul.mubr.bf16.gmra.mrb[0].mxu0 %v3299
    %v3875 = vpop.f32.mrb[0].mxu0
    %v3876 = vadd.f32 %v3715, %v3875
    %v3877 = vpop.f32.mrb[0].mxu0
    %v3878 = vpop.f32.mrb[0].mxu0
    %v3879 = vadd.f32 %v3718, %v3878
    %v3880 = vpop.f32.mrb[0].mxu0
    %3881 = vmatprep.mubr.bf16.mxu0 %v3304
    %3882 = vmatmul.mubr.bf16.gmra.mrb[0].mxu0 %v3303
    %v3883 = vpop.f32.mrb[0].mxu0
    %v3884 = vadd.f32 %v3723, %v3883
    %v3885 = vpop.f32.mrb[0].mxu0
    %v3886 = vpop.f32.mrb[0].mxu0
    %v3887 = vadd.f32 %v3726, %v3886
    %v3888 = vpop.f32.mrb[0].mxu0
    %3889 = vdwg.mxu0
    %v3890 = vmax.f32 %v3764, 0.0
    %v3891 = vmax.f32 %v3767, 0.0
    %v3892 = vmax.f32 %v3772, 0.0
    %v3893 = vmax.f32 %v3775, 0.0
    %v3894 = vmax.f32 %v3780, 0.0
    %v3895 = vmax.f32 %v3783, 0.0
    %v3896 = vmax.f32 %v3788, 0.0
    %v3897 = vmax.f32 %v3791, 0.0
    %v3898 = vmax.f32 %v3796, 0.0
    %v3899 = vmax.f32 %v3799, 0.0
    %v3900 = vmax.f32 %v3804, 0.0
    %v3901 = vmax.f32 %v3807, 0.0
    %v3902 = vmax.f32 %v3812, 0.0
    %v3903 = vmax.f32 %v3815, 0.0
    %v3904 = vmax.f32 %v3820, 0.0
    %v3905 = vmax.f32 %v3823, 0.0
    %v3906 = vmax.f32 %v3828, 0.0
    %v3907 = vmax.f32 %v3831, 0.0
    %v3908 = vmax.f32 %v3836, 0.0
    %v3909 = vmax.f32 %v3839, 0.0
    %v3910 = vmax.f32 %v3844, 0.0
    %v3911 = vmax.f32 %v3847, 0.0
    %v3912 = vmax.f32 %v3852, 0.0
    %v3913 = vmax.f32 %v3855, 0.0
    %v3914 = vmax.f32 %v3860, 0.0
    %v3915 = vmax.f32 %v3863, 0.0
    %v3916 = vmax.f32 %v3868, 0.0
    %v3917 = vmax.f32 %v3871, 0.0
    %v3918 = vmax.f32 %v3876, 0.0
    %v3919 = vmax.f32 %v3879, 0.0
    %v3920 = vmax.f32 %v3884, 0.0
    %v3921 = vmax.f32 %v3887, 0.0
    %v3922 = vpack.c.bf16 %v3891, %v3890
    %v3923 = vpack.c.bf16 %v3893, %v3892
    %v3924 = vpack.c.bf16 %v3895, %v3894
    %v3925 = vpack.c.bf16 %v3897, %v3896
    %v3926 = vpack.c.bf16 %v3899, %v3898
    %v3927 = vpack.c.bf16 %v3901, %v3900
    %v3928 = vpack.c.bf16 %v3903, %v3902
    %v3929 = vpack.c.bf16 %v3905, %v3904
    %v3930 = vpack.c.bf16 %v3907, %v3906
    %v3931 = vpack.c.bf16 %v3909, %v3908
    %v3932 = vpack.c.bf16 %v3911, %v3910
    %v3933 = vpack.c.bf16 %v3913, %v3912
    %v3934 = vpack.c.bf16 %v3915, %v3914
    %v3935 = vpack.c.bf16 %v3917, %v3916
    %v3936 = vpack.c.bf16 %v3919, %v3918
    %v3937 = vpack.c.bf16 %v3921, %v3920
    %v3938 = vld [vmem:[#allocation2] sm:$0xf]
    %v3939 = vld [vmem:[#allocation2 + $0x4] sm:$0xf]
    %v3940 = vld [vmem:[#allocation2 + $0x8] sm:$0xf]
    %v3941 = vld [vmem:[#allocation2 + $0xc] sm:$0xf]
    %v3942 = vld [vmem:[#allocation2 + $0x10] sm:$0xf]
    %v3943 = vld [vmem:[#allocation2 + $0x14] sm:$0xf]
    %v3944 = vld [vmem:[#allocation2 + $0x18] sm:$0xf]
    %v3945 = vld [vmem:[#allocation2 + $0x1c] sm:$0xf]
    %v3946 = vld [vmem:[#allocation2 + $0x20] sm:$0xf]
    %v3947 = vld [vmem:[#allocation2 + $0x24] sm:$0xf]
    %v3948 = vld [vmem:[#allocation2 + $0x28] sm:$0xf]
    %v3949 = vld [vmem:[#allocation2 + $0x2c] sm:$0xf]
    %v3950 = vld [vmem:[#allocation2 + $0x30] sm:$0xf]
    %v3951 = vld [vmem:[#allocation2 + $0x34] sm:$0xf]
    %v3952 = vld [vmem:[#allocation2 + $0x38] sm:$0xf]
    %v3953 = vld [vmem:[#allocation2 + $0x3c] sm:$0xf]
    %v3954 = vld [vmem:[%s4] sm:$0x1]
    %v3956 = vlaneseq
    %v3957 = vshrl.u32 %v3956, 7
    %v3958 = vsub.s32 0, %v3957
    %v3959 = vrot.slane %v3954, %v3958
    %v3977 = vunpack.c.l.b16 %v3938
    %v3978 = vunpack.c.l.b16 %v3939
    %v3979 = vunpack.c.l.b16 %v3940
    %v3980 = vunpack.c.l.b16 %v3941
    %v3981 = vunpack.c.l.b16 %v3942
    %v3982 = vunpack.c.l.b16 %v3943
    %v3983 = vunpack.c.l.b16 %v3944
    %v3984 = vunpack.c.l.b16 %v3945
    %v3985 = vunpack.c.l.b16 %v3946
    %v3986 = vunpack.c.l.b16 %v3947
    %v3987 = vunpack.c.l.b16 %v3948
    %v3988 = vunpack.c.l.b16 %v3949
    %v3989 = vunpack.c.l.b16 %v3950
    %v3990 = vunpack.c.l.b16 %v3951
    %v3991 = vunpack.c.l.b16 %v3952
    %v3992 = vunpack.c.l.b16 %v3953
    %v3993 = vpack.c.b16 %v3978, %v3977
    %v3994 = vpack.c.b16 %v3980, %v3979
    %v3995 = vpack.c.b16 %v3982, %v3981
    %v3996 = vpack.c.b16 %v3984, %v3983
    %v3997 = vpack.c.b16 %v3986, %v3985
    %v3998 = vpack.c.b16 %v3988, %v3987
    %v3999 = vpack.c.b16 %v3990, %v3989
    %v4000 = vpack.c.b16 %v3992, %v3991
    %4009 = vmatprep.subr.bf16.mxu0 0
    %4010 = vmatpush1.bf16.msra.mxu0 %v3993
    %4011 = vmatprep.subr.bf16.mxu0 0
    %4012 = vmatpush1.bf16.msra.mxu0 %v3994
    %4013 = vmatprep.subr.bf16.mxu0 0
    %4014 = vmatpush1.bf16.msra.mxu0 %v3995
    %4015 = vmatprep.subr.bf16.mxu0 0
    %4016 = vmatpush1.bf16.msra.mxu0 %v3996
    %4017 = vmatprep.subr.bf16.mxu0 0
    %4018 = vmatpush1.bf16.msra.mxu0 %v3997
    %4019 = vmatprep.subr.bf16.mxu0 0
    %4020 = vmatpush1.bf16.msra.mxu0 %v3998
    %4021 = vmatprep.subr.bf16.mxu0 0
    %4022 = vmatpush1.bf16.msra.mxu0 %v3999
    %4023 = vmatprep.subr.bf16.mxu0 0
    %4024 = vmatpush1.bf16.msra.mxu0 %v4000
    %4025 = vmatprep.subr.bf16.mxu0 0
    %4026 = vmatpush1.bf16.msra.mxu0 0
    %4027 = vmatprep.subr.bf16.mxu0 0
    %4028 = vmatpush1.bf16.msra.mxu0 0
    %4029 = vmatprep.subr.bf16.mxu0 0
    %4030 = vmatpush1.bf16.msra.mxu0 0
    %4031 = vmatprep.subr.bf16.mxu0 0
    %4032 = vmatpush1.bf16.msra.mxu0 0
    %4033 = vmatprep.subr.bf16.mxu0 0
    %4034 = vmatpush1.bf16.msra.mxu0 0
    %4035 = vmatprep.subr.bf16.mxu0 0
    %4036 = vmatpush1.bf16.msra.mxu0 0
    %4037 = vmatprep.subr.bf16.mxu0 0
    %4038 = vmatpush1.bf16.msra.mxu0 0
    %4039 = vmatprep.subr.bf16.mxu0 0
    %4040 = vmatpush1.bf16.msra.mxu0 0
    %4041 = vmatprep.mubr.bf16.mxu0 0
    %4042 = vmatmul.mubr.bf16.gmra.mrb[0].mxu0 %v3922
    %v4043 = vpop.f32.mrb[0].mxu0
    %v4044 = vadd.f32 %v3959, %v4043
    %v4045 = vpop.f32.mrb[0].mxu0
    %v4046 = vpop.f32.mrb[0].mxu0
    %v4047 = vadd.f32 %v3959, %v4046
    %v4048 = vpop.f32.mrb[0].mxu0
    %4049 = vmatprep.mubr.bf16.mxu0 0
    %4050 = vmatmul.mubr.bf16.gmra.mrb[0].mxu0 %v3923
    %v4051 = vpop.f32.mrb[0].mxu0
    %v4052 = vadd.f32 %v3959, %v4051
    %v4053 = vpop.f32.mrb[0].mxu0
    %v4054 = vpop.f32.mrb[0].mxu0
    %v4055 = vadd.f32 %v3959, %v4054
    %v4056 = vpop.f32.mrb[0].mxu0
    %4057 = vmatprep.mubr.bf16.mxu0 0
    %4058 = vmatmul.mubr.bf16.gmra.mrb[0].mxu0 %v3924
    %v4059 = vpop.f32.mrb[0].mxu0
    %v4060 = vadd.f32 %v3959, %v4059
    %v4061 = vpop.f32.mrb[0].mxu0
    %v4062 = vpop.f32.mrb[0].mxu0
    %v4063 = vadd.f32 %v3959, %v4062
    %v4064 = vpop.f32.mrb[0].mxu0
    %4065 = vmatprep.mubr.bf16.mxu0 0
    %4066 = vmatmul.mubr.bf16.gmra.mrb[0].mxu0 %v3925
    %v4067 = vpop.f32.mrb[0].mxu0
    %v4068 = vadd.f32 %v3959, %v4067
    %v4069 = vpop.f32.mrb[0].mxu0
    %v4070 = vpop.f32.mrb[0].mxu0
    %v4071 = vadd.f32 %v3959, %v4070
    %v4072 = vpop.f32.mrb[0].mxu0
    %4073 = vmatprep.mubr.bf16.mxu0 0
    %4074 = vmatmul.mubr.bf16.gmra.mrb[0].mxu0 %v3926
    %v4075 = vpop.f32.mrb[0].mxu0
    %v4076 = vadd.f32 %v3959, %v4075
    %v4077 = vpop.f32.mrb[0].mxu0
    %v4078 = vpop.f32.mrb[0].mxu0
    %v4079 = vadd.f32 %v3959, %v4078
    %v4080 = vpop.f32.mrb[0].mxu0
    %4081 = vmatprep.mubr.bf16.mxu0 0
    %4082 = vmatmul.mubr.bf16.gmra.mrb[0].mxu0 %v3927
    %v4083 = vpop.f32.mrb[0].mxu0
    %v4084 = vadd.f32 %v3959, %v4083
    %v4085 = vpop.f32.mrb[0].mxu0
    %v4086 = vpop.f32.mrb[0].mxu0
    %v4087 = vadd.f32 %v3959, %v4086
    %v4088 = vpop.f32.mrb[0].mxu0
    %4089 = vmatprep.mubr.bf16.mxu0 0
    %4090 = vmatmul.mubr.bf16.gmra.mrb[0].mxu0 %v3928
    %v4091 = vpop.f32.mrb[0].mxu0
    %v4092 = vadd.f32 %v3959, %v4091
    %v4093 = vpop.f32.mrb[0].mxu0
    %v4094 = vpop.f32.mrb[0].mxu0
    %v4095 = vadd.f32 %v3959, %v4094
    %v4096 = vpop.f32.mrb[0].mxu0
    %4097 = vmatprep.mubr.bf16.mxu0 0
    %4098 = vmatmul.mubr.bf16.gmra.mrb[0].mxu0 %v3929
    %v4099 = vpop.f32.mrb[0].mxu0
    %v4100 = vadd.f32 %v3959, %v4099
    %v4101 = vpop.f32.mrb[0].mxu0
    %v4102 = vpop.f32.mrb[0].mxu0
    %v4103 = vadd.f32 %v3959, %v4102
    %v4104 = vpop.f32.mrb[0].mxu0
    %4105 = vmatprep.mubr.bf16.mxu0 0
    %4106 = vmatmul.mubr.bf16.gmra.mrb[0].mxu0 %v3930
    %v4107 = vpop.f32.mrb[0].mxu0
    %v4108 = vadd.f32 %v3959, %v4107
    %v4109 = vpop.f32.mrb[0].mxu0
    %v4110 = vpop.f32.mrb[0].mxu0
    %v4111 = vadd.f32 %v3959, %v4110
    %v4112 = vpop.f32.mrb[0].mxu0
    %4113 = vmatprep.mubr.bf16.mxu0 0
    %4114 = vmatmul.mubr.bf16.gmra.mrb[0].mxu0 %v3931
    %v4115 = vpop.f32.mrb[0].mxu0
    %v4116 = vadd.f32 %v3959, %v4115
    %v4117 = vpop.f32.mrb[0].mxu0
    %v4118 = vpop.f32.mrb[0].mxu0
    %v4119 = vadd.f32 %v3959, %v4118
    %v4120 = vpop.f32.mrb[0].mxu0
    %4121 = vmatprep.mubr.bf16.mxu0 0
    %4122 = vmatmul.mubr.bf16.gmra.mrb[0].mxu0 %v3932
    %v4123 = vpop.f32.mrb[0].mxu0
    %v4124 = vadd.f32 %v3959, %v4123
    %v4125 = vpop.f32.mrb[0].mxu0
    %v4126 = vpop.f32.mrb[0].mxu0
    %v4127 = vadd.f32 %v3959, %v4126
    %v4128 = vpop.f32.mrb[0].mxu0
    %4129 = vmatprep.mubr.bf16.mxu0 0
    %4130 = vmatmul.mubr.bf16.gmra.mrb[0].mxu0 %v3933
    %v4131 = vpop.f32.mrb[0].mxu0
    %v4132 = vadd.f32 %v3959, %v4131
    %v4133 = vpop.f32.mrb[0].mxu0
    %v4134 = vpop.f32.mrb[0].mxu0
    %v4135 = vadd.f32 %v3959, %v4134
    %v4136 = vpop.f32.mrb[0].mxu0
    %4137 = vmatprep.mubr.bf16.mxu0 0
    %4138 = vmatmul.mubr.bf16.gmra.mrb[0].mxu0 %v3934
    %v4139 = vpop.f32.mrb[0].mxu0
    %v4140 = vadd.f32 %v3959, %v4139
    %v4141 = vpop.f32.mrb[0].mxu0
    %v4142 = vpop.f32.mrb[0].mxu0
    %v4143 = vadd.f32 %v3959, %v4142
    %v4144 = vpop.f32.mrb[0].mxu0
    %4145 = vmatprep.mubr.bf16.mxu0 0
    %4146 = vmatmul.mubr.bf16.gmra.mrb[0].mxu0 %v3935
    %v4147 = vpop.f32.mrb[0].mxu0
    %v4148 = vadd.f32 %v3959, %v4147
    %v4149 = vpop.f32.mrb[0].mxu0
    %v4150 = vpop.f32.mrb[0].mxu0
    %v4151 = vadd.f32 %v3959, %v4150
    %v4152 = vpop.f32.mrb[0].mxu0
    %4153 = vmatprep.mubr.bf16.mxu0 0
    %4154 = vmatmul.mubr.bf16.gmra.mrb[0].mxu0 %v3936
    %v4155 = vpop.f32.mrb[0].mxu0
    %v4156 = vadd.f32 %v3959, %v4155
    %v4157 = vpop.f32.mrb[0].mxu0
    %v4158 = vpop.f32.mrb[0].mxu0
    %v4159 = vadd.f32 %v3959, %v4158
    %v4160 = vpop.f32.mrb[0].mxu0
    %4161 = vmatprep.mubr.bf16.mxu0 0
    %4162 = vmatmul.mubr.bf16.gmra.mrb[0].mxu0 %v3937
    %v4163 = vpop.f32.mrb[0].mxu0
    %v4164 = vadd.f32 %v3959, %v4163
    %v4165 = vpop.f32.mrb[0].mxu0
    %v4166 = vpop.f32.mrb[0].mxu0
    %v4167 = vadd.f32 %v3959, %v4166
    %v4168 = vpop.f32.mrb[0].mxu0
    %4169 = vdwg.mxu0
    %4170 = vmax.xlane.f32.xlu0 %v4044
    %v4171 = vpop.xlane.xlu0 %4170
    %4172 = vmax.xlane.f32.xlu0 %v4047
    %v4173 = vpop.xlane.xlu0 %4172
    %4174 = vmax.xlane.f32.xlu0 %v4052
    %v4175 = vpop.xlane.xlu0 %4174
    %4176 = vmax.xlane.f32.xlu0 %v4055
    %v4177 = vpop.xlane.xlu0 %4176
    %4178 = vmax.xlane.f32.xlu0 %v4060
    %v4179 = vpop.xlane.xlu0 %4178
    %4180 = vmax.xlane.f32.xlu0 %v4063
    %v4181 = vpop.xlane.xlu0 %4180
    %4182 = vmax.xlane.f32.xlu0 %v4068
    %v4183 = vpop.xlane.xlu0 %4182
    %4184 = vmax.xlane.f32.xlu0 %v4071
    %v4185 = vpop.xlane.xlu0 %4184
    %4186 = vmax.xlane.f32.xlu0 %v4076
    %v4187 = vpop.xlane.xlu0 %4186
    %4188 = vmax.xlane.f32.xlu0 %v4079
    %v4189 = vpop.xlane.xlu0 %4188
    %4190 = vmax.xlane.f32.xlu0 %v4084
    %v4191 = vpop.xlane.xlu0 %4190
    %4192 = vmax.xlane.f32.xlu0 %v4087
    %v4193 = vpop.xlane.xlu0 %4192
    %4194 = vmax.xlane.f32.xlu0 %v4092
    %v4195 = vpop.xlane.xlu0 %4194
    %4196 = vmax.xlane.f32.xlu0 %v4095
    %v4197 = vpop.xlane.xlu0 %4196
    %4198 = vmax.xlane.f32.xlu0 %v4100
    %v4199 = vpop.xlane.xlu0 %4198
    %4200 = vmax.xlane.f32.xlu0 %v4103
    %v4201 = vpop.xlane.xlu0 %4200
    %4202 = vmax.xlane.f32.xlu0 %v4108
    %v4203 = vpop.xlane.xlu0 %4202
    %4204 = vmax.xlane.f32.xlu0 %v4111
    %v4205 = vpop.xlane.xlu0 %4204
    %4206 = vmax.xlane.f32.xlu0 %v4116
    %v4207 = vpop.xlane.xlu0 %4206
    %4208 = vmax.xlane.f32.xlu0 %v4119
    %v4209 = vpop.xlane.xlu0 %4208
    %4210 = vmax.xlane.f32.xlu0 %v4124
    %v4211 = vpop.xlane.xlu0 %4210
    %4212 = vmax.xlane.f32.xlu0 %v4127
    %v4213 = vpop.xlane.xlu0 %4212
    %4214 = vmax.xlane.f32.xlu0 %v4132
    %v4215 = vpop.xlane.xlu0 %4214
    %4216 = vmax.xlane.f32.xlu0 %v4135
    %v4217 = vpop.xlane.xlu0 %4216
    %4218 = vmax.xlane.f32.xlu0 %v4140
    %v4219 = vpop.xlane.xlu0 %4218
    %4220 = vmax.xlane.f32.xlu0 %v4143
    %v4221 = vpop.xlane.xlu0 %4220
    %4222 = vmax.xlane.f32.xlu0 %v4148
    %v4223 = vpop.xlane.xlu0 %4222
    %4224 = vmax.xlane.f32.xlu0 %v4151
    %v4225 = vpop.xlane.xlu0 %4224
    %4226 = vmax.xlane.f32.xlu0 %v4156
    %v4227 = vpop.xlane.xlu0 %4226
    %4228 = vmax.xlane.f32.xlu0 %v4159
    %v4229 = vpop.xlane.xlu0 %4228
    %4230 = vmax.xlane.f32.xlu0 %v4164
    %v4231 = vpop.xlane.xlu0 %4230
    %4232 = vmax.xlane.f32.xlu0 %v4167
    %v4233 = vpop.xlane.xlu0 %4232
    %v4234 = vsub.f32 %v4044, %v4171
    %v4235 = vsub.f32 %v4047, %v4173
    %v4236 = vsub.f32 %v4052, %v4175
    %v4237 = vsub.f32 %v4055, %v4177
    %v4238 = vsub.f32 %v4060, %v4179
    %v4239 = vsub.f32 %v4063, %v4181
    %v4240 = vsub.f32 %v4068, %v4183
    %v4241 = vsub.f32 %v4071, %v4185
    %v4242 = vsub.f32 %v4076, %v4187
    %v4243 = vsub.f32 %v4079, %v4189
    %v4244 = vsub.f32 %v4084, %v4191
    %v4245 = vsub.f32 %v4087, %v4193
    %v4246 = vsub.f32 %v4092, %v4195
    %v4247 = vsub.f32 %v4095, %v4197
    %v4248 = vsub.f32 %v4100, %v4199
    %v4249 = vsub.f32 %v4103, %v4201
    %v4250 = vsub.f32 %v4108, %v4203
    %v4251 = vsub.f32 %v4111, %v4205
    %v4252 = vsub.f32 %v4116, %v4207
    %v4253 = vsub.f32 %v4119, %v4209
    %v4254 = vsub.f32 %v4124, %v4211
    %v4255 = vsub.f32 %v4127, %v4213
    %v4256 = vsub.f32 %v4132, %v4215
    %v4257 = vsub.f32 %v4135, %v4217
    %v4258 = vsub.f32 %v4140, %v4219
    %v4259 = vsub.f32 %v4143, %v4221
    %v4260 = vsub.f32 %v4148, %v4223
    %v4261 = vsub.f32 %v4151, %v4225
    %v4262 = vsub.f32 %v4156, %v4227
    %v4263 = vsub.f32 %v4159, %v4229
    %v4264 = vsub.f32 %v4164, %v4231
    %v4265 = vsub.f32 %v4167, %v4233
    %v4266 = vmul.f32 %v4234, 1.442695
    %v4267 = vpow.pop %v4266
    %v4268 = vmul.f32 %v4235, 1.442695
    %v4269 = vpow.pop %v4268
    %v4270 = vmul.f32 %v4236, 1.442695
    %v4271 = vpow.pop %v4270
    %v4272 = vmul.f32 %v4237, 1.442695
    %v4273 = vpow.pop %v4272
    %v4274 = vmul.f32 %v4238, 1.442695
    %v4275 = vpow.pop %v4274
    %v4276 = vmul.f32 %v4239, 1.442695
    %v4277 = vpow.pop %v4276
    %v4278 = vmul.f32 %v4240, 1.442695
    %v4279 = vpow.pop %v4278
    %v4280 = vmul.f32 %v4241, 1.442695
    %v4281 = vpow.pop %v4280
    %v4282 = vmul.f32 %v4242, 1.442695
    %v4283 = vpow.pop %v4282
    %v4284 = vmul.f32 %v4243, 1.442695
    %v4285 = vpow.pop %v4284
    %v4286 = vmul.f32 %v4244, 1.442695
    %v4287 = vpow.pop %v4286
    %v4288 = vmul.f32 %v4245, 1.442695
    %v4289 = vpow.pop %v4288
    %v4290 = vmul.f32 %v4246, 1.442695
    %v4291 = vpow.pop %v4290
    %v4292 = vmul.f32 %v4247, 1.442695
    %v4293 = vpow.pop %v4292
    %v4294 = vmul.f32 %v4248, 1.442695
    %v4295 = vpow.pop %v4294
    %v4296 = vmul.f32 %v4249, 1.442695
    %v4297 = vpow.pop %v4296
    %v4298 = vmul.f32 %v4250, 1.442695
    %v4299 = vpow.pop %v4298
    %v4300 = vmul.f32 %v4251, 1.442695
    %v4301 = vpow.pop %v4300
    %v4302 = vmul.f32 %v4252, 1.442695
    %v4303 = vpow.pop %v4302
    %v4304 = vmul.f32 %v4253, 1.442695
    %v4305 = vpow.pop %v4304
    %v4306 = vmul.f32 %v4254, 1.442695
    %v4307 = vpow.pop %v4306
    %v4308 = vmul.f32 %v4255, 1.442695
    %v4309 = vpow.pop %v4308
    %v4310 = vmul.f32 %v4256, 1.442695
    %v4311 = vpow.pop %v4310
    %v4312 = vmul.f32 %v4257, 1.442695
    %v4313 = vpow.pop %v4312
    %v4314 = vmul.f32 %v4258, 1.442695
    %v4315 = vpow.pop %v4314
    %v4316 = vmul.f32 %v4259, 1.442695
    %v4317 = vpow.pop %v4316
    %v4318 = vmul.f32 %v4260, 1.442695
    %v4319 = vpow.pop %v4318
    %v4320 = vmul.f32 %v4261, 1.442695
    %v4321 = vpow.pop %v4320
    %v4322 = vmul.f32 %v4262, 1.442695
    %v4323 = vpow.pop %v4322
    %v4324 = vmul.f32 %v4263, 1.442695
    %v4325 = vpow.pop %v4324
    %v4326 = vmul.f32 %v4264, 1.442695
    %v4327 = vpow.pop %v4326
    %v4328 = vmul.f32 %v4265, 1.442695
    %v4329 = vpow.pop %v4328
    %4330 = vadd.xlane.f32.xlu0 %v4267
    %v4331 = vpop.xlane.xlu0 %4330
    %4332 = vadd.xlane.f32.xlu0 %v4269
    %v4333 = vpop.xlane.xlu0 %4332
    %4334 = vadd.xlane.f32.xlu0 %v4271
    %v4335 = vpop.xlane.xlu0 %4334
    %4336 = vadd.xlane.f32.xlu0 %v4273
    %v4337 = vpop.xlane.xlu0 %4336
    %4338 = vadd.xlane.f32.xlu0 %v4275
    %v4339 = vpop.xlane.xlu0 %4338
    %4340 = vadd.xlane.f32.xlu0 %v4277
    %v4341 = vpop.xlane.xlu0 %4340
    %4342 = vadd.xlane.f32.xlu0 %v4279
    %v4343 = vpop.xlane.xlu0 %4342
    %4344 = vadd.xlane.f32.xlu0 %v4281
    %v4345 = vpop.xlane.xlu0 %4344
    %4346 = vadd.xlane.f32.xlu0 %v4283
    %v4347 = vpop.xlane.xlu0 %4346
    %4348 = vadd.xlane.f32.xlu0 %v4285
    %v4349 = vpop.xlane.xlu0 %4348
    %4350 = vadd.xlane.f32.xlu0 %v4287
    %v4351 = vpop.xlane.xlu0 %4350
    %4352 = vadd.xlane.f32.xlu0 %v4289
    %v4353 = vpop.xlane.xlu0 %4352
    %4354 = vadd.xlane.f32.xlu0 %v4291
    %v4355 = vpop.xlane.xlu0 %4354
    %4356 = vadd.xlane.f32.xlu0 %v4293
    %v4357 = vpop.xlane.xlu0 %4356
    %4358 = vadd.xlane.f32.xlu0 %v4295
    %v4359 = vpop.xlane.xlu0 %4358
    %4360 = vadd.xlane.f32.xlu0 %v4297
    %v4361 = vpop.xlane.xlu0 %4360
    %4362 = vadd.xlane.f32.xlu0 %v4299
    %v4363 = vpop.xlane.xlu0 %4362
    %4364 = vadd.xlane.f32.xlu0 %v4301
    %v4365 = vpop.xlane.xlu0 %4364
    %4366 = vadd.xlane.f32.xlu0 %v4303
    %v4367 = vpop.xlane.xlu0 %4366
    %4368 = vadd.xlane.f32.xlu0 %v4305
    %v4369 = vpop.xlane.xlu0 %4368
    %4370 = vadd.xlane.f32.xlu0 %v4307
    %v4371 = vpop.xlane.xlu0 %4370
    %4372 = vadd.xlane.f32.xlu0 %v4309
    %v4373 = vpop.xlane.xlu0 %4372
    %4374 = vadd.xlane.f32.xlu0 %v4311
    %v4375 = vpop.xlane.xlu0 %4374
    %4376 = vadd.xlane.f32.xlu0 %v4313
    %v4377 = vpop.xlane.xlu0 %4376
    %4378 = vadd.xlane.f32.xlu0 %v4315
    %v4379 = vpop.xlane.xlu0 %4378
    %4380 = vadd.xlane.f32.xlu0 %v4317
    %v4381 = vpop.xlane.xlu0 %4380
    %4382 = vadd.xlane.f32.xlu0 %v4319
    %v4383 = vpop.xlane.xlu0 %4382
    %4384 = vadd.xlane.f32.xlu0 %v4321
    %v4385 = vpop.xlane.xlu0 %4384
    %4386 = vadd.xlane.f32.xlu0 %v4323
    %v4387 = vpop.xlane.xlu0 %4386
    %4388 = vadd.xlane.f32.xlu0 %v4325
    %v4389 = vpop.xlane.xlu0 %4388
    %4390 = vadd.xlane.f32.xlu0 %v4327
    %v4391 = vpop.xlane.xlu0 %4390
    %4392 = vadd.xlane.f32.xlu0 %v4329
    %v4393 = vpop.xlane.xlu0 %4392
    %v4394 = vlog2.pop %v4331
    %v4395 = vmul.f32 %v4394, 0.6931472
    %v4396 = vlog2.pop %v4333
    %v4397 = vmul.f32 %v4396, 0.6931472
    %v4398 = vlog2.pop %v4335
    %v4399 = vmul.f32 %v4398, 0.6931472
    %v4400 = vlog2.pop %v4337
    %v4401 = vmul.f32 %v4400, 0.6931472
    %v4402 = vlog2.pop %v4339
    %v4403 = vmul.f32 %v4402, 0.6931472
    %v4404 = vlog2.pop %v4341
    %v4405 = vmul.f32 %v4404, 0.6931472
    %v4406 = vlog2.pop %v4343
    %v4407 = vmul.f32 %v4406, 0.6931472
    %v4408 = vlog2.pop %v4345
    %v4409 = vmul.f32 %v4408, 0.6931472
    %v4410 = vlog2.pop %v4347
    %v4411 = vmul.f32 %v4410, 0.6931472
    %v4412 = vlog2.pop %v4349
    %v4413 = vmul.f32 %v4412, 0.6931472
    %v4414 = vlog2.pop %v4351
    %v4415 = vmul.f32 %v4414, 0.6931472
    %v4416 = vlog2.pop %v4353
    %v4417 = vmul.f32 %v4416, 0.6931472
    %v4418 = vlog2.pop %v4355
    %v4419 = vmul.f32 %v4418, 0.6931472
    %v4420 = vlog2.pop %v4357
    %v4421 = vmul.f32 %v4420, 0.6931472
    %v4422 = vlog2.pop %v4359
    %v4423 = vmul.f32 %v4422, 0.6931472
    %v4424 = vlog2.pop %v4361
    %v4425 = vmul.f32 %v4424, 0.6931472
    %v4426 = vlog2.pop %v4363
    %v4427 = vmul.f32 %v4426, 0.6931472
    %v4428 = vlog2.pop %v4365
    %v4429 = vmul.f32 %v4428, 0.6931472
    %v4430 = vlog2.pop %v4367
    %v4431 = vmul.f32 %v4430, 0.6931472
    %v4432 = vlog2.pop %v4369
    %v4433 = vmul.f32 %v4432, 0.6931472
    %v4434 = vlog2.pop %v4371
    %v4435 = vmul.f32 %v4434, 0.6931472
    %v4436 = vlog2.pop %v4373
    %v4437 = vmul.f32 %v4436, 0.6931472
    %v4438 = vlog2.pop %v4375
    %v4439 = vmul.f32 %v4438, 0.6931472
    %v4440 = vlog2.pop %v4377
    %v4441 = vmul.f32 %v4440, 0.6931472
    %v4442 = vlog2.pop %v4379
    %v4443 = vmul.f32 %v4442, 0.6931472
    %v4444 = vlog2.pop %v4381
    %v4445 = vmul.f32 %v4444, 0.6931472
    %v4446 = vlog2.pop %v4383
    %v4447 = vmul.f32 %v4446, 0.6931472
    %v4448 = vlog2.pop %v4385
    %v4449 = vmul.f32 %v4448, 0.6931472
    %v4450 = vlog2.pop %v4387
    %v4451 = vmul.f32 %v4450, 0.6931472
    %v4452 = vlog2.pop %v4389
    %v4453 = vmul.f32 %v4452, 0.6931472
    %v4454 = vlog2.pop %v4391
    %v4455 = vmul.f32 %v4454, 0.6931472
    %v4456 = vlog2.pop %v4393
    %v4457 = vmul.f32 %v4456, 0.6931472
    %v4458 = vsub.f32 %v4234, %v4395
    %v4459 = vsub.f32 %v4235, %v4397
    %v4460 = vsub.f32 %v4236, %v4399
    %v4461 = vsub.f32 %v4237, %v4401
    %v4462 = vsub.f32 %v4238, %v4403
    %v4463 = vsub.f32 %v4239, %v4405
    %v4464 = vsub.f32 %v4240, %v4407
    %v4465 = vsub.f32 %v4241, %v4409
    %v4466 = vsub.f32 %v4242, %v4411
    %v4467 = vsub.f32 %v4243, %v4413
    %v4468 = vsub.f32 %v4244, %v4415
    %v4469 = vsub.f32 %v4245, %v4417
    %v4470 = vsub.f32 %v4246, %v4419
    %v4471 = vsub.f32 %v4247, %v4421
    %v4472 = vsub.f32 %v4248, %v4423
    %v4473 = vsub.f32 %v4249, %v4425
    %v4474 = vsub.f32 %v4250, %v4427
    %v4475 = vsub.f32 %v4251, %v4429
    %v4476 = vsub.f32 %v4252, %v4431
    %v4477 = vsub.f32 %v4253, %v4433
    %v4478 = vsub.f32 %v4254, %v4435
    %v4479 = vsub.f32 %v4255, %v4437
    %v4480 = vsub.f32 %v4256, %v4439
    %v4481 = vsub.f32 %v4257, %v4441
    %v4482 = vsub.f32 %v4258, %v4443
    %v4483 = vsub.f32 %v4259, %v4445
    %v4484 = vsub.f32 %v4260, %v4447
    %v4485 = vsub.f32 %v4261, %v4449
    %v4486 = vsub.f32 %v4262, %v4451
    %v4487 = vsub.f32 %v4263, %v4453
    %v4488 = vsub.f32 %v4264, %v4455
    %v4489 = vsub.f32 %v4265, %v4457
    %4490 = vst [vmem:[#allocation5] sm:$0xff] %v4458
    %4491 = vst [vmem:[#allocation5 + $0x8] sm:$0xff] %v4459
    %4492 = vst [vmem:[#allocation5 + $0x10] sm:$0xff] %v4460
    %4493 = vst [vmem:[#allocation5 + $0x18] sm:$0xff] %v4461
    %4494 = vst [vmem:[#allocation5 + $0x20] sm:$0xff] %v4462
    %4495 = vst [vmem:[#allocation5 + $0x28] sm:$0xff] %v4463
    %4496 = vst [vmem:[#allocation5 + $0x30] sm:$0xff] %v4464
    %4497 = vst [vmem:[#allocation5 + $0x38] sm:$0xff] %v4465
    %4498 = vst [vmem:[#allocation5 + $0x40] sm:$0xff] %v4466
    %4499 = vst [vmem:[#allocation5 + $0x48] sm:$0xff] %v4467
    %4500 = vst [vmem:[#allocation5 + $0x50] sm:$0xff] %v4468
    %4501 = vst [vmem:[#allocation5 + $0x58] sm:$0xff] %v4469
    %4502 = vst [vmem:[#allocation5 + $0x60] sm:$0xff] %v4470
    %4503 = vst [vmem:[#allocation5 + $0x68] sm:$0xff] %v4471
    %4504 = vst [vmem:[#allocation5 + $0x70] sm:$0xff] %v4472
    %4505 = vst [vmem:[#allocation5 + $0x78] sm:$0xff] %v4473
    %4506 = vst [vmem:[#allocation5 + $0x80] sm:$0xff] %v4474
    %4507 = vst [vmem:[#allocation5 + $0x88] sm:$0xff] %v4475
    %4508 = vst [vmem:[#allocation5 + $0x90] sm:$0xff] %v4476
    %4509 = vst [vmem:[#allocation5 + $0x98] sm:$0xff] %v4477
    %4510 = vst [vmem:[#allocation5 + $0xa0] sm:$0xff] %v4478
    %4511 = vst [vmem:[#allocation5 + $0xa8] sm:$0xff] %v4479
    %4512 = vst [vmem:[#allocation5 + $0xb0] sm:$0xff] %v4480
    %4513 = vst [vmem:[#allocation5 + $0xb8] sm:$0xff] %v4481
    %4514 = vst [vmem:[#allocation5 + $0xc0] sm:$0xff] %v4482
    %4515 = vst [vmem:[#allocation5 + $0xc8] sm:$0xff] %v4483
    %4516 = vst [vmem:[#allocation5 + $0xd0] sm:$0xff] %v4484
    %4517 = vst [vmem:[#allocation5 + $0xd8] sm:$0xff] %v4485
    %4518 = vst [vmem:[#allocation5 + $0xe0] sm:$0xff] %v4486
    %4519 = vst [vmem:[#allocation5 + $0xe8] sm:$0xff] %v4487
    %4520 = vst [vmem:[#allocation5 + $0xf0] sm:$0xff] %v4488
    %4521 = vst [vmem:[#allocation5 + $0xf8] sm:$0xff] %v4489
    // Predicated region
    $region26: #{tpu_custom_call.1} parent=1 // pred_check
      _
    $region27: #{tpu_custom_call.1} parent=1 // pred_check_branch
      %4523 = sbr.rel (0) target = $region29
    $region28: #{tpu_custom_call.1} parent=1 // pred_region
      %s4525 = ssub.s32 4096, 4096
      %4526 = vsyncadd [#allocation4], %s4525
      %s4527 = sshll.u32 [#allocation5], 4
      %s4528 = int_to_ptr.vmem [resolvable:$true] %s4527
      %4533 = dma.vmem_to_hbm [thread:$0]  %s4528, 4096, %s5, [#allocation4], 128, 128, 8
    $region29: #{tpu_custom_call.1} parent=1 // pred_fallthru
      _
    // Predicated region
    $region30: #{tpu_custom_call.1} parent=1 // pred_check
      _
    $region31: #{tpu_custom_call.1} parent=1 // pred_check_branch
      %4535 = sbr.rel (0) target = $region33
    $region32: #{tpu_custom_call.1} parent=1 // pred_region
      %4536 = dma.done [#allocation4], 4096
    $region33: #{tpu_custom_call.1} parent=1 // pred_fallthru
      _
    %4537 = vsyncpa [#allocation3], 1
    %4538 = vsyncpa [#allocation4], 1

</llo_original>
